<compile_context>
chip_gen: v7x
topology: tpu7x:2x2x1
jax: 0.10.0
libtpu: 0.0.40
codegen_flags: <defaults>
</compile_context>

<pallas_src>
import jax
import jax.numpy as jnp
from jax.experimental import pallas as pl
from jax.experimental.pallas import tpu as pltpu

# --- small synthetic config (stands in for the PaliGemma text encoder) ---
VOCAB = 128
HIDDEN = 32
NUM_HEADS = 4
HEAD_DIM = HIDDEN // NUM_HEADS
FFN = 64
NUM_LAYERS = 4
EPS = 1e-6
BATCH = 2
SEQ = 8
SCALE = 1.0 / (HEAD_DIM ** 0.5)

# mixture-of-depths: even-indexed layers are identity, odd-indexed run.
ACTIVE_LAYER_IDS = tuple(i for i in range(NUM_LAYERS) if i % 2 == 1)
N_ACTIVE = len(ACTIVE_LAYER_IDS)


def _layer_norm(x, g, b):
    # x: (B*S, H) f32, g/b: (1, H) f32 -- all elementwise math kept in f32.
    mu = jnp.mean(x, axis=-1, keepdims=True)
    var = jnp.mean((x - mu) ** 2, axis=-1, keepdims=True)
    return (x - mu) * jax.lax.rsqrt(var + EPS) * g + b


def fused_encoder_kernel(x_ref, mask_ref,
                         ln1_g_ref, ln1_b_ref,
                         wqkv_ref, wo_ref,
                         ln2_g_ref, ln2_b_ref,
                         w1_ref, b1_ref, w2_ref, b2_ref,
                         out_ref, ctx_scratch):
    """All active encoder layers fused into one grid-less kernel.

    x_ref   : (B*S, H)      f32   hidden states (residual stream)
    mask_ref: (B*S, B*S)    f32   additive block-diagonal + key-padding mask
    ln*_g/b : (L, 1, H)     f32
    wqkv    : (L, H, 3H)    bf16  fused q|k|v projection
    wo      : (L, H, H)     bf16  un-split output projection
    w1      : (L, H, FFN)   bf16 ; b1: (L, 1, FFN) f32
    w2      : (L, FFN, H)   bf16 ; b2: (L, 1, H)   f32
    ctx_scratch: (B*S, H)   f32   VMEM scratch for head-concatenated context
    """
    x = x_ref[...]                                   # (B*S, H) f32
    mask = mask_ref[...]                             # (B*S, B*S) f32

    for l in range(N_ACTIVE):                        # static: 2 bodies, unrolled
        # ---- self-attention block (pre-LayerNorm) ----
        h = _layer_norm(x, ln1_g_ref[l], ln1_b_ref[l])
        h16 = h.astype(jnp.bfloat16)                 # bf16 MXU operand, f32 accum

        # One full-width projection per layer: (B*S, H) @ (H, 3H) -> (B*S, 3H)
        qkv = jnp.dot(h16, wqkv_ref[l], preferred_element_type=jnp.float32)

        for hd in range(NUM_HEADS):                  # static: unrolled
            lo = hd * HEAD_DIM
            q = qkv[:, lo:lo + HEAD_DIM]                          # (B*S, Dh)
            k = qkv[:, HIDDEN + lo:HIDDEN + lo + HEAD_DIM]
            v = qkv[:, 2 * HIDDEN + lo:2 * HIDDEN + lo + HEAD_DIM]

            # q @ k^T via dot_general (contract last dims) -> no XLU transpose.
            # Single (B*S, B*S) score matrix; cross-batch pairs are masked.
            s = jax.lax.dot_general(
                q, k, (((1,), (1,)), ((), ())),
                preferred_element_type=jnp.float32) * SCALE       # (B*S, B*S)
            s = s + mask
            s = s - jnp.max(s, axis=-1, keepdims=True)
            p = jnp.exp(s)
            # EUP approx reciprocal instead of a VALU divide.
            p = p * pl.reciprocal(jnp.sum(p, axis=-1, keepdims=True),
                                  approx=True)
            # Scatter the head's context into its lane block of the scratch.
            ctx_scratch[:, lo:lo + HEAD_DIM] = jnp.dot(
                p, v, preferred_element_type=jnp.float32)         # (B*S, Dh)

        # Single un-split output projection: (B*S, H) @ (H, H)
        attn = jnp.dot(ctx_scratch[...].astype(jnp.bfloat16), wo_ref[l],
                       preferred_element_type=jnp.float32)
        x = x + attn

        # ---- MLP block (pre-LayerNorm) ----
        h2 = _layer_norm(x, ln2_g_ref[l], ln2_b_ref[l])
        f = jnp.dot(h2.astype(jnp.bfloat16), w1_ref[l],
                    preferred_element_type=jnp.float32) + b1_ref[l]
        # tanh approximation, matching Gemma/PaliGemma's gelu_pytorch_tanh.
        f = jax.nn.gelu(f, approximate=True)
        m = jnp.dot(f.astype(jnp.bfloat16), w2_ref[l],
                    preferred_element_type=jnp.float32) + b2_ref[l]
        x = x + m

    out_ref[...] = x


def prepare_params(params):
    """One-time weight preprocessing -- runs OUTSIDE the jitted per-call path.

    Stacks the active (odd-indexed) layers, fuses q|k|v into one matrix per
    layer, and casts matmul weights to bf16.  The jitted forward consumes the
    result as-is, so no restack/cast work happens per call.
    """
    active = [params["layers"][i] for i in ACTIVE_LAYER_IDS]

    def stack(name, dtype=jnp.float32):
        return jnp.stack([lp[name] for lp in active], axis=0).astype(dtype)

    wqkv = jnp.stack(
        [jnp.concatenate([lp["wq"], lp["wk"], lp["wv"]], axis=-1)
         for lp in active], axis=0).astype(jnp.bfloat16)          # (L, H, 3H)
    wo = stack("wo", jnp.bfloat16)                                # (L, H, H)
    w1 = stack("w1", jnp.bfloat16)                                # (L, H, FFN)
    w2 = stack("w2", jnp.bfloat16)                                # (L, FFN, H)

    stacked = (stack("ln1_g"), stack("ln1_b"), wqkv, wo,
               stack("ln2_g"), stack("ln2_b"),
               w1, stack("b1"), w2, stack("b2"))
    return {"embed": params["embed"], "stacked": stacked}


def _build_attn_mask(attention_mask):
    """(B*S, B*S) additive mask: block-diagonal over batches + key padding."""
    B, S = attention_mask.shape
    batch_ids = jnp.repeat(jnp.arange(B), S)                      # (B*S,)
    same_batch = batch_ids[:, None] == batch_ids[None, :]
    key_keep = attention_mask.reshape(B * S) > 0
    allowed = same_batch & key_keep[None, :]
    return jnp.where(allowed, 0.0, -1e9).astype(jnp.float32)


def encoder_forward(x2, mask, stacked_params):
    """Run all active encoder layers in a single grid-less Pallas call."""
    n_inputs = 2 + len(stacked_params)
    vmem_spec = lambda: pl.BlockSpec(memory_space=pltpu.MemorySpace.VMEM)

    return pl.pallas_call(
        fused_encoder_kernel,
        out_shape=jax.ShapeDtypeStruct(x2.shape, jnp.float32),
        in_specs=[vmem_spec() for _ in range(n_inputs)],
        out_specs=vmem_spec(),
        scratch_shapes=[pltpu.VMEM((x2.shape[0], HIDDEN), jnp.float32)],
    )(x2, mask, *stacked_params)


def init_params(key):
    keys = jax.random.split(key, 1 + NUM_LAYERS)
    params = {
        "embed": jax.random.normal(keys[0], (VOCAB, HIDDEN), jnp.float32) * 0.02,
        "layers": [],
    }
    for i in range(NUM_LAYERS):
        lk = jax.random.split(keys[1 + i], 6)
        layer = {
            "ln1_g": jnp.ones((1, HIDDEN), jnp.float32),
            "ln1_b": jnp.zeros((1, HIDDEN), jnp.float32),
            "wq": jax.random.normal(lk[0], (HIDDEN, HIDDEN), jnp.float32) * 0.02,
            "wk": jax.random.normal(lk[1], (HIDDEN, HIDDEN), jnp.float32) * 0.02,
            "wv": jax.random.normal(lk[2], (HIDDEN, HIDDEN), jnp.float32) * 0.02,
            "wo": jax.random.normal(lk[3], (HIDDEN, HIDDEN), jnp.float32) * 0.02,
            "ln2_g": jnp.ones((1, HIDDEN), jnp.float32),
            "ln2_b": jnp.zeros((1, HIDDEN), jnp.float32),
            "w1": jax.random.normal(lk[4], (HIDDEN, FFN), jnp.float32) * 0.02,
            "b1": jnp.zeros((1, FFN), jnp.float32),
            "w2": jax.random.normal(lk[5], (FFN, HIDDEN), jnp.float32) * 0.02,
            "b2": jnp.zeros((1, HIDDEN), jnp.float32),
        }
        params["layers"].append(layer)
    return params


@jax.jit
def custom_paligemma_forward(prepared, input_ids, attention_mask):
    """Equivalent of CustomPaliGemma.forward: embed -> encoder with even layers skipped.

    `prepared` comes from prepare_params (weights already stacked/fused/cast).
    Returns the last hidden state, shape (B, S, HIDDEN).
    """
    B, S = input_ids.shape
    # glue: embedding lookup + mask construction in plain JAX (cheap, per-call).
    x2 = prepared["embed"][input_ids].reshape(B * S, HIDDEN)      # (B*S, H)
    mask = _build_attn_mask(attention_mask)                       # (B*S, B*S)
    out = encoder_forward(x2, mask, prepared["stacked"])
    # TODO(synk): the real AutoModel output is a ModelOutput dataclass (and may
    # include pooler output / final norm); we return the last hidden state only.
    return out.reshape(B, S, HIDDEN)


if __name__ == "__main__":
    key = jax.random.PRNGKey(0)
    pkey, ikey = jax.random.split(key)

    params = init_params(pkey)
    prepared = prepare_params(params)          # one-time, outside the jit path

    B, S = BATCH, SEQ
    input_ids = jax.random.randint(ikey, (B, S), 0, VOCAB, dtype=jnp.int32)
    attention_mask = jnp.ones((B, S), jnp.int32).at[1, 6:].set(0)  # pad last 2 tokens of row 1

    out = custom_paligemma_forward(prepared, input_ids, attention_mask)
    jax.block_until_ready(out)
    assert out.shape == (B, S, HIDDEN)
    print("KERNEL_OK")
</pallas_src>

<mosaic_0001>
module attributes {stable_mosaic.version = 11 : i64} {
  func.func @fused_encoder_kernel(%arg0: memref<16x32xf32, #tpu.memory_space<vmem>>, %arg1: memref<16x16xf32, #tpu.memory_space<vmem>>, %arg2: memref<2x1x32xf32, #tpu.memory_space<vmem>>, %arg3: memref<2x1x32xf32, #tpu.memory_space<vmem>>, %arg4: memref<2x32x96xbf16, #tpu.memory_space<vmem>>, %arg5: memref<2x32x32xbf16, #tpu.memory_space<vmem>>, %arg6: memref<2x1x32xf32, #tpu.memory_space<vmem>>, %arg7: memref<2x1x32xf32, #tpu.memory_space<vmem>>, %arg8: memref<2x32x64xbf16, #tpu.memory_space<vmem>>, %arg9: memref<2x1x64xf32, #tpu.memory_space<vmem>>, %arg10: memref<2x64x32xbf16, #tpu.memory_space<vmem>>, %arg11: memref<2x1x32xf32, #tpu.memory_space<vmem>>, %arg12: memref<16x32xf32, #tpu.memory_space<vmem>>, %arg13: memref<16x32xf32, #tpu.memory_space<vmem>>) attributes {dimension_semantics = [], scalar_prefetch = 0 : i64, scratch_operands = 1 : i64, tpu.core_type = #tpu.core_type<tc>} {
    %c0 = arith.constant 0 : index
    %c0_0 = arith.constant 0 : index
    %0 = vector.load %arg0[%c0, %c0_0] : memref<16x32xf32, #tpu.memory_space<vmem>>, vector<16x32xf32>
    %c0_1 = arith.constant 0 : index
    %c0_2 = arith.constant 0 : index
    %1 = vector.load %arg1[%c0_1, %c0_2] : memref<16x16xf32, #tpu.memory_space<vmem>>, vector<16x16xf32>
    %c0_3 = arith.constant 0 : index
    %c0_4 = arith.constant 0 : index
    %c0_5 = arith.constant 0 : index
    %2 = vector.load %arg2[%c0_3, %c0_4, %c0_5] : memref<2x1x32xf32, #tpu.memory_space<vmem>>, vector<1x1x32xf32>
    %3 = vector.shape_cast %2 : vector<1x1x32xf32> to vector<1x32xf32>
    %c0_6 = arith.constant 0 : index
    %c0_7 = arith.constant 0 : index
    %c0_8 = arith.constant 0 : index
    %4 = vector.load %arg3[%c0_6, %c0_7, %c0_8] : memref<2x1x32xf32, #tpu.memory_space<vmem>>, vector<1x1x32xf32>
    %5 = vector.shape_cast %4 : vector<1x1x32xf32> to vector<1x32xf32>
    %cst = arith.constant dense<0.000000e+00> : vector<16xf32>
    %6 = vector.multi_reduction <add>, %0, %cst [1] : vector<16x32xf32> to vector<16xf32>
    %7 = vector.shape_cast %6 : vector<16xf32> to vector<16x1xf32>
    %cst_9 = arith.constant 3.200000e+01 : f32
    %8 = vector.broadcast %cst_9 : f32 to vector<16x1xf32>
    %9 = arith.divf %7, %8 : vector<16x1xf32>
    %10 = vector.broadcast %9 : vector<16x1xf32> to vector<16x32xf32>
    %11 = arith.subf %0, %10 : vector<16x32xf32>
    %12 = arith.mulf %11, %11 : vector<16x32xf32>
    %cst_10 = arith.constant dense<0.000000e+00> : vector<16xf32>
    %13 = vector.multi_reduction <add>, %12, %cst_10 [1] : vector<16x32xf32> to vector<16xf32>
    %14 = vector.shape_cast %13 : vector<16xf32> to vector<16x1xf32>
    %cst_11 = arith.constant 3.200000e+01 : f32
    %15 = vector.broadcast %cst_11 : f32 to vector<16x1xf32>
    %16 = arith.divf %14, %15 : vector<16x1xf32>
    %17 = vector.broadcast %9 : vector<16x1xf32> to vector<16x32xf32>
    %18 = arith.subf %0, %17 : vector<16x32xf32>
    %cst_12 = arith.constant 9.99999997E-7 : f32
    %19 = vector.broadcast %cst_12 : f32 to vector<16x1xf32>
    %20 = arith.addf %16, %19 : vector<16x1xf32>
    %21 = math.rsqrt %20 : vector<16x1xf32>
    %22 = vector.broadcast %21 : vector<16x1xf32> to vector<16x32xf32>
    %23 = arith.mulf %18, %22 : vector<16x32xf32>
    %24 = vector.broadcast %3 : vector<1x32xf32> to vector<16x32xf32>
    %25 = arith.mulf %23, %24 : vector<16x32xf32>
    %26 = vector.broadcast %5 : vector<1x32xf32> to vector<16x32xf32>
    %27 = arith.addf %25, %26 : vector<16x32xf32>
    %28 = arith.truncf %27 : vector<16x32xf32> to vector<16x32xbf16>
    %c0_13 = arith.constant 0 : index
    %c0_14 = arith.constant 0 : index
    %c0_15 = arith.constant 0 : index
    %29 = vector.load %arg4[%c0_13, %c0_14, %c0_15] : memref<2x32x96xbf16, #tpu.memory_space<vmem>>, vector<1x32x96xbf16>
    %30 = vector.shape_cast %29 : vector<1x32x96xbf16> to vector<32x96xbf16>
    %cst_16 = arith.constant dense<0.000000e+00> : vector<16x96xf32>
    %31 = tpu.matmul %28, %30, %cst_16 {dimension_numbers = #tpu.dot_dimension_numbers<[1], [0], [0], [1], [0, 0, 1, 1], [], []>} : vector<16x32xbf16>, vector<32x96xbf16>, vector<16x96xf32> -> vector<16x96xf32>
    %32 = vector.extract_strided_slice %31 {offsets = [0, 0], sizes = [16, 8], strides = [1, 1]} : vector<16x96xf32> to vector<16x8xf32>
    %33 = vector.extract_strided_slice %31 {offsets = [0, 32], sizes = [16, 8], strides = [1, 1]} : vector<16x96xf32> to vector<16x8xf32>
    %34 = vector.extract_strided_slice %31 {offsets = [0, 64], sizes = [16, 8], strides = [1, 1]} : vector<16x96xf32> to vector<16x8xf32>
    %cst_17 = arith.constant dense<0.000000e+00> : vector<16x16xf32>
    %35 = tpu.matmul %32, %33, %cst_17 {dimension_numbers = #tpu.dot_dimension_numbers<[1], [1], [0], [0], [0, 0, 1, 0], [], []>} : vector<16x8xf32>, vector<16x8xf32>, vector<16x16xf32> -> vector<16x16xf32>
    %cst_18 = arith.constant 0.353553385 : f32
    %36 = vector.broadcast %cst_18 : f32 to vector<16x16xf32>
    %37 = arith.mulf %35, %36 : vector<16x16xf32>
    %38 = arith.addf %37, %1 : vector<16x16xf32>
    %cst_19 = arith.constant dense<0xFF800000> : vector<16xf32>
    %39 = vector.multi_reduction <maximumf>, %38, %cst_19 [1] : vector<16x16xf32> to vector<16xf32>
    %40 = vector.shape_cast %39 : vector<16xf32> to vector<16x1xf32>
    %41 = vector.broadcast %40 : vector<16x1xf32> to vector<16x16xf32>
    %42 = arith.subf %38, %41 : vector<16x16xf32>
    %43 = math.exp %42 : vector<16x16xf32>
    %cst_20 = arith.constant dense<0.000000e+00> : vector<16xf32>
    %44 = vector.multi_reduction <add>, %43, %cst_20 [1] : vector<16x16xf32> to vector<16xf32>
    %45 = vector.shape_cast %44 : vector<16xf32> to vector<16x1xf32>
    %46 = tpu.reciprocal %45 {approx = true} : vector<16x1xf32> -> vector<16x1xf32>
    %47 = vector.broadcast %46 : vector<16x1xf32> to vector<16x16xf32>
    %48 = arith.mulf %43, %47 : vector<16x16xf32>
    %cst_21 = arith.constant dense<0.000000e+00> : vector<16x8xf32>
    %49 = tpu.matmul %48, %34, %cst_21 {dimension_numbers = #tpu.dot_dimension_numbers<[1], [0], [0], [1], [0, 0, 1, 1], [], []>} : vector<16x16xf32>, vector<16x8xf32>, vector<16x8xf32> -> vector<16x8xf32>
    %c0_22 = arith.constant 0 : index
    %c0_23 = arith.constant 0 : index
    %50 = vector.load %arg13[%c0_22, %c0_23] : memref<16x32xf32, #tpu.memory_space<vmem>>, vector<16x8xf32>
    tpu.vector_store %arg13[%c0_22, %c0_23], %49 {strides = array<i32>} : memref<16x32xf32, #tpu.memory_space<vmem>>, vector<16x8xf32>,
    %51 = vector.extract_strided_slice %31 {offsets = [0, 8], sizes = [16, 8], strides = [1, 1]} : vector<16x96xf32> to vector<16x8xf32>
    %52 = vector.extract_strided_slice %31 {offsets = [0, 40], sizes = [16, 8], strides = [1, 1]} : vector<16x96xf32> to vector<16x8xf32>
    %53 = vector.extract_strided_slice %31 {offsets = [0, 72], sizes = [16, 8], strides = [1, 1]} : vector<16x96xf32> to vector<16x8xf32>
    %cst_24 = arith.constant dense<0.000000e+00> : vector<16x16xf32>
    %54 = tpu.matmul %51, %52, %cst_24 {dimension_numbers = #tpu.dot_dimension_numbers<[1], [1], [0], [0], [0, 0, 1, 0], [], []>} : vector<16x8xf32>, vector<16x8xf32>, vector<16x16xf32> -> vector<16x16xf32>
    %cst_25 = arith.constant 0.353553385 : f32
    %55 = vector.broadcast %cst_25 : f32 to vector<16x16xf32>
    %56 = arith.mulf %54, %55 : vector<16x16xf32>
    %57 = arith.addf %56, %1 : vector<16x16xf32>
    %cst_26 = arith.constant dense<0xFF800000> : vector<16xf32>
    %58 = vector.multi_reduction <maximumf>, %57, %cst_26 [1] : vector<16x16xf32> to vector<16xf32>
    %59 = vector.shape_cast %58 : vector<16xf32> to vector<16x1xf32>
    %60 = vector.broadcast %59 : vector<16x1xf32> to vector<16x16xf32>
    %61 = arith.subf %57, %60 : vector<16x16xf32>
    %62 = math.exp %61 : vector<16x16xf32>
    %cst_27 = arith.constant dense<0.000000e+00> : vector<16xf32>
    %63 = vector.multi_reduction <add>, %62, %cst_27 [1] : vector<16x16xf32> to vector<16xf32>
    %64 = vector.shape_cast %63 : vector<16xf32> to vector<16x1xf32>
    %65 = tpu.reciprocal %64 {approx = true} : vector<16x1xf32> -> vector<16x1xf32>
    %66 = vector.broadcast %65 : vector<16x1xf32> to vector<16x16xf32>
    %67 = arith.mulf %62, %66 : vector<16x16xf32>
    %cst_28 = arith.constant dense<0.000000e+00> : vector<16x8xf32>
    %68 = tpu.matmul %67, %53, %cst_28 {dimension_numbers = #tpu.dot_dimension_numbers<[1], [0], [0], [1], [0, 0, 1, 1], [], []>} : vector<16x16xf32>, vector<16x8xf32>, vector<16x8xf32> -> vector<16x8xf32>
    %c0_29 = arith.constant 0 : index
    %c8 = arith.constant 8 : index
    %69 = vector.load %arg13[%c0_29, %c8] : memref<16x32xf32, #tpu.memory_space<vmem>>, vector<16x8xf32>
    tpu.vector_store %arg13[%c0_29, %c8], %68 {strides = array<i32>} : memref<16x32xf32, #tpu.memory_space<vmem>>, vector<16x8xf32>,
    %70 = vector.extract_strided_slice %31 {offsets = [0, 16], sizes = [16, 8], strides = [1, 1]} : vector<16x96xf32> to vector<16x8xf32>
    %71 = vector.extract_strided_slice %31 {offsets = [0, 48], sizes = [16, 8], strides = [1, 1]} : vector<16x96xf32> to vector<16x8xf32>
    %72 = vector.extract_strided_slice %31 {offsets = [0, 80], sizes = [16, 8], strides = [1, 1]} : vector<16x96xf32> to vector<16x8xf32>
    %cst_30 = arith.constant dense<0.000000e+00> : vector<16x16xf32>
    %73 = tpu.matmul %70, %71, %cst_30 {dimension_numbers = #tpu.dot_dimension_numbers<[1], [1], [0], [0], [0, 0, 1, 0], [], []>} : vector<16x8xf32>, vector<16x8xf32>, vector<16x16xf32> -> vector<16x16xf32>
    %cst_31 = arith.constant 0.353553385 : f32
    %74 = vector.broadcast %cst_31 : f32 to vector<16x16xf32>
    %75 = arith.mulf %73, %74 : vector<16x16xf32>
    %76 = arith.addf %75, %1 : vector<16x16xf32>
    %cst_32 = arith.constant dense<0xFF800000> : vector<16xf32>
    %77 = vector.multi_reduction <maximumf>, %76, %cst_32 [1] : vector<16x16xf32> to vector<16xf32>
    %78 = vector.shape_cast %77 : vector<16xf32> to vector<16x1xf32>
    %79 = vector.broadcast %78 : vector<16x1xf32> to vector<16x16xf32>
    %80 = arith.subf %76, %79 : vector<16x16xf32>
    %81 = math.exp %80 : vector<16x16xf32>
    %cst_33 = arith.constant dense<0.000000e+00> : vector<16xf32>
    %82 = vector.multi_reduction <add>, %81, %cst_33 [1] : vector<16x16xf32> to vector<16xf32>
    %83 = vector.shape_cast %82 : vector<16xf32> to vector<16x1xf32>
    %84 = tpu.reciprocal %83 {approx = true} : vector<16x1xf32> -> vector<16x1xf32>
    %85 = vector.broadcast %84 : vector<16x1xf32> to vector<16x16xf32>
    %86 = arith.mulf %81, %85 : vector<16x16xf32>
    %cst_34 = arith.constant dense<0.000000e+00> : vector<16x8xf32>
    %87 = tpu.matmul %86, %72, %cst_34 {dimension_numbers = #tpu.dot_dimension_numbers<[1], [0], [0], [1], [0, 0, 1, 1], [], []>} : vector<16x16xf32>, vector<16x8xf32>, vector<16x8xf32> -> vector<16x8xf32>
    %c0_35 = arith.constant 0 : index
    %c16 = arith.constant 16 : index
    %88 = vector.load %arg13[%c0_35, %c16] : memref<16x32xf32, #tpu.memory_space<vmem>>, vector<16x8xf32>
    tpu.vector_store %arg13[%c0_35, %c16], %87 {strides = array<i32>} : memref<16x32xf32, #tpu.memory_space<vmem>>, vector<16x8xf32>,
    %89 = vector.extract_strided_slice %31 {offsets = [0, 24], sizes = [16, 8], strides = [1, 1]} : vector<16x96xf32> to vector<16x8xf32>
    %90 = vector.extract_strided_slice %31 {offsets = [0, 56], sizes = [16, 8], strides = [1, 1]} : vector<16x96xf32> to vector<16x8xf32>
    %91 = vector.extract_strided_slice %31 {offsets = [0, 88], sizes = [16, 8], strides = [1, 1]} : vector<16x96xf32> to vector<16x8xf32>
    %cst_36 = arith.constant dense<0.000000e+00> : vector<16x16xf32>
    %92 = tpu.matmul %89, %90, %cst_36 {dimension_numbers = #tpu.dot_dimension_numbers<[1], [1], [0], [0], [0, 0, 1, 0], [], []>} : vector<16x8xf32>, vector<16x8xf32>, vector<16x16xf32> -> vector<16x16xf32>
    %cst_37 = arith.constant 0.353553385 : f32
    %93 = vector.broadcast %cst_37 : f32 to vector<16x16xf32>
    %94 = arith.mulf %92, %93 : vector<16x16xf32>
    %95 = arith.addf %94, %1 : vector<16x16xf32>
    %cst_38 = arith.constant dense<0xFF800000> : vector<16xf32>
    %96 = vector.multi_reduction <maximumf>, %95, %cst_38 [1] : vector<16x16xf32> to vector<16xf32>
    %97 = vector.shape_cast %96 : vector<16xf32> to vector<16x1xf32>
    %98 = vector.broadcast %97 : vector<16x1xf32> to vector<16x16xf32>
    %99 = arith.subf %95, %98 : vector<16x16xf32>
    %100 = math.exp %99 : vector<16x16xf32>
    %cst_39 = arith.constant dense<0.000000e+00> : vector<16xf32>
    %101 = vector.multi_reduction <add>, %100, %cst_39 [1] : vector<16x16xf32> to vector<16xf32>
    %102 = vector.shape_cast %101 : vector<16xf32> to vector<16x1xf32>
    %103 = tpu.reciprocal %102 {approx = true} : vector<16x1xf32> -> vector<16x1xf32>
    %104 = vector.broadcast %103 : vector<16x1xf32> to vector<16x16xf32>
    %105 = arith.mulf %100, %104 : vector<16x16xf32>
    %cst_40 = arith.constant dense<0.000000e+00> : vector<16x8xf32>
    %106 = tpu.matmul %105, %91, %cst_40 {dimension_numbers = #tpu.dot_dimension_numbers<[1], [0], [0], [1], [0, 0, 1, 1], [], []>} : vector<16x16xf32>, vector<16x8xf32>, vector<16x8xf32> -> vector<16x8xf32>
    %c0_41 = arith.constant 0 : index
    %c24 = arith.constant 24 : index
    %107 = vector.load %arg13[%c0_41, %c24] : memref<16x32xf32, #tpu.memory_space<vmem>>, vector<16x8xf32>
    tpu.vector_store %arg13[%c0_41, %c24], %106 {strides = array<i32>} : memref<16x32xf32, #tpu.memory_space<vmem>>, vector<16x8xf32>,
    %c0_42 = arith.constant 0 : index
    %c0_43 = arith.constant 0 : index
    %108 = vector.load %arg13[%c0_42, %c0_43] : memref<16x32xf32, #tpu.memory_space<vmem>>, vector<16x32xf32>
    %109 = arith.truncf %108 : vector<16x32xf32> to vector<16x32xbf16>
    %c0_44 = arith.constant 0 : index
    %c0_45 = arith.constant 0 : index
    %c0_46 = arith.constant 0 : index
    %110 = vector.load %arg5[%c0_44, %c0_45, %c0_46] : memref<2x32x32xbf16, #tpu.memory_space<vmem>>, vector<1x32x32xbf16>
    %111 = vector.shape_cast %110 : vector<1x32x32xbf16> to vector<32x32xbf16>
    %cst_47 = arith.constant dense<0.000000e+00> : vector<16x32xf32>
    %112 = tpu.matmul %109, %111, %cst_47 {dimension_numbers = #tpu.dot_dimension_numbers<[1], [0], [0], [1], [0, 0, 1, 1], [], []>} : vector<16x32xbf16>, vector<32x32xbf16>, vector<16x32xf32> -> vector<16x32xf32>
    %113 = arith.addf %0, %112 : vector<16x32xf32>
    %c0_48 = arith.constant 0 : index
    %c0_49 = arith.constant 0 : index
    %c0_50 = arith.constant 0 : index
    %114 = vector.load %arg6[%c0_48, %c0_49, %c0_50] : memref<2x1x32xf32, #tpu.memory_space<vmem>>, vector<1x1x32xf32>
    %115 = vector.shape_cast %114 : vector<1x1x32xf32> to vector<1x32xf32>
    %c0_51 = arith.constant 0 : index
    %c0_52 = arith.constant 0 : index
    %c0_53 = arith.constant 0 : index
    %116 = vector.load %arg7[%c0_51, %c0_52, %c0_53] : memref<2x1x32xf32, #tpu.memory_space<vmem>>, vector<1x1x32xf32>
    %117 = vector.shape_cast %116 : vector<1x1x32xf32> to vector<1x32xf32>
    %cst_54 = arith.constant dense<0.000000e+00> : vector<16xf32>
    %118 = vector.multi_reduction <add>, %113, %cst_54 [1] : vector<16x32xf32> to vector<16xf32>
    %119 = vector.shape_cast %118 : vector<16xf32> to vector<16x1xf32>
    %cst_55 = arith.constant 3.200000e+01 : f32
    %120 = vector.broadcast %cst_55 : f32 to vector<16x1xf32>
    %121 = arith.divf %119, %120 : vector<16x1xf32>
    %122 = vector.broadcast %121 : vector<16x1xf32> to vector<16x32xf32>
    %123 = arith.subf %113, %122 : vector<16x32xf32>
    %124 = arith.mulf %123, %123 : vector<16x32xf32>
    %cst_56 = arith.constant dense<0.000000e+00> : vector<16xf32>
    %125 = vector.multi_reduction <add>, %124, %cst_56 [1] : vector<16x32xf32> to vector<16xf32>
    %126 = vector.shape_cast %125 : vector<16xf32> to vector<16x1xf32>
    %cst_57 = arith.constant 3.200000e+01 : f32
    %127 = vector.broadcast %cst_57 : f32 to vector<16x1xf32>
    %128 = arith.divf %126, %127 : vector<16x1xf32>
    %129 = vector.broadcast %121 : vector<16x1xf32> to vector<16x32xf32>
    %130 = arith.subf %113, %129 : vector<16x32xf32>
    %cst_58 = arith.constant 9.99999997E-7 : f32
    %131 = vector.broadcast %cst_58 : f32 to vector<16x1xf32>
    %132 = arith.addf %128, %131 : vector<16x1xf32>
    %133 = math.rsqrt %132 : vector<16x1xf32>
    %134 = vector.broadcast %133 : vector<16x1xf32> to vector<16x32xf32>
    %135 = arith.mulf %130, %134 : vector<16x32xf32>
    %136 = vector.broadcast %115 : vector<1x32xf32> to vector<16x32xf32>
    %137 = arith.mulf %135, %136 : vector<16x32xf32>
    %138 = vector.broadcast %117 : vector<1x32xf32> to vector<16x32xf32>
    %139 = arith.addf %137, %138 : vector<16x32xf32>
    %140 = arith.truncf %139 : vector<16x32xf32> to vector<16x32xbf16>
    %c0_59 = arith.constant 0 : index
    %c0_60 = arith.constant 0 : index
    %c0_61 = arith.constant 0 : index
    %141 = vector.load %arg8[%c0_59, %c0_60, %c0_61] : memref<2x32x64xbf16, #tpu.memory_space<vmem>>, vector<1x32x64xbf16>
    %142 = vector.shape_cast %141 : vector<1x32x64xbf16> to vector<32x64xbf16>
    %cst_62 = arith.constant dense<0.000000e+00> : vector<16x64xf32>
    %143 = tpu.matmul %140, %142, %cst_62 {dimension_numbers = #tpu.dot_dimension_numbers<[1], [0], [0], [1], [0, 0, 1, 1], [], []>} : vector<16x32xbf16>, vector<32x64xbf16>, vector<16x64xf32> -> vector<16x64xf32>
    %c0_63 = arith.constant 0 : index
    %c0_64 = arith.constant 0 : index
    %c0_65 = arith.constant 0 : index
    %144 = vector.load %arg9[%c0_63, %c0_64, %c0_65] : memref<2x1x64xf32, #tpu.memory_space<vmem>>, vector<1x1x64xf32>
    %145 = vector.shape_cast %144 : vector<1x1x64xf32> to vector<1x64xf32>
    %146 = vector.broadcast %145 : vector<1x64xf32> to vector<16x64xf32>
    %147 = arith.addf %143, %146 : vector<16x64xf32>
    %148 = arith.mulf %147, %147 : vector<16x64xf32>
    %149 = arith.mulf %147, %148 : vector<16x64xf32>
    %cst_66 = arith.constant 4.471500e-02 : f32
    %150 = vector.broadcast %cst_66 : f32 to vector<16x64xf32>
    %151 = arith.mulf %150, %149 : vector<16x64xf32>
    %152 = arith.addf %147, %151 : vector<16x64xf32>
    %cst_67 = arith.constant 0.797884583 : f32
    %153 = vector.broadcast %cst_67 : f32 to vector<16x64xf32>
    %154 = arith.mulf %153, %152 : vector<16x64xf32>
    %155 = math.tanh %154 : vector<16x64xf32>
    %cst_68 = arith.constant 1.000000e+00 : f32
    %156 = vector.broadcast %cst_68 : f32 to vector<16x64xf32>
    %157 = arith.addf %156, %155 : vector<16x64xf32>
    %cst_69 = arith.constant 5.000000e-01 : f32
    %158 = vector.broadcast %cst_69 : f32 to vector<16x64xf32>
    %159 = arith.mulf %158, %157 : vector<16x64xf32>
    %160 = arith.mulf %147, %159 : vector<16x64xf32>
    %161 = arith.truncf %160 : vector<16x64xf32> to vector<16x64xbf16>
    %c0_70 = arith.constant 0 : index
    %c0_71 = arith.constant 0 : index
    %c0_72 = arith.constant 0 : index
    %162 = vector.load %arg10[%c0_70, %c0_71, %c0_72] : memref<2x64x32xbf16, #tpu.memory_space<vmem>>, vector<1x64x32xbf16>
    %163 = vector.shape_cast %162 : vector<1x64x32xbf16> to vector<64x32xbf16>
    %cst_73 = arith.constant dense<0.000000e+00> : vector<16x32xf32>
    %164 = tpu.matmul %161, %163, %cst_73 {dimension_numbers = #tpu.dot_dimension_numbers<[1], [0], [0], [1], [0, 0, 1, 1], [], []>} : vector<16x64xbf16>, vector<64x32xbf16>, vector<16x32xf32> -> vector<16x32xf32>
    %c0_74 = arith.constant 0 : index
    %c0_75 = arith.constant 0 : index
    %c0_76 = arith.constant 0 : index
    %165 = vector.load %arg11[%c0_74, %c0_75, %c0_76] : memref<2x1x32xf32, #tpu.memory_space<vmem>>, vector<1x1x32xf32>
    %166 = vector.shape_cast %165 : vector<1x1x32xf32> to vector<1x32xf32>
    %167 = vector.broadcast %166 : vector<1x32xf32> to vector<16x32xf32>
    %168 = arith.addf %164, %167 : vector<16x32xf32>
    %169 = arith.addf %113, %168 : vector<16x32xf32>
    %c1 = arith.constant 1 : index
    %c0_77 = arith.constant 0 : index
    %c0_78 = arith.constant 0 : index
    %170 = vector.load %arg2[%c1, %c0_77, %c0_78] : memref<2x1x32xf32, #tpu.memory_space<vmem>>, vector<1x1x32xf32>
    %171 = vector.shape_cast %170 : vector<1x1x32xf32> to vector<1x32xf32>
    %c1_79 = arith.constant 1 : index
    %c0_80 = arith.constant 0 : index
    %c0_81 = arith.constant 0 : index
    %172 = vector.load %arg3[%c1_79, %c0_80, %c0_81] : memref<2x1x32xf32, #tpu.memory_space<vmem>>, vector<1x1x32xf32>
    %173 = vector.shape_cast %172 : vector<1x1x32xf32> to vector<1x32xf32>
    %cst_82 = arith.constant dense<0.000000e+00> : vector<16xf32>
    %174 = vector.multi_reduction <add>, %169, %cst_82 [1] : vector<16x32xf32> to vector<16xf32>
    %175 = vector.shape_cast %174 : vector<16xf32> to vector<16x1xf32>
    %cst_83 = arith.constant 3.200000e+01 : f32
    %176 = vector.broadcast %cst_83 : f32 to vector<16x1xf32>
    %177 = arith.divf %175, %176 : vector<16x1xf32>
    %178 = vector.broadcast %177 : vector<16x1xf32> to vector<16x32xf32>
    %179 = arith.subf %169, %178 : vector<16x32xf32>
    %180 = arith.mulf %179, %179 : vector<16x32xf32>
    %cst_84 = arith.constant dense<0.000000e+00> : vector<16xf32>
    %181 = vector.multi_reduction <add>, %180, %cst_84 [1] : vector<16x32xf32> to vector<16xf32>
    %182 = vector.shape_cast %181 : vector<16xf32> to vector<16x1xf32>
    %cst_85 = arith.constant 3.200000e+01 : f32
    %183 = vector.broadcast %cst_85 : f32 to vector<16x1xf32>
    %184 = arith.divf %182, %183 : vector<16x1xf32>
    %185 = vector.broadcast %177 : vector<16x1xf32> to vector<16x32xf32>
    %186 = arith.subf %169, %185 : vector<16x32xf32>
    %cst_86 = arith.constant 9.99999997E-7 : f32
    %187 = vector.broadcast %cst_86 : f32 to vector<16x1xf32>
    %188 = arith.addf %184, %187 : vector<16x1xf32>
    %189 = math.rsqrt %188 : vector<16x1xf32>
    %190 = vector.broadcast %189 : vector<16x1xf32> to vector<16x32xf32>
    %191 = arith.mulf %186, %190 : vector<16x32xf32>
    %192 = vector.broadcast %171 : vector<1x32xf32> to vector<16x32xf32>
    %193 = arith.mulf %191, %192 : vector<16x32xf32>
    %194 = vector.broadcast %173 : vector<1x32xf32> to vector<16x32xf32>
    %195 = arith.addf %193, %194 : vector<16x32xf32>
    %196 = arith.truncf %195 : vector<16x32xf32> to vector<16x32xbf16>
    %c1_87 = arith.constant 1 : index
    %c0_88 = arith.constant 0 : index
    %c0_89 = arith.constant 0 : index
    %197 = vector.load %arg4[%c1_87, %c0_88, %c0_89] : memref<2x32x96xbf16, #tpu.memory_space<vmem>>, vector<1x32x96xbf16>
    %198 = vector.shape_cast %197 : vector<1x32x96xbf16> to vector<32x96xbf16>
    %cst_90 = arith.constant dense<0.000000e+00> : vector<16x96xf32>
    %199 = tpu.matmul %196, %198, %cst_90 {dimension_numbers = #tpu.dot_dimension_numbers<[1], [0], [0], [1], [0, 0, 1, 1], [], []>} : vector<16x32xbf16>, vector<32x96xbf16>, vector<16x96xf32> -> vector<16x96xf32>
    %200 = vector.extract_strided_slice %199 {offsets = [0, 0], sizes = [16, 8], strides = [1, 1]} : vector<16x96xf32> to vector<16x8xf32>
    %201 = vector.extract_strided_slice %199 {offsets = [0, 32], sizes = [16, 8], strides = [1, 1]} : vector<16x96xf32> to vector<16x8xf32>
    %202 = vector.extract_strided_slice %199 {offsets = [0, 64], sizes = [16, 8], strides = [1, 1]} : vector<16x96xf32> to vector<16x8xf32>
    %cst_91 = arith.constant dense<0.000000e+00> : vector<16x16xf32>
    %203 = tpu.matmul %200, %201, %cst_91 {dimension_numbers = #tpu.dot_dimension_numbers<[1], [1], [0], [0], [0, 0, 1, 0], [], []>} : vector<16x8xf32>, vector<16x8xf32>, vector<16x16xf32> -> vector<16x16xf32>
    %cst_92 = arith.constant 0.353553385 : f32
    %204 = vector.broadcast %cst_92 : f32 to vector<16x16xf32>
    %205 = arith.mulf %203, %204 : vector<16x16xf32>
    %206 = arith.addf %205, %1 : vector<16x16xf32>
    %cst_93 = arith.constant dense<0xFF800000> : vector<16xf32>
    %207 = vector.multi_reduction <maximumf>, %206, %cst_93 [1] : vector<16x16xf32> to vector<16xf32>
    %208 = vector.shape_cast %207 : vector<16xf32> to vector<16x1xf32>
    %209 = vector.broadcast %208 : vector<16x1xf32> to vector<16x16xf32>
    %210 = arith.subf %206, %209 : vector<16x16xf32>
    %211 = math.exp %210 : vector<16x16xf32>
    %cst_94 = arith.constant dense<0.000000e+00> : vector<16xf32>
    %212 = vector.multi_reduction <add>, %211, %cst_94 [1] : vector<16x16xf32> to vector<16xf32>
    %213 = vector.shape_cast %212 : vector<16xf32> to vector<16x1xf32>
    %214 = tpu.reciprocal %213 {approx = true} : vector<16x1xf32> -> vector<16x1xf32>
    %215 = vector.broadcast %214 : vector<16x1xf32> to vector<16x16xf32>
    %216 = arith.mulf %211, %215 : vector<16x16xf32>
    %cst_95 = arith.constant dense<0.000000e+00> : vector<16x8xf32>
    %217 = tpu.matmul %216, %202, %cst_95 {dimension_numbers = #tpu.dot_dimension_numbers<[1], [0], [0], [1], [0, 0, 1, 1], [], []>} : vector<16x16xf32>, vector<16x8xf32>, vector<16x8xf32> -> vector<16x8xf32>
    %c0_96 = arith.constant 0 : index
    %c0_97 = arith.constant 0 : index
    %218 = vector.load %arg13[%c0_96, %c0_97] : memref<16x32xf32, #tpu.memory_space<vmem>>, vector<16x8xf32>
    tpu.vector_store %arg13[%c0_96, %c0_97], %217 {strides = array<i32>} : memref<16x32xf32, #tpu.memory_space<vmem>>, vector<16x8xf32>,
    %219 = vector.extract_strided_slice %199 {offsets = [0, 8], sizes = [16, 8], strides = [1, 1]} : vector<16x96xf32> to vector<16x8xf32>
    %220 = vector.extract_strided_slice %199 {offsets = [0, 40], sizes = [16, 8], strides = [1, 1]} : vector<16x96xf32> to vector<16x8xf32>
    %221 = vector.extract_strided_slice %199 {offsets = [0, 72], sizes = [16, 8], strides = [1, 1]} : vector<16x96xf32> to vector<16x8xf32>
    %cst_98 = arith.constant dense<0.000000e+00> : vector<16x16xf32>
    %222 = tpu.matmul %219, %220, %cst_98 {dimension_numbers = #tpu.dot_dimension_numbers<[1], [1], [0], [0], [0, 0, 1, 0], [], []>} : vector<16x8xf32>, vector<16x8xf32>, vector<16x16xf32> -> vector<16x16xf32>
    %cst_99 = arith.constant 0.353553385 : f32
    %223 = vector.broadcast %cst_99 : f32 to vector<16x16xf32>
    %224 = arith.mulf %222, %223 : vector<16x16xf32>
    %225 = arith.addf %224, %1 : vector<16x16xf32>
    %cst_100 = arith.constant dense<0xFF800000> : vector<16xf32>
    %226 = vector.multi_reduction <maximumf>, %225, %cst_100 [1] : vector<16x16xf32> to vector<16xf32>
    %227 = vector.shape_cast %226 : vector<16xf32> to vector<16x1xf32>
    %228 = vector.broadcast %227 : vector<16x1xf32> to vector<16x16xf32>
    %229 = arith.subf %225, %228 : vector<16x16xf32>
    %230 = math.exp %229 : vector<16x16xf32>
    %cst_101 = arith.constant dense<0.000000e+00> : vector<16xf32>
    %231 = vector.multi_reduction <add>, %230, %cst_101 [1] : vector<16x16xf32> to vector<16xf32>
    %232 = vector.shape_cast %231 : vector<16xf32> to vector<16x1xf32>
    %233 = tpu.reciprocal %232 {approx = true} : vector<16x1xf32> -> vector<16x1xf32>
    %234 = vector.broadcast %233 : vector<16x1xf32> to vector<16x16xf32>
    %235 = arith.mulf %230, %234 : vector<16x16xf32>
    %cst_102 = arith.constant dense<0.000000e+00> : vector<16x8xf32>
    %236 = tpu.matmul %235, %221, %cst_102 {dimension_numbers = #tpu.dot_dimension_numbers<[1], [0], [0], [1], [0, 0, 1, 1], [], []>} : vector<16x16xf32>, vector<16x8xf32>, vector<16x8xf32> -> vector<16x8xf32>
    %c0_103 = arith.constant 0 : index
    %c8_104 = arith.constant 8 : index
    %237 = vector.load %arg13[%c0_103, %c8_104] : memref<16x32xf32, #tpu.memory_space<vmem>>, vector<16x8xf32>
    tpu.vector_store %arg13[%c0_103, %c8_104], %236 {strides = array<i32>} : memref<16x32xf32, #tpu.memory_space<vmem>>, vector<16x8xf32>,
    %238 = vector.extract_strided_slice %199 {offsets = [0, 16], sizes = [16, 8], strides = [1, 1]} : vector<16x96xf32> to vector<16x8xf32>
    %239 = vector.extract_strided_slice %199 {offsets = [0, 48], sizes = [16, 8], strides = [1, 1]} : vector<16x96xf32> to vector<16x8xf32>
    %240 = vector.extract_strided_slice %199 {offsets = [0, 80], sizes = [16, 8], strides = [1, 1]} : vector<16x96xf32> to vector<16x8xf32>
    %cst_105 = arith.constant dense<0.000000e+00> : vector<16x16xf32>
    %241 = tpu.matmul %238, %239, %cst_105 {dimension_numbers = #tpu.dot_dimension_numbers<[1], [1], [0], [0], [0, 0, 1, 0], [], []>} : vector<16x8xf32>, vector<16x8xf32>, vector<16x16xf32> -> vector<16x16xf32>
    %cst_106 = arith.constant 0.353553385 : f32
    %242 = vector.broadcast %cst_106 : f32 to vector<16x16xf32>
    %243 = arith.mulf %241, %242 : vector<16x16xf32>
    %244 = arith.addf %243, %1 : vector<16x16xf32>
    %cst_107 = arith.constant dense<0xFF800000> : vector<16xf32>
    %245 = vector.multi_reduction <maximumf>, %244, %cst_107 [1] : vector<16x16xf32> to vector<16xf32>
    %246 = vector.shape_cast %245 : vector<16xf32> to vector<16x1xf32>
    %247 = vector.broadcast %246 : vector<16x1xf32> to vector<16x16xf32>
    %248 = arith.subf %244, %247 : vector<16x16xf32>
    %249 = math.exp %248 : vector<16x16xf32>
    %cst_108 = arith.constant dense<0.000000e+00> : vector<16xf32>
    %250 = vector.multi_reduction <add>, %249, %cst_108 [1] : vector<16x16xf32> to vector<16xf32>
    %251 = vector.shape_cast %250 : vector<16xf32> to vector<16x1xf32>
    %252 = tpu.reciprocal %251 {approx = true} : vector<16x1xf32> -> vector<16x1xf32>
    %253 = vector.broadcast %252 : vector<16x1xf32> to vector<16x16xf32>
    %254 = arith.mulf %249, %253 : vector<16x16xf32>
    %cst_109 = arith.constant dense<0.000000e+00> : vector<16x8xf32>
    %255 = tpu.matmul %254, %240, %cst_109 {dimension_numbers = #tpu.dot_dimension_numbers<[1], [0], [0], [1], [0, 0, 1, 1], [], []>} : vector<16x16xf32>, vector<16x8xf32>, vector<16x8xf32> -> vector<16x8xf32>
    %c0_110 = arith.constant 0 : index
    %c16_111 = arith.constant 16 : index
    %256 = vector.load %arg13[%c0_110, %c16_111] : memref<16x32xf32, #tpu.memory_space<vmem>>, vector<16x8xf32>
    tpu.vector_store %arg13[%c0_110, %c16_111], %255 {strides = array<i32>} : memref<16x32xf32, #tpu.memory_space<vmem>>, vector<16x8xf32>,
    %257 = vector.extract_strided_slice %199 {offsets = [0, 24], sizes = [16, 8], strides = [1, 1]} : vector<16x96xf32> to vector<16x8xf32>
    %258 = vector.extract_strided_slice %199 {offsets = [0, 56], sizes = [16, 8], strides = [1, 1]} : vector<16x96xf32> to vector<16x8xf32>
    %259 = vector.extract_strided_slice %199 {offsets = [0, 88], sizes = [16, 8], strides = [1, 1]} : vector<16x96xf32> to vector<16x8xf32>
    %cst_112 = arith.constant dense<0.000000e+00> : vector<16x16xf32>
    %260 = tpu.matmul %257, %258, %cst_112 {dimension_numbers = #tpu.dot_dimension_numbers<[1], [1], [0], [0], [0, 0, 1, 0], [], []>} : vector<16x8xf32>, vector<16x8xf32>, vector<16x16xf32> -> vector<16x16xf32>
    %cst_113 = arith.constant 0.353553385 : f32
    %261 = vector.broadcast %cst_113 : f32 to vector<16x16xf32>
    %262 = arith.mulf %260, %261 : vector<16x16xf32>
    %263 = arith.addf %262, %1 : vector<16x16xf32>
    %cst_114 = arith.constant dense<0xFF800000> : vector<16xf32>
    %264 = vector.multi_reduction <maximumf>, %263, %cst_114 [1] : vector<16x16xf32> to vector<16xf32>
    %265 = vector.shape_cast %264 : vector<16xf32> to vector<16x1xf32>
    %266 = vector.broadcast %265 : vector<16x1xf32> to vector<16x16xf32>
    %267 = arith.subf %263, %266 : vector<16x16xf32>
    %268 = math.exp %267 : vector<16x16xf32>
    %cst_115 = arith.constant dense<0.000000e+00> : vector<16xf32>
    %269 = vector.multi_reduction <add>, %268, %cst_115 [1] : vector<16x16xf32> to vector<16xf32>
    %270 = vector.shape_cast %269 : vector<16xf32> to vector<16x1xf32>
    %271 = tpu.reciprocal %270 {approx = true} : vector<16x1xf32> -> vector<16x1xf32>
    %272 = vector.broadcast %271 : vector<16x1xf32> to vector<16x16xf32>
    %273 = arith.mulf %268, %272 : vector<16x16xf32>
    %cst_116 = arith.constant dense<0.000000e+00> : vector<16x8xf32>
    %274 = tpu.matmul %273, %259, %cst_116 {dimension_numbers = #tpu.dot_dimension_numbers<[1], [0], [0], [1], [0, 0, 1, 1], [], []>} : vector<16x16xf32>, vector<16x8xf32>, vector<16x8xf32> -> vector<16x8xf32>
    %c0_117 = arith.constant 0 : index
    %c24_118 = arith.constant 24 : index
    %275 = vector.load %arg13[%c0_117, %c24_118] : memref<16x32xf32, #tpu.memory_space<vmem>>, vector<16x8xf32>
    tpu.vector_store %arg13[%c0_117, %c24_118], %274 {strides = array<i32>} : memref<16x32xf32, #tpu.memory_space<vmem>>, vector<16x8xf32>,
    %c0_119 = arith.constant 0 : index
    %c0_120 = arith.constant 0 : index
    %276 = vector.load %arg13[%c0_119, %c0_120] : memref<16x32xf32, #tpu.memory_space<vmem>>, vector<16x32xf32>
    %277 = arith.truncf %276 : vector<16x32xf32> to vector<16x32xbf16>
    %c1_121 = arith.constant 1 : index
    %c0_122 = arith.constant 0 : index
    %c0_123 = arith.constant 0 : index
    %278 = vector.load %arg5[%c1_121, %c0_122, %c0_123] : memref<2x32x32xbf16, #tpu.memory_space<vmem>>, vector<1x32x32xbf16>
    %279 = vector.shape_cast %278 : vector<1x32x32xbf16> to vector<32x32xbf16>
    %cst_124 = arith.constant dense<0.000000e+00> : vector<16x32xf32>
    %280 = tpu.matmul %277, %279, %cst_124 {dimension_numbers = #tpu.dot_dimension_numbers<[1], [0], [0], [1], [0, 0, 1, 1], [], []>} : vector<16x32xbf16>, vector<32x32xbf16>, vector<16x32xf32> -> vector<16x32xf32>
    %281 = arith.addf %169, %280 : vector<16x32xf32>
    %c1_125 = arith.constant 1 : index
    %c0_126 = arith.constant 0 : index
    %c0_127 = arith.constant 0 : index
    %282 = vector.load %arg6[%c1_125, %c0_126, %c0_127] : memref<2x1x32xf32, #tpu.memory_space<vmem>>, vector<1x1x32xf32>
    %283 = vector.shape_cast %282 : vector<1x1x32xf32> to vector<1x32xf32>
    %c1_128 = arith.constant 1 : index
    %c0_129 = arith.constant 0 : index
    %c0_130 = arith.constant 0 : index
    %284 = vector.load %arg7[%c1_128, %c0_129, %c0_130] : memref<2x1x32xf32, #tpu.memory_space<vmem>>, vector<1x1x32xf32>
    %285 = vector.shape_cast %284 : vector<1x1x32xf32> to vector<1x32xf32>
    %cst_131 = arith.constant dense<0.000000e+00> : vector<16xf32>
    %286 = vector.multi_reduction <add>, %281, %cst_131 [1] : vector<16x32xf32> to vector<16xf32>
    %287 = vector.shape_cast %286 : vector<16xf32> to vector<16x1xf32>
    %cst_132 = arith.constant 3.200000e+01 : f32
    %288 = vector.broadcast %cst_132 : f32 to vector<16x1xf32>
    %289 = arith.divf %287, %288 : vector<16x1xf32>
    %290 = vector.broadcast %289 : vector<16x1xf32> to vector<16x32xf32>
    %291 = arith.subf %281, %290 : vector<16x32xf32>
    %292 = arith.mulf %291, %291 : vector<16x32xf32>
    %cst_133 = arith.constant dense<0.000000e+00> : vector<16xf32>
    %293 = vector.multi_reduction <add>, %292, %cst_133 [1] : vector<16x32xf32> to vector<16xf32>
    %294 = vector.shape_cast %293 : vector<16xf32> to vector<16x1xf32>
    %cst_134 = arith.constant 3.200000e+01 : f32
    %295 = vector.broadcast %cst_134 : f32 to vector<16x1xf32>
    %296 = arith.divf %294, %295 : vector<16x1xf32>
    %297 = vector.broadcast %289 : vector<16x1xf32> to vector<16x32xf32>
    %298 = arith.subf %281, %297 : vector<16x32xf32>
    %cst_135 = arith.constant 9.99999997E-7 : f32
    %299 = vector.broadcast %cst_135 : f32 to vector<16x1xf32>
    %300 = arith.addf %296, %299 : vector<16x1xf32>
    %301 = math.rsqrt %300 : vector<16x1xf32>
    %302 = vector.broadcast %301 : vector<16x1xf32> to vector<16x32xf32>
    %303 = arith.mulf %298, %302 : vector<16x32xf32>
    %304 = vector.broadcast %283 : vector<1x32xf32> to vector<16x32xf32>
    %305 = arith.mulf %303, %304 : vector<16x32xf32>
    %306 = vector.broadcast %285 : vector<1x32xf32> to vector<16x32xf32>
    %307 = arith.addf %305, %306 : vector<16x32xf32>
    %308 = arith.truncf %307 : vector<16x32xf32> to vector<16x32xbf16>
    %c1_136 = arith.constant 1 : index
    %c0_137 = arith.constant 0 : index
    %c0_138 = arith.constant 0 : index
    %309 = vector.load %arg8[%c1_136, %c0_137, %c0_138] : memref<2x32x64xbf16, #tpu.memory_space<vmem>>, vector<1x32x64xbf16>
    %310 = vector.shape_cast %309 : vector<1x32x64xbf16> to vector<32x64xbf16>
    %cst_139 = arith.constant dense<0.000000e+00> : vector<16x64xf32>
    %311 = tpu.matmul %308, %310, %cst_139 {dimension_numbers = #tpu.dot_dimension_numbers<[1], [0], [0], [1], [0, 0, 1, 1], [], []>} : vector<16x32xbf16>, vector<32x64xbf16>, vector<16x64xf32> -> vector<16x64xf32>
    %c1_140 = arith.constant 1 : index
    %c0_141 = arith.constant 0 : index
    %c0_142 = arith.constant 0 : index
    %312 = vector.load %arg9[%c1_140, %c0_141, %c0_142] : memref<2x1x64xf32, #tpu.memory_space<vmem>>, vector<1x1x64xf32>
    %313 = vector.shape_cast %312 : vector<1x1x64xf32> to vector<1x64xf32>
    %314 = vector.broadcast %313 : vector<1x64xf32> to vector<16x64xf32>
    %315 = arith.addf %311, %314 : vector<16x64xf32>
    %316 = arith.mulf %315, %315 : vector<16x64xf32>
    %317 = arith.mulf %315, %316 : vector<16x64xf32>
    %cst_143 = arith.constant 4.471500e-02 : f32
    %318 = vector.broadcast %cst_143 : f32 to vector<16x64xf32>
    %319 = arith.mulf %318, %317 : vector<16x64xf32>
    %320 = arith.addf %315, %319 : vector<16x64xf32>
    %cst_144 = arith.constant 0.797884583 : f32
    %321 = vector.broadcast %cst_144 : f32 to vector<16x64xf32>
    %322 = arith.mulf %321, %320 : vector<16x64xf32>
    %323 = math.tanh %322 : vector<16x64xf32>
    %cst_145 = arith.constant 1.000000e+00 : f32
    %324 = vector.broadcast %cst_145 : f32 to vector<16x64xf32>
    %325 = arith.addf %324, %323 : vector<16x64xf32>
    %cst_146 = arith.constant 5.000000e-01 : f32
    %326 = vector.broadcast %cst_146 : f32 to vector<16x64xf32>
    %327 = arith.mulf %326, %325 : vector<16x64xf32>
    %328 = arith.mulf %315, %327 : vector<16x64xf32>
    %329 = arith.truncf %328 : vector<16x64xf32> to vector<16x64xbf16>
    %c1_147 = arith.constant 1 : index
    %c0_148 = arith.constant 0 : index
    %c0_149 = arith.constant 0 : index
    %330 = vector.load %arg10[%c1_147, %c0_148, %c0_149] : memref<2x64x32xbf16, #tpu.memory_space<vmem>>, vector<1x64x32xbf16>
    %331 = vector.shape_cast %330 : vector<1x64x32xbf16> to vector<64x32xbf16>
    %cst_150 = arith.constant dense<0.000000e+00> : vector<16x32xf32>
    %332 = tpu.matmul %329, %331, %cst_150 {dimension_numbers = #tpu.dot_dimension_numbers<[1], [0], [0], [1], [0, 0, 1, 1], [], []>} : vector<16x64xbf16>, vector<64x32xbf16>, vector<16x32xf32> -> vector<16x32xf32>
    %c1_151 = arith.constant 1 : index
    %c0_152 = arith.constant 0 : index
    %c0_153 = arith.constant 0 : index
    %333 = vector.load %arg11[%c1_151, %c0_152, %c0_153] : memref<2x1x32xf32, #tpu.memory_space<vmem>>, vector<1x1x32xf32>
    %334 = vector.shape_cast %333 : vector<1x1x32xf32> to vector<1x32xf32>
    %335 = vector.broadcast %334 : vector<1x32xf32> to vector<16x32xf32>
    %336 = arith.addf %332, %335 : vector<16x32xf32>
    %337 = arith.addf %281, %336 : vector<16x32xf32>
    %c0_154 = arith.constant 0 : index
    %c0_155 = arith.constant 0 : index
    %338 = vector.load %arg12[%c0_154, %c0_155] : memref<16x32xf32, #tpu.memory_space<vmem>>, vector<16x32xf32>
    tpu.vector_store %arg12[%c0_154, %c0_155], %337 {strides = array<i32>} : memref<16x32xf32, #tpu.memory_space<vmem>>, vector<16x32xf32>,
    return
  }
}

</mosaic_0001>

<llo_original>
// kernel: custom_paligemma_forward.1
$region0: #{custom_paligemma_forward.1}
  #allocation0 [shape = 'u32[]', space=smem, size = 0x4, offset = 0x4, fixed_abs, tag = 'smem constant byte address 0x4 - core index']
  #allocation1 [shape = 'u32[144,128]{1,0:T(1,128)}', space=vmem, size = 0x12000, scoped, tag = 'internal scratch']
  #allocation2 [shape = 'f32[16,32]{1,0:T(8,128)}', space=vmem, size = 0x2000, scoped, tag = 'scratch operand']
  %s0 = inlined_call_operand.vmem [shape: f32[16,32], index: 0, kind: input, shape index: {}]
  %s1 = inlined_call_operand.vmem [shape: f32[16,16], index: 1, kind: input, shape index: {}]
  %s2 = inlined_call_operand.vmem [shape: f32[2,1,32], index: 2, kind: input, shape index: {}]
  %s3 = inlined_call_operand.vmem [shape: f32[2,1,32], index: 3, kind: input, shape index: {}]
  %s4 = inlined_call_operand.vmem [shape: bf16[2,32,96], index: 4, kind: input, shape index: {}]
  %s5 = inlined_call_operand.vmem [shape: bf16[2,32,32], index: 5, kind: input, shape index: {}]
  %s6 = inlined_call_operand.vmem [shape: f32[2,1,32], index: 6, kind: input, shape index: {}]
  %s7 = inlined_call_operand.vmem [shape: f32[2,1,32], index: 7, kind: input, shape index: {}]
  %s8 = inlined_call_operand.vmem [shape: bf16[2,32,64], index: 8, kind: input, shape index: {}]
  %s9 = inlined_call_operand.vmem [shape: f32[2,1,64], index: 9, kind: input, shape index: {}]
  %s10 = inlined_call_operand.vmem [shape: bf16[2,64,32], index: 10, kind: input, shape index: {}]
  %s11 = inlined_call_operand.vmem [shape: f32[2,1,32], index: 11, kind: input, shape index: {}]
  %s12 = inlined_call_operand.hbm [shape: f32[16,32], index: 12, kind: output, shape index: {}]
  %s13 = sld [smem:[#allocation0]]
  $region58: #{custom_paligemma_forward.1} parent=0
    _
  %s15 = ssub.s32 1, %s13
  %s16 = scalar_select 0, %s15, %s13
  $region1: #{custom_paligemma_forward.1} parent=0
    #allocation3 [shape = 'u8[8192]{0}', space=vmem, size = 0x2000, scoped, tag = 'output window, operand 0, single buffered']
    #allocation4 [shape = 's32[1]{0}', space=sflag, size = 0x4, scoped, tag = 'scoped memory for custom_paligemma_forward.1']
    %17 = vsyncpa [#allocation4], 0
    // Predicated region
    $region2: #{custom_paligemma_forward.1} parent=1 // pred_check
      _
    $region3: #{custom_paligemma_forward.1} parent=1 // pred_check_branch
      %19 = sbr.rel (0) target = $region5
    $region4: #{custom_paligemma_forward.1} parent=1 // pred_region
      _
    $region5: #{custom_paligemma_forward.1} parent=1 // pred_fallthru
      _
    // Predicated region
    $region6: #{custom_paligemma_forward.1} parent=1 // pred_check
      _
    $region7: #{custom_paligemma_forward.1} parent=1 // pred_check_branch
      %21 = sbr.rel (0) target = $region9
    $region8: #{custom_paligemma_forward.1} parent=1 // pred_region
      _
    $region9: #{custom_paligemma_forward.1} parent=1 // pred_fallthru
      _
    // Predicated region
    $region10: #{custom_paligemma_forward.1} parent=1 // pred_check
      _
    $region11: #{custom_paligemma_forward.1} parent=1 // pred_check_branch
      %23 = sbr.rel (0) target = $region13
    $region12: #{custom_paligemma_forward.1} parent=1 // pred_region
      _
    $region13: #{custom_paligemma_forward.1} parent=1 // pred_fallthru
      _
    // Predicated region
    $region14: #{custom_paligemma_forward.1} parent=1 // pred_check
      _
    $region15: #{custom_paligemma_forward.1} parent=1 // pred_check_branch
      %25 = sbr.rel (0) target = $region17
    $region16: #{custom_paligemma_forward.1} parent=1 // pred_region
      _
    $region17: #{custom_paligemma_forward.1} parent=1 // pred_fallthru
      _
    // Predicated region
    $region18: #{custom_paligemma_forward.1} parent=1 // pred_check
      _
    $region19: #{custom_paligemma_forward.1} parent=1 // pred_check_branch
      %27 = sbr.rel (0) target = $region21
    $region20: #{custom_paligemma_forward.1} parent=1 // pred_region
      _
    $region21: #{custom_paligemma_forward.1} parent=1 // pred_fallthru
      _
    // Predicated region
    $region22: #{custom_paligemma_forward.1} parent=1 // pred_check
      _
    $region23: #{custom_paligemma_forward.1} parent=1 // pred_check_branch
      %29 = sbr.rel (0) target = $region25
    $region24: #{custom_paligemma_forward.1} parent=1 // pred_region
      _
    $region25: #{custom_paligemma_forward.1} parent=1 // pred_fallthru
      _
    // Predicated region
    $region26: #{custom_paligemma_forward.1} parent=1 // pred_check
      _
    $region27: #{custom_paligemma_forward.1} parent=1 // pred_check_branch
      %31 = sbr.rel (0) target = $region29
    $region28: #{custom_paligemma_forward.1} parent=1 // pred_region
      _
    $region29: #{custom_paligemma_forward.1} parent=1 // pred_fallthru
      _
    // Predicated region
    $region30: #{custom_paligemma_forward.1} parent=1 // pred_check
      _
    $region31: #{custom_paligemma_forward.1} parent=1 // pred_check_branch
      %33 = sbr.rel (0) target = $region33
    $region32: #{custom_paligemma_forward.1} parent=1 // pred_region
      _
    $region33: #{custom_paligemma_forward.1} parent=1 // pred_fallthru
      _
    // Predicated region
    $region34: #{custom_paligemma_forward.1} parent=1 // pred_check
      _
    $region35: #{custom_paligemma_forward.1} parent=1 // pred_check_branch
      %35 = sbr.rel (0) target = $region37
    $region36: #{custom_paligemma_forward.1} parent=1 // pred_region
      _
    $region37: #{custom_paligemma_forward.1} parent=1 // pred_fallthru
      _
    // Predicated region
    $region38: #{custom_paligemma_forward.1} parent=1 // pred_check
      _
    $region39: #{custom_paligemma_forward.1} parent=1 // pred_check_branch
      %37 = sbr.rel (0) target = $region41
    $region40: #{custom_paligemma_forward.1} parent=1 // pred_region
      _
    $region41: #{custom_paligemma_forward.1} parent=1 // pred_fallthru
      _
    // Predicated region
    $region42: #{custom_paligemma_forward.1} parent=1 // pred_check
      _
    $region43: #{custom_paligemma_forward.1} parent=1 // pred_check_branch
      %39 = sbr.rel (0) target = $region45
    $region44: #{custom_paligemma_forward.1} parent=1 // pred_region
      _
    $region45: #{custom_paligemma_forward.1} parent=1 // pred_fallthru
      _
    // Predicated region
    $region46: #{custom_paligemma_forward.1} parent=1 // pred_check
      _
    $region47: #{custom_paligemma_forward.1} parent=1 // pred_check_branch
      %41 = sbr.rel (0) target = $region49
    $region48: #{custom_paligemma_forward.1} parent=1 // pred_region
      _
    $region49: #{custom_paligemma_forward.1} parent=1 // pred_fallthru
      _
    %v43 = vld [vmem:[%s0] sm:$0xff]
    %v44 = vld [vmem:[%s0 + $0x8] sm:$0xff]
    %v45 = vld [vmem:[%s1] sm:$0xff]
    %v46 = vld [vmem:[%s1 + $0x8] sm:$0xff]
    %v47 = vld [vmem:[%s2] sm:$0x1]
    %v48 = vld [vmem:[%s3] sm:$0x1]
    %vm49 = vcmask 261120
    %v50 = vsel %vm49, %v43, 0.0
    %51 = vadd.xlane.f32.xlu0 %v50
    %v52 = vpop.xlane.xlu0 %51
    %v53 = vsel %vm49, %v44, 0.0
    %54 = vadd.xlane.f32.xlu0 %v53
    %v55 = vpop.xlane.xlu0 %54
    %v56 = vrcp.pop 32.0
    %v57 = vmul.f32 %v52, %v56
    %v58 = vmul.f32 %v55, %v56
    %v59 = vsub.f32 %v43, %v57
    %v60 = vsub.f32 %v44, %v58
    %v61 = vmul.f32 %v59, %v59
    %v62 = vmul.f32 %v60, %v60
    %v63 = vsel %vm49, %v61, 0.0
    %64 = vadd.xlane.f32.xlu0 %v63
    %v65 = vpop.xlane.xlu0 %64
    %v66 = vsel %vm49, %v62, 0.0
    %67 = vadd.xlane.f32.xlu0 %v66
    %v68 = vpop.xlane.xlu0 %67
    %v69 = vmul.f32 %v65, %v56
    %v70 = vmul.f32 %v68, %v56
    %v71 = vadd.f32 %v69, 1e-06
    %v72 = vadd.f32 %v70, 1e-06
    %v73 = vrsqrt.pop %v71
    %v74 = vrsqrt.pop %v72
    %v75 = vmul.f32 %v59, %v73
    %v76 = vmul.f32 %v60, %v74
    %v78 = vlaneseq
    %v79 = vshrl.u32 %v78, 7
    %v80 = vsub.s32 0, %v79
    %v81 = vrot.slane %v47, %v80
    %v83 = vmul.f32 %v75, %v81
    %v84 = vmul.f32 %v76, %v81
    %v86 = vlaneseq
    %v87 = vshrl.u32 %v86, 7
    %v88 = vsub.s32 0, %v87
    %v89 = vrot.slane %v48, %v88
    %v91 = vadd.f32 %v83, %v89
    %v92 = vadd.f32 %v84, %v89
    %v93 = vpack.c.bf16 %v92, %v91
    %v94 = vld [vmem:[%s4] sm:$0xf]
    %v95 = vld [vmem:[%s4 + $0x4] sm:$0xf]
    %v96 = vld [vmem:[%s4 + $0x8] sm:$0xf]
    %v97 = vld [vmem:[%s4 + $0xc] sm:$0xf]
    %v102 = vunpack.c.l.b16 %v94
    %v103 = vunpack.c.l.b16 %v95
    %v104 = vunpack.c.l.b16 %v96
    %v105 = vunpack.c.l.b16 %v97
    %v106 = vpack.c.b16 %v103, %v102
    %v107 = vpack.c.b16 %v105, %v104
    %v111 = vsel %vm49, %v93, 0
    %113 = vmatprep.subr.bf16.mxu0 0
    %114 = vmatpush1.bf16.msra.mxu0 %v106
    %115 = vmatprep.subr.bf16.mxu0 0
    %116 = vmatpush1.bf16.msra.mxu0 %v107
    %117 = vmatprep.subr.bf16.mxu0 0
    %118 = vmatpush1.bf16.msra.mxu0 0
    %119 = vmatprep.subr.bf16.mxu0 0
    %120 = vmatpush1.bf16.msra.mxu0 0
    %121 = vmatprep.subr.bf16.mxu0 0
    %122 = vmatpush1.bf16.msra.mxu0 0
    %123 = vmatprep.subr.bf16.mxu0 0
    %124 = vmatpush1.bf16.msra.mxu0 0
    %125 = vmatprep.subr.bf16.mxu0 0
    %126 = vmatpush1.bf16.msra.mxu0 0
    %127 = vmatprep.subr.bf16.mxu0 0
    %128 = vmatpush1.bf16.msra.mxu0 0
    %129 = vmatprep.subr.bf16.mxu0 0
    %130 = vmatpush1.bf16.msra.mxu0 0
    %131 = vmatprep.subr.bf16.mxu0 0
    %132 = vmatpush1.bf16.msra.mxu0 0
    %133 = vmatprep.subr.bf16.mxu0 0
    %134 = vmatpush1.bf16.msra.mxu0 0
    %135 = vmatprep.subr.bf16.mxu0 0
    %136 = vmatpush1.bf16.msra.mxu0 0
    %137 = vmatprep.subr.bf16.mxu0 0
    %138 = vmatpush1.bf16.msra.mxu0 0
    %139 = vmatprep.subr.bf16.mxu0 0
    %140 = vmatpush1.bf16.msra.mxu0 0
    %141 = vmatprep.subr.bf16.mxu0 0
    %142 = vmatpush1.bf16.msra.mxu0 0
    %143 = vmatprep.subr.bf16.mxu0 0
    %144 = vmatpush1.bf16.msra.mxu0 0
    %145 = vmatprep.mubr.bf16.mxu0 0
    %146 = vmatmul.mubr.bf16.gmra.mrb[0].mxu0 %v111
    %v147 = vpop.f32.mrb[0].mxu0
    %v148 = vadd.f32 0.0, %v147
    %v149 = vpop.f32.mrb[0].mxu0
    %v150 = vpop.f32.mrb[0].mxu0
    %v151 = vadd.f32 0.0, %v150
    %v152 = vpop.f32.mrb[0].mxu0
    %153 = vdwg.mxu0
    %156 = vrot.lane.b32.xlu0 %v148, 96
    %v157 = vpop.permute.xlu0 %156
    %158 = vrot.lane.b32.xlu0 %v151, 96
    %v159 = vpop.permute.xlu0 %158
    %vm160 = vcmask 64512
    %v161 = vsel %vm160, %v148, 0
    %v163 = vsel %vm160, %v151, 0
    %v165 = vsel %vm160, %v157, 0
    %v167 = vsel %vm160, %v159, 0
    %169 = vmatprep.subr.mxu0 0.0
    %170 = vmatpush1.xpose.msra.mxu0 %v165
    %171 = vmatprep.subr.mxu0 0.0
    %172 = vmatpush1.xpose.msra.mxu0 %v167
    %173 = vmatprep.subr.mxu0 0.0
    %174 = vmatpush1.xpose.msra.mxu0 0.0
    %175 = vmatprep.subr.mxu0 0.0
    %176 = vmatpush1.xpose.msra.mxu0 0.0
    %177 = vmatprep.subr.mxu0 0.0
    %178 = vmatpush1.xpose.msra.mxu0 0.0
    %179 = vmatprep.subr.mxu0 0.0
    %180 = vmatpush1.xpose.msra.mxu0 0.0
    %181 = vmatprep.subr.mxu0 0.0
    %182 = vmatpush1.xpose.msra.mxu0 0.0
    %183 = vmatprep.subr.mxu0 0.0
    %184 = vmatpush1.xpose.msra.mxu0 0.0
    %185 = vmatprep.subr.mxu0 0.0
    %186 = vmatpush1.xpose.msra.mxu0 0.0
    %187 = vmatprep.subr.mxu0 0.0
    %188 = vmatpush1.xpose.msra.mxu0 0.0
    %189 = vmatprep.subr.mxu0 0.0
    %190 = vmatpush1.xpose.msra.mxu0 0.0
    %191 = vmatprep.subr.mxu0 0.0
    %192 = vmatpush1.xpose.msra.mxu0 0.0
    %193 = vmatprep.subr.mxu0 0.0
    %194 = vmatpush1.xpose.msra.mxu0 0.0
    %195 = vmatprep.subr.mxu0 0.0
    %196 = vmatpush1.xpose.msra.mxu0 0.0
    %197 = vmatprep.subr.mxu0 0.0
    %198 = vmatpush1.xpose.msra.mxu0 0.0
    %199 = vmatprep.subr.mxu0 0.0
    %200 = vmatpush1.xpose.msra.mxu0 0.0
    %201 = vmatprep.subr.mxu0 0.0
    %202 = vmatpush1.xpose.msra.mxu0 0.0
    %203 = vmatprep.subr.mxu0 0.0
    %204 = vmatpush1.xpose.msra.mxu0 0.0
    %205 = vmatprep.subr.mxu0 0.0
    %206 = vmatpush1.xpose.msra.mxu0 0.0
    %207 = vmatprep.subr.mxu0 0.0
    %208 = vmatpush1.xpose.msra.mxu0 0.0
    %209 = vmatprep.subr.mxu0 0.0
    %210 = vmatpush1.xpose.msra.mxu0 0.0
    %211 = vmatprep.subr.mxu0 0.0
    %212 = vmatpush1.xpose.msra.mxu0 0.0
    %213 = vmatprep.subr.mxu0 0.0
    %214 = vmatpush1.xpose.msra.mxu0 0.0
    %215 = vmatprep.subr.mxu0 0.0
    %216 = vmatpush1.xpose.msra.mxu0 0.0
    %217 = vmatprep.subr.mxu0 0.0
    %218 = vmatpush1.xpose.msra.mxu0 0.0
    %219 = vmatprep.subr.mxu0 0.0
    %220 = vmatpush1.xpose.msra.mxu0 0.0
    %221 = vmatprep.subr.mxu0 0.0
    %222 = vmatpush1.xpose.msra.mxu0 0.0
    %223 = vmatprep.subr.mxu0 0.0
    %224 = vmatpush1.xpose.msra.mxu0 0.0
    %225 = vmatprep.subr.mxu0 0.0
    %226 = vmatpush1.xpose.msra.mxu0 0.0
    %227 = vmatprep.subr.mxu0 0.0
    %228 = vmatpush1.xpose.msra.mxu0 0.0
    %229 = vmatprep.subr.mxu0 0.0
    %230 = vmatpush1.xpose.msra.mxu0 0.0
    %231 = vmatprep.subr.mxu0 0.0
    %232 = vmatpush1.xpose.msra.mxu0 0.0
    %233 = vmatprep.mubr.f32.mxu0 0.0
    %234 = vmatmul.mubr.f32.gmra.mrb[0].mxu0 %v161
    %v235 = vpop.f32.mrb[0].mxu0
    %v236 = vadd.f32 0.0, %v235
    %v237 = vpop.f32.mrb[0].mxu0
    %238 = vmatprep.mubr.f32.mxu0 0.0
    %239 = vmatmul.mubr.f32.gmra.mrb[0].mxu0 %v163
    %v240 = vpop.f32.mrb[0].mxu0
    %v241 = vadd.f32 0.0, %v240
    %v242 = vpop.f32.mrb[0].mxu0
    %243 = vdwg.mxu0
    %v244 = vmul.f32 %v236, 0.35355338
    %v245 = vmul.f32 %v241, 0.35355338
    %v246 = vadd.f32 %v244, %v45
    %v247 = vadd.f32 %v245, %v46
    %vm248 = vcmask 130048
    %v249 = vsel %vm248, %v246, -inf
    %250 = vmax.xlane.f32.xlu0 %v249
    %v251 = vpop.xlane.xlu0 %250
    %v252 = vsel %vm248, %v247, -inf
    %253 = vmax.xlane.f32.xlu0 %v252
    %v254 = vpop.xlane.xlu0 %253
    %v255 = vsub.f32 %v246, %v251
    %v256 = vsub.f32 %v247, %v254
    %v257 = vmul.f32 %v255, 1.442695
    %v258 = vpow.pop %v257
    %v259 = vmul.f32 %v256, 1.442695
    %v260 = vpow.pop %v259
    %v261 = vsel %vm248, %v258, 0.0
    %262 = vadd.xlane.f32.xlu0 %v261
    %v263 = vpop.xlane.xlu0 %262
    %v264 = vsel %vm248, %v260, 0.0
    %265 = vadd.xlane.f32.xlu0 %v264
    %v266 = vpop.xlane.xlu0 %265
    %v267 = vrcp.pop %v263
    %v268 = vrcp.pop %v266
    %v269 = vmul.f32 %v258, %v267
    %v270 = vmul.f32 %v260, %v268
    %271 = vrot.lane.b32.xlu0 %v148, 64
    %v272 = vpop.permute.xlu0 %271
    %273 = vrot.lane.b32.xlu0 %v151, 64
    %v274 = vpop.permute.xlu0 %273
    %v278 = vsel %vm248, %v269, 0
    %v281 = vsel %vm248, %v270, 0
    %283 = vmatprep.subr.mxu0 0.0
    %284 = vmatpush1.msra.mxu0 %v272
    %285 = vmatprep.subr.mxu0 0.0
    %286 = vmatpush1.msra.mxu0 %v274
    %287 = vmatprep.subr.mxu0 0.0
    %288 = vmatpush1.msra.mxu0 0.0
    %289 = vmatprep.subr.mxu0 0.0
    %290 = vmatpush1.msra.mxu0 0.0
    %291 = vmatprep.subr.mxu0 0.0
    %292 = vmatpush1.msra.mxu0 0.0
    %293 = vmatprep.subr.mxu0 0.0
    %294 = vmatpush1.msra.mxu0 0.0
    %295 = vmatprep.subr.mxu0 0.0
    %296 = vmatpush1.msra.mxu0 0.0
    %297 = vmatprep.subr.mxu0 0.0
    %298 = vmatpush1.msra.mxu0 0.0
    %299 = vmatprep.subr.mxu0 0.0
    %300 = vmatpush1.msra.mxu0 0.0
    %301 = vmatprep.subr.mxu0 0.0
    %302 = vmatpush1.msra.mxu0 0.0
    %303 = vmatprep.subr.mxu0 0.0
    %304 = vmatpush1.msra.mxu0 0.0
    %305 = vmatprep.subr.mxu0 0.0
    %306 = vmatpush1.msra.mxu0 0.0
    %307 = vmatprep.subr.mxu0 0.0
    %308 = vmatpush1.msra.mxu0 0.0
    %309 = vmatprep.subr.mxu0 0.0
    %310 = vmatpush1.msra.mxu0 0.0
    %311 = vmatprep.subr.mxu0 0.0
    %312 = vmatpush1.msra.mxu0 0.0
    %313 = vmatprep.subr.mxu0 0.0
    %314 = vmatpush1.msra.mxu0 0.0
    %315 = vmatprep.subr.mxu0 0.0
    %316 = vmatpush1.msra.mxu0 0.0
    %317 = vmatprep.subr.mxu0 0.0
    %318 = vmatpush1.msra.mxu0 0.0
    %319 = vmatprep.subr.mxu0 0.0
    %320 = vmatpush1.msra.mxu0 0.0
    %321 = vmatprep.subr.mxu0 0.0
    %322 = vmatpush1.msra.mxu0 0.0
    %323 = vmatprep.subr.mxu0 0.0
    %324 = vmatpush1.msra.mxu0 0.0
    %325 = vmatprep.subr.mxu0 0.0
    %326 = vmatpush1.msra.mxu0 0.0
    %327 = vmatprep.subr.mxu0 0.0
    %328 = vmatpush1.msra.mxu0 0.0
    %329 = vmatprep.subr.mxu0 0.0
    %330 = vmatpush1.msra.mxu0 0.0
    %331 = vmatprep.subr.mxu0 0.0
    %332 = vmatpush1.msra.mxu0 0.0
    %333 = vmatprep.subr.mxu0 0.0
    %334 = vmatpush1.msra.mxu0 0.0
    %335 = vmatprep.subr.mxu0 0.0
    %336 = vmatpush1.msra.mxu0 0.0
    %337 = vmatprep.subr.mxu0 0.0
    %338 = vmatpush1.msra.mxu0 0.0
    %339 = vmatprep.subr.mxu0 0.0
    %340 = vmatpush1.msra.mxu0 0.0
    %341 = vmatprep.subr.mxu0 0.0
    %342 = vmatpush1.msra.mxu0 0.0
    %343 = vmatprep.subr.mxu0 0.0
    %344 = vmatpush1.msra.mxu0 0.0
    %345 = vmatprep.subr.mxu0 0.0
    %346 = vmatpush1.msra.mxu0 0.0
    %347 = vmatprep.mubr.f32.mxu0 0.0
    %348 = vmatmul.mubr.f32.gmra.mrb[0].mxu0 %v278
    %v349 = vpop.f32.mrb[0].mxu0
    %v350 = vadd.f32 0.0, %v349
    %v351 = vpop.f32.mrb[0].mxu0
    %352 = vmatprep.mubr.f32.mxu0 0.0
    %353 = vmatmul.mubr.f32.gmra.mrb[0].mxu0 %v281
    %v354 = vpop.f32.mrb[0].mxu0
    %v355 = vadd.f32 0.0, %v354
    %v356 = vpop.f32.mrb[0].mxu0
    %357 = vdwg.mxu0
    %358 = vst.msk [vmem:[#allocation2] sm:$0xff] %vm160, %v350
    %359 = vst.msk [vmem:[#allocation2 + $0x8] sm:$0xff] %vm160, %v355
    %360 = vrot.lane.b32.xlu0 %v148, 120
    %v361 = vpop.permute.xlu0 %360
    %362 = vrot.lane.b32.xlu0 %v151, 120
    %v363 = vpop.permute.xlu0 %362
    %364 = vrot.lane.b32.xlu0 %v148, 88
    %v365 = vpop.permute.xlu0 %364
    %366 = vrot.lane.b32.xlu0 %v151, 88
    %v367 = vpop.permute.xlu0 %366
    %v368 = vsel %vm160, %v361, 0
    %v370 = vsel %vm160, %v363, 0
    %v372 = vsel %vm160, %v365, 0
    %v374 = vsel %vm160, %v367, 0
    %376 = vmatprep.subr.mxu0 0.0
    %377 = vmatpush1.xpose.msra.mxu0 %v372
    %378 = vmatprep.subr.mxu0 0.0
    %379 = vmatpush1.xpose.msra.mxu0 %v374
    %380 = vmatprep.subr.mxu0 0.0
    %381 = vmatpush1.xpose.msra.mxu0 0.0
    %382 = vmatprep.subr.mxu0 0.0
    %383 = vmatpush1.xpose.msra.mxu0 0.0
    %384 = vmatprep.subr.mxu0 0.0
    %385 = vmatpush1.xpose.msra.mxu0 0.0
    %386 = vmatprep.subr.mxu0 0.0
    %387 = vmatpush1.xpose.msra.mxu0 0.0
    %388 = vmatprep.subr.mxu0 0.0
    %389 = vmatpush1.xpose.msra.mxu0 0.0
    %390 = vmatprep.subr.mxu0 0.0
    %391 = vmatpush1.xpose.msra.mxu0 0.0
    %392 = vmatprep.subr.mxu0 0.0
    %393 = vmatpush1.xpose.msra.mxu0 0.0
    %394 = vmatprep.subr.mxu0 0.0
    %395 = vmatpush1.xpose.msra.mxu0 0.0
    %396 = vmatprep.subr.mxu0 0.0
    %397 = vmatpush1.xpose.msra.mxu0 0.0
    %398 = vmatprep.subr.mxu0 0.0
    %399 = vmatpush1.xpose.msra.mxu0 0.0
    %400 = vmatprep.subr.mxu0 0.0
    %401 = vmatpush1.xpose.msra.mxu0 0.0
    %402 = vmatprep.subr.mxu0 0.0
    %403 = vmatpush1.xpose.msra.mxu0 0.0
    %404 = vmatprep.subr.mxu0 0.0
    %405 = vmatpush1.xpose.msra.mxu0 0.0
    %406 = vmatprep.subr.mxu0 0.0
    %407 = vmatpush1.xpose.msra.mxu0 0.0
    %408 = vmatprep.subr.mxu0 0.0
    %409 = vmatpush1.xpose.msra.mxu0 0.0
    %410 = vmatprep.subr.mxu0 0.0
    %411 = vmatpush1.xpose.msra.mxu0 0.0
    %412 = vmatprep.subr.mxu0 0.0
    %413 = vmatpush1.xpose.msra.mxu0 0.0
    %414 = vmatprep.subr.mxu0 0.0
    %415 = vmatpush1.xpose.msra.mxu0 0.0
    %416 = vmatprep.subr.mxu0 0.0
    %417 = vmatpush1.xpose.msra.mxu0 0.0
    %418 = vmatprep.subr.mxu0 0.0
    %419 = vmatpush1.xpose.msra.mxu0 0.0
    %420 = vmatprep.subr.mxu0 0.0
    %421 = vmatpush1.xpose.msra.mxu0 0.0
    %422 = vmatprep.subr.mxu0 0.0
    %423 = vmatpush1.xpose.msra.mxu0 0.0
    %424 = vmatprep.subr.mxu0 0.0
    %425 = vmatpush1.xpose.msra.mxu0 0.0
    %426 = vmatprep.subr.mxu0 0.0
    %427 = vmatpush1.xpose.msra.mxu0 0.0
    %428 = vmatprep.subr.mxu0 0.0
    %429 = vmatpush1.xpose.msra.mxu0 0.0
    %430 = vmatprep.subr.mxu0 0.0
    %431 = vmatpush1.xpose.msra.mxu0 0.0
    %432 = vmatprep.subr.mxu0 0.0
    %433 = vmatpush1.xpose.msra.mxu0 0.0
    %434 = vmatprep.subr.mxu0 0.0
    %435 = vmatpush1.xpose.msra.mxu0 0.0
    %436 = vmatprep.subr.mxu0 0.0
    %437 = vmatpush1.xpose.msra.mxu0 0.0
    %438 = vmatprep.subr.mxu0 0.0
    %439 = vmatpush1.xpose.msra.mxu0 0.0
    %440 = vmatprep.mubr.f32.mxu0 0.0
    %441 = vmatmul.mubr.f32.gmra.mrb[0].mxu0 %v368
    %v442 = vpop.f32.mrb[0].mxu0
    %v443 = vadd.f32 0.0, %v442
    %v444 = vpop.f32.mrb[0].mxu0
    %445 = vmatprep.mubr.f32.mxu0 0.0
    %446 = vmatmul.mubr.f32.gmra.mrb[0].mxu0 %v370
    %v447 = vpop.f32.mrb[0].mxu0
    %v448 = vadd.f32 0.0, %v447
    %v449 = vpop.f32.mrb[0].mxu0
    %450 = vdwg.mxu0
    %v451 = vmul.f32 %v443, 0.35355338
    %v452 = vmul.f32 %v448, 0.35355338
    %v453 = vadd.f32 %v451, %v45
    %v454 = vadd.f32 %v452, %v46
    %v455 = vsel %vm248, %v453, -inf
    %456 = vmax.xlane.f32.xlu0 %v455
    %v457 = vpop.xlane.xlu0 %456
    %v458 = vsel %vm248, %v454, -inf
    %459 = vmax.xlane.f32.xlu0 %v458
    %v460 = vpop.xlane.xlu0 %459
    %v461 = vsub.f32 %v453, %v457
    %v462 = vsub.f32 %v454, %v460
    %v463 = vmul.f32 %v461, 1.442695
    %v464 = vpow.pop %v463
    %v465 = vmul.f32 %v462, 1.442695
    %v466 = vpow.pop %v465
    %v467 = vsel %vm248, %v464, 0.0
    %468 = vadd.xlane.f32.xlu0 %v467
    %v469 = vpop.xlane.xlu0 %468
    %v470 = vsel %vm248, %v466, 0.0
    %471 = vadd.xlane.f32.xlu0 %v470
    %v472 = vpop.xlane.xlu0 %471
    %v473 = vrcp.pop %v469
    %v474 = vrcp.pop %v472
    %v475 = vmul.f32 %v464, %v473
    %v476 = vmul.f32 %v466, %v474
    %477 = vrot.lane.b32.xlu0 %v148, 56
    %v478 = vpop.permute.xlu0 %477
    %479 = vrot.lane.b32.xlu0 %v151, 56
    %v480 = vpop.permute.xlu0 %479
    %v484 = vsel %vm248, %v475, 0
    %v487 = vsel %vm248, %v476, 0
    %489 = vmatprep.subr.mxu0 0.0
    %490 = vmatpush1.msra.mxu0 %v478
    %491 = vmatprep.subr.mxu0 0.0
    %492 = vmatpush1.msra.mxu0 %v480
    %493 = vmatprep.subr.mxu0 0.0
    %494 = vmatpush1.msra.mxu0 0.0
    %495 = vmatprep.subr.mxu0 0.0
    %496 = vmatpush1.msra.mxu0 0.0
    %497 = vmatprep.subr.mxu0 0.0
    %498 = vmatpush1.msra.mxu0 0.0
    %499 = vmatprep.subr.mxu0 0.0
    %500 = vmatpush1.msra.mxu0 0.0
    %501 = vmatprep.subr.mxu0 0.0
    %502 = vmatpush1.msra.mxu0 0.0
    %503 = vmatprep.subr.mxu0 0.0
    %504 = vmatpush1.msra.mxu0 0.0
    %505 = vmatprep.subr.mxu0 0.0
    %506 = vmatpush1.msra.mxu0 0.0
    %507 = vmatprep.subr.mxu0 0.0
    %508 = vmatpush1.msra.mxu0 0.0
    %509 = vmatprep.subr.mxu0 0.0
    %510 = vmatpush1.msra.mxu0 0.0
    %511 = vmatprep.subr.mxu0 0.0
    %512 = vmatpush1.msra.mxu0 0.0
    %513 = vmatprep.subr.mxu0 0.0
    %514 = vmatpush1.msra.mxu0 0.0
    %515 = vmatprep.subr.mxu0 0.0
    %516 = vmatpush1.msra.mxu0 0.0
    %517 = vmatprep.subr.mxu0 0.0
    %518 = vmatpush1.msra.mxu0 0.0
    %519 = vmatprep.subr.mxu0 0.0
    %520 = vmatpush1.msra.mxu0 0.0
    %521 = vmatprep.subr.mxu0 0.0
    %522 = vmatpush1.msra.mxu0 0.0
    %523 = vmatprep.subr.mxu0 0.0
    %524 = vmatpush1.msra.mxu0 0.0
    %525 = vmatprep.subr.mxu0 0.0
    %526 = vmatpush1.msra.mxu0 0.0
    %527 = vmatprep.subr.mxu0 0.0
    %528 = vmatpush1.msra.mxu0 0.0
    %529 = vmatprep.subr.mxu0 0.0
    %530 = vmatpush1.msra.mxu0 0.0
    %531 = vmatprep.subr.mxu0 0.0
    %532 = vmatpush1.msra.mxu0 0.0
    %533 = vmatprep.subr.mxu0 0.0
    %534 = vmatpush1.msra.mxu0 0.0
    %535 = vmatprep.subr.mxu0 0.0
    %536 = vmatpush1.msra.mxu0 0.0
    %537 = vmatprep.subr.mxu0 0.0
    %538 = vmatpush1.msra.mxu0 0.0
    %539 = vmatprep.subr.mxu0 0.0
    %540 = vmatpush1.msra.mxu0 0.0
    %541 = vmatprep.subr.mxu0 0.0
    %542 = vmatpush1.msra.mxu0 0.0
    %543 = vmatprep.subr.mxu0 0.0
    %544 = vmatpush1.msra.mxu0 0.0
    %545 = vmatprep.subr.mxu0 0.0
    %546 = vmatpush1.msra.mxu0 0.0
    %547 = vmatprep.subr.mxu0 0.0
    %548 = vmatpush1.msra.mxu0 0.0
    %549 = vmatprep.subr.mxu0 0.0
    %550 = vmatpush1.msra.mxu0 0.0
    %551 = vmatprep.subr.mxu0 0.0
    %552 = vmatpush1.msra.mxu0 0.0
    %553 = vmatprep.mubr.f32.mxu0 0.0
    %554 = vmatmul.mubr.f32.gmra.mrb[0].mxu0 %v484
    %v555 = vpop.f32.mrb[0].mxu0
    %v556 = vadd.f32 0.0, %v555
    %v557 = vpop.f32.mrb[0].mxu0
    %558 = vmatprep.mubr.f32.mxu0 0.0
    %559 = vmatmul.mubr.f32.gmra.mrb[0].mxu0 %v487
    %v560 = vpop.f32.mrb[0].mxu0
    %v561 = vadd.f32 0.0, %v560
    %v562 = vpop.f32.mrb[0].mxu0
    %563 = vdwg.mxu0
    %566 = vrot.lane.b32.xlu0 %v556, 8
    %v567 = vpop.permute.xlu0 %566
    %568 = vrot.lane.b32.xlu0 %v561, 8
    %v569 = vpop.permute.xlu0 %568
    %vm572 = vcmask 130112
    %573 = vst.msk [vmem:[#allocation2] sm:$0xff] %vm572, %v567
    %574 = vst.msk [vmem:[#allocation2 + $0x8] sm:$0xff] %vm572, %v569
    %575 = vrot.lane.b32.xlu0 %v148, 112
    %v576 = vpop.permute.xlu0 %575
    %577 = vrot.lane.b32.xlu0 %v151, 112
    %v578 = vpop.permute.xlu0 %577
    %579 = vrot.lane.b32.xlu0 %v148, 80
    %v580 = vpop.permute.xlu0 %579
    %581 = vrot.lane.b32.xlu0 %v151, 80
    %v582 = vpop.permute.xlu0 %581
    %v583 = vsel %vm160, %v576, 0
    %v585 = vsel %vm160, %v578, 0
    %v587 = vsel %vm160, %v580, 0
    %v589 = vsel %vm160, %v582, 0
    %591 = vmatprep.subr.mxu0 0.0
    %592 = vmatpush1.xpose.msra.mxu0 %v587
    %593 = vmatprep.subr.mxu0 0.0
    %594 = vmatpush1.xpose.msra.mxu0 %v589
    %595 = vmatprep.subr.mxu0 0.0
    %596 = vmatpush1.xpose.msra.mxu0 0.0
    %597 = vmatprep.subr.mxu0 0.0
    %598 = vmatpush1.xpose.msra.mxu0 0.0
    %599 = vmatprep.subr.mxu0 0.0
    %600 = vmatpush1.xpose.msra.mxu0 0.0
    %601 = vmatprep.subr.mxu0 0.0
    %602 = vmatpush1.xpose.msra.mxu0 0.0
    %603 = vmatprep.subr.mxu0 0.0
    %604 = vmatpush1.xpose.msra.mxu0 0.0
    %605 = vmatprep.subr.mxu0 0.0
    %606 = vmatpush1.xpose.msra.mxu0 0.0
    %607 = vmatprep.subr.mxu0 0.0
    %608 = vmatpush1.xpose.msra.mxu0 0.0
    %609 = vmatprep.subr.mxu0 0.0
    %610 = vmatpush1.xpose.msra.mxu0 0.0
    %611 = vmatprep.subr.mxu0 0.0
    %612 = vmatpush1.xpose.msra.mxu0 0.0
    %613 = vmatprep.subr.mxu0 0.0
    %614 = vmatpush1.xpose.msra.mxu0 0.0
    %615 = vmatprep.subr.mxu0 0.0
    %616 = vmatpush1.xpose.msra.mxu0 0.0
    %617 = vmatprep.subr.mxu0 0.0
    %618 = vmatpush1.xpose.msra.mxu0 0.0
    %619 = vmatprep.subr.mxu0 0.0
    %620 = vmatpush1.xpose.msra.mxu0 0.0
    %621 = vmatprep.subr.mxu0 0.0
    %622 = vmatpush1.xpose.msra.mxu0 0.0
    %623 = vmatprep.subr.mxu0 0.0
    %624 = vmatpush1.xpose.msra.mxu0 0.0
    %625 = vmatprep.subr.mxu0 0.0
    %626 = vmatpush1.xpose.msra.mxu0 0.0
    %627 = vmatprep.subr.mxu0 0.0
    %628 = vmatpush1.xpose.msra.mxu0 0.0
    %629 = vmatprep.subr.mxu0 0.0
    %630 = vmatpush1.xpose.msra.mxu0 0.0
    %631 = vmatprep.subr.mxu0 0.0
    %632 = vmatpush1.xpose.msra.mxu0 0.0
    %633 = vmatprep.subr.mxu0 0.0
    %634 = vmatpush1.xpose.msra.mxu0 0.0
    %635 = vmatprep.subr.mxu0 0.0
    %636 = vmatpush1.xpose.msra.mxu0 0.0
    %637 = vmatprep.subr.mxu0 0.0
    %638 = vmatpush1.xpose.msra.mxu0 0.0
    %639 = vmatprep.subr.mxu0 0.0
    %640 = vmatpush1.xpose.msra.mxu0 0.0
    %641 = vmatprep.subr.mxu0 0.0
    %642 = vmatpush1.xpose.msra.mxu0 0.0
    %643 = vmatprep.subr.mxu0 0.0
    %644 = vmatpush1.xpose.msra.mxu0 0.0
    %645 = vmatprep.subr.mxu0 0.0
    %646 = vmatpush1.xpose.msra.mxu0 0.0
    %647 = vmatprep.subr.mxu0 0.0
    %648 = vmatpush1.xpose.msra.mxu0 0.0
    %649 = vmatprep.subr.mxu0 0.0
    %650 = vmatpush1.xpose.msra.mxu0 0.0
    %651 = vmatprep.subr.mxu0 0.0
    %652 = vmatpush1.xpose.msra.mxu0 0.0
    %653 = vmatprep.subr.mxu0 0.0
    %654 = vmatpush1.xpose.msra.mxu0 0.0
    %655 = vmatprep.mubr.f32.mxu0 0.0
    %656 = vmatmul.mubr.f32.gmra.mrb[0].mxu0 %v583
    %v657 = vpop.f32.mrb[0].mxu0
    %v658 = vadd.f32 0.0, %v657
    %v659 = vpop.f32.mrb[0].mxu0
    %660 = vmatprep.mubr.f32.mxu0 0.0
    %661 = vmatmul.mubr.f32.gmra.mrb[0].mxu0 %v585
    %v662 = vpop.f32.mrb[0].mxu0
    %v663 = vadd.f32 0.0, %v662
    %v664 = vpop.f32.mrb[0].mxu0
    %665 = vdwg.mxu0
    %v666 = vmul.f32 %v658, 0.35355338
    %v667 = vmul.f32 %v663, 0.35355338
    %v668 = vadd.f32 %v666, %v45
    %v669 = vadd.f32 %v667, %v46
    %v670 = vsel %vm248, %v668, -inf
    %671 = vmax.xlane.f32.xlu0 %v670
    %v672 = vpop.xlane.xlu0 %671
    %v673 = vsel %vm248, %v669, -inf
    %674 = vmax.xlane.f32.xlu0 %v673
    %v675 = vpop.xlane.xlu0 %674
    %v676 = vsub.f32 %v668, %v672
    %v677 = vsub.f32 %v669, %v675
    %v678 = vmul.f32 %v676, 1.442695
    %v679 = vpow.pop %v678
    %v680 = vmul.f32 %v677, 1.442695
    %v681 = vpow.pop %v680
    %v682 = vsel %vm248, %v679, 0.0
    %683 = vadd.xlane.f32.xlu0 %v682
    %v684 = vpop.xlane.xlu0 %683
    %v685 = vsel %vm248, %v681, 0.0
    %686 = vadd.xlane.f32.xlu0 %v685
    %v687 = vpop.xlane.xlu0 %686
    %v688 = vrcp.pop %v684
    %v689 = vrcp.pop %v687
    %v690 = vmul.f32 %v679, %v688
    %v691 = vmul.f32 %v681, %v689
    %692 = vrot.lane.b32.xlu0 %v148, 48
    %v693 = vpop.permute.xlu0 %692
    %694 = vrot.lane.b32.xlu0 %v151, 48
    %v695 = vpop.permute.xlu0 %694
    %v699 = vsel %vm248, %v690, 0
    %v702 = vsel %vm248, %v691, 0
    %704 = vmatprep.subr.mxu0 0.0
    %705 = vmatpush1.msra.mxu0 %v693
    %706 = vmatprep.subr.mxu0 0.0
    %707 = vmatpush1.msra.mxu0 %v695
    %708 = vmatprep.subr.mxu0 0.0
    %709 = vmatpush1.msra.mxu0 0.0
    %710 = vmatprep.subr.mxu0 0.0
    %711 = vmatpush1.msra.mxu0 0.0
    %712 = vmatprep.subr.mxu0 0.0
    %713 = vmatpush1.msra.mxu0 0.0
    %714 = vmatprep.subr.mxu0 0.0
    %715 = vmatpush1.msra.mxu0 0.0
    %716 = vmatprep.subr.mxu0 0.0
    %717 = vmatpush1.msra.mxu0 0.0
    %718 = vmatprep.subr.mxu0 0.0
    %719 = vmatpush1.msra.mxu0 0.0
    %720 = vmatprep.subr.mxu0 0.0
    %721 = vmatpush1.msra.mxu0 0.0
    %722 = vmatprep.subr.mxu0 0.0
    %723 = vmatpush1.msra.mxu0 0.0
    %724 = vmatprep.subr.mxu0 0.0
    %725 = vmatpush1.msra.mxu0 0.0
    %726 = vmatprep.subr.mxu0 0.0
    %727 = vmatpush1.msra.mxu0 0.0
    %728 = vmatprep.subr.mxu0 0.0
    %729 = vmatpush1.msra.mxu0 0.0
    %730 = vmatprep.subr.mxu0 0.0
    %731 = vmatpush1.msra.mxu0 0.0
    %732 = vmatprep.subr.mxu0 0.0
    %733 = vmatpush1.msra.mxu0 0.0
    %734 = vmatprep.subr.mxu0 0.0
    %735 = vmatpush1.msra.mxu0 0.0
    %736 = vmatprep.subr.mxu0 0.0
    %737 = vmatpush1.msra.mxu0 0.0
    %738 = vmatprep.subr.mxu0 0.0
    %739 = vmatpush1.msra.mxu0 0.0
    %740 = vmatprep.subr.mxu0 0.0
    %741 = vmatpush1.msra.mxu0 0.0
    %742 = vmatprep.subr.mxu0 0.0
    %743 = vmatpush1.msra.mxu0 0.0
    %744 = vmatprep.subr.mxu0 0.0
    %745 = vmatpush1.msra.mxu0 0.0
    %746 = vmatprep.subr.mxu0 0.0
    %747 = vmatpush1.msra.mxu0 0.0
    %748 = vmatprep.subr.mxu0 0.0
    %749 = vmatpush1.msra.mxu0 0.0
    %750 = vmatprep.subr.mxu0 0.0
    %751 = vmatpush1.msra.mxu0 0.0
    %752 = vmatprep.subr.mxu0 0.0
    %753 = vmatpush1.msra.mxu0 0.0
    %754 = vmatprep.subr.mxu0 0.0
    %755 = vmatpush1.msra.mxu0 0.0
    %756 = vmatprep.subr.mxu0 0.0
    %757 = vmatpush1.msra.mxu0 0.0
    %758 = vmatprep.subr.mxu0 0.0
    %759 = vmatpush1.msra.mxu0 0.0
    %760 = vmatprep.subr.mxu0 0.0
    %761 = vmatpush1.msra.mxu0 0.0
    %762 = vmatprep.subr.mxu0 0.0
    %763 = vmatpush1.msra.mxu0 0.0
    %764 = vmatprep.subr.mxu0 0.0
    %765 = vmatpush1.msra.mxu0 0.0
    %766 = vmatprep.subr.mxu0 0.0
    %767 = vmatpush1.msra.mxu0 0.0
    %768 = vmatprep.mubr.f32.mxu0 0.0
    %769 = vmatmul.mubr.f32.gmra.mrb[0].mxu0 %v699
    %v770 = vpop.f32.mrb[0].mxu0
    %v771 = vadd.f32 0.0, %v770
    %v772 = vpop.f32.mrb[0].mxu0
    %773 = vmatprep.mubr.f32.mxu0 0.0
    %774 = vmatmul.mubr.f32.gmra.mrb[0].mxu0 %v702
    %v775 = vpop.f32.mrb[0].mxu0
    %v776 = vadd.f32 0.0, %v775
    %v777 = vpop.f32.mrb[0].mxu0
    %778 = vdwg.mxu0
    %781 = vrot.lane.b32.xlu0 %v771, 16
    %v782 = vpop.permute.xlu0 %781
    %783 = vrot.lane.b32.xlu0 %v776, 16
    %v784 = vpop.permute.xlu0 %783
    %vm787 = vcmask 195712
    %788 = vst.msk [vmem:[#allocation2] sm:$0xff] %vm787, %v782
    %789 = vst.msk [vmem:[#allocation2 + $0x8] sm:$0xff] %vm787, %v784
    %790 = vrot.lane.b32.xlu0 %v148, 104
    %v791 = vpop.permute.xlu0 %790
    %792 = vrot.lane.b32.xlu0 %v151, 104
    %v793 = vpop.permute.xlu0 %792
    %794 = vrot.lane.b32.xlu0 %v148, 72
    %v795 = vpop.permute.xlu0 %794
    %796 = vrot.lane.b32.xlu0 %v151, 72
    %v797 = vpop.permute.xlu0 %796
    %v798 = vsel %vm160, %v791, 0
    %v800 = vsel %vm160, %v793, 0
    %v802 = vsel %vm160, %v795, 0
    %v804 = vsel %vm160, %v797, 0
    %806 = vmatprep.subr.mxu0 0.0
    %807 = vmatpush1.xpose.msra.mxu0 %v802
    %808 = vmatprep.subr.mxu0 0.0
    %809 = vmatpush1.xpose.msra.mxu0 %v804
    %810 = vmatprep.subr.mxu0 0.0
    %811 = vmatpush1.xpose.msra.mxu0 0.0
    %812 = vmatprep.subr.mxu0 0.0
    %813 = vmatpush1.xpose.msra.mxu0 0.0
    %814 = vmatprep.subr.mxu0 0.0
    %815 = vmatpush1.xpose.msra.mxu0 0.0
    %816 = vmatprep.subr.mxu0 0.0
    %817 = vmatpush1.xpose.msra.mxu0 0.0
    %818 = vmatprep.subr.mxu0 0.0
    %819 = vmatpush1.xpose.msra.mxu0 0.0
    %820 = vmatprep.subr.mxu0 0.0
    %821 = vmatpush1.xpose.msra.mxu0 0.0
    %822 = vmatprep.subr.mxu0 0.0
    %823 = vmatpush1.xpose.msra.mxu0 0.0
    %824 = vmatprep.subr.mxu0 0.0
    %825 = vmatpush1.xpose.msra.mxu0 0.0
    %826 = vmatprep.subr.mxu0 0.0
    %827 = vmatpush1.xpose.msra.mxu0 0.0
    %828 = vmatprep.subr.mxu0 0.0
    %829 = vmatpush1.xpose.msra.mxu0 0.0
    %830 = vmatprep.subr.mxu0 0.0
    %831 = vmatpush1.xpose.msra.mxu0 0.0
    %832 = vmatprep.subr.mxu0 0.0
    %833 = vmatpush1.xpose.msra.mxu0 0.0
    %834 = vmatprep.subr.mxu0 0.0
    %835 = vmatpush1.xpose.msra.mxu0 0.0
    %836 = vmatprep.subr.mxu0 0.0
    %837 = vmatpush1.xpose.msra.mxu0 0.0
    %838 = vmatprep.subr.mxu0 0.0
    %839 = vmatpush1.xpose.msra.mxu0 0.0
    %840 = vmatprep.subr.mxu0 0.0
    %841 = vmatpush1.xpose.msra.mxu0 0.0
    %842 = vmatprep.subr.mxu0 0.0
    %843 = vmatpush1.xpose.msra.mxu0 0.0
    %844 = vmatprep.subr.mxu0 0.0
    %845 = vmatpush1.xpose.msra.mxu0 0.0
    %846 = vmatprep.subr.mxu0 0.0
    %847 = vmatpush1.xpose.msra.mxu0 0.0
    %848 = vmatprep.subr.mxu0 0.0
    %849 = vmatpush1.xpose.msra.mxu0 0.0
    %850 = vmatprep.subr.mxu0 0.0
    %851 = vmatpush1.xpose.msra.mxu0 0.0
    %852 = vmatprep.subr.mxu0 0.0
    %853 = vmatpush1.xpose.msra.mxu0 0.0
    %854 = vmatprep.subr.mxu0 0.0
    %855 = vmatpush1.xpose.msra.mxu0 0.0
    %856 = vmatprep.subr.mxu0 0.0
    %857 = vmatpush1.xpose.msra.mxu0 0.0
    %858 = vmatprep.subr.mxu0 0.0
    %859 = vmatpush1.xpose.msra.mxu0 0.0
    %860 = vmatprep.subr.mxu0 0.0
    %861 = vmatpush1.xpose.msra.mxu0 0.0
    %862 = vmatprep.subr.mxu0 0.0
    %863 = vmatpush1.xpose.msra.mxu0 0.0
    %864 = vmatprep.subr.mxu0 0.0
    %865 = vmatpush1.xpose.msra.mxu0 0.0
    %866 = vmatprep.subr.mxu0 0.0
    %867 = vmatpush1.xpose.msra.mxu0 0.0
    %868 = vmatprep.subr.mxu0 0.0
    %869 = vmatpush1.xpose.msra.mxu0 0.0
    %870 = vmatprep.mubr.f32.mxu0 0.0
    %871 = vmatmul.mubr.f32.gmra.mrb[0].mxu0 %v798
    %v872 = vpop.f32.mrb[0].mxu0
    %v873 = vadd.f32 0.0, %v872
    %v874 = vpop.f32.mrb[0].mxu0
    %875 = vmatprep.mubr.f32.mxu0 0.0
    %876 = vmatmul.mubr.f32.gmra.mrb[0].mxu0 %v800
    %v877 = vpop.f32.mrb[0].mxu0
    %v878 = vadd.f32 0.0, %v877
    %v879 = vpop.f32.mrb[0].mxu0
    %880 = vdwg.mxu0
    %v881 = vmul.f32 %v873, 0.35355338
    %v882 = vmul.f32 %v878, 0.35355338
    %v883 = vadd.f32 %v881, %v45
    %v884 = vadd.f32 %v882, %v46
    %v885 = vsel %vm248, %v883, -inf
    %886 = vmax.xlane.f32.xlu0 %v885
    %v887 = vpop.xlane.xlu0 %886
    %v888 = vsel %vm248, %v884, -inf
    %889 = vmax.xlane.f32.xlu0 %v888
    %v890 = vpop.xlane.xlu0 %889
    %v891 = vsub.f32 %v883, %v887
    %v892 = vsub.f32 %v884, %v890
    %v893 = vmul.f32 %v891, 1.442695
    %v894 = vpow.pop %v893
    %v895 = vmul.f32 %v892, 1.442695
    %v896 = vpow.pop %v895
    %v897 = vsel %vm248, %v894, 0.0
    %898 = vadd.xlane.f32.xlu0 %v897
    %v899 = vpop.xlane.xlu0 %898
    %v900 = vsel %vm248, %v896, 0.0
    %901 = vadd.xlane.f32.xlu0 %v900
    %v902 = vpop.xlane.xlu0 %901
    %v903 = vrcp.pop %v899
    %v904 = vrcp.pop %v902
    %v905 = vmul.f32 %v894, %v903
    %v906 = vmul.f32 %v896, %v904
    %907 = vrot.lane.b32.xlu0 %v148, 40
    %v908 = vpop.permute.xlu0 %907
    %909 = vrot.lane.b32.xlu0 %v151, 40
    %v910 = vpop.permute.xlu0 %909
    %v914 = vsel %vm248, %v905, 0
    %v917 = vsel %vm248, %v906, 0
    %919 = vmatprep.subr.mxu0 0.0
    %920 = vmatpush1.msra.mxu0 %v908
    %921 = vmatprep.subr.mxu0 0.0
    %922 = vmatpush1.msra.mxu0 %v910
    %923 = vmatprep.subr.mxu0 0.0
    %924 = vmatpush1.msra.mxu0 0.0
    %925 = vmatprep.subr.mxu0 0.0
    %926 = vmatpush1.msra.mxu0 0.0
    %927 = vmatprep.subr.mxu0 0.0
    %928 = vmatpush1.msra.mxu0 0.0
    %929 = vmatprep.subr.mxu0 0.0
    %930 = vmatpush1.msra.mxu0 0.0
    %931 = vmatprep.subr.mxu0 0.0
    %932 = vmatpush1.msra.mxu0 0.0
    %933 = vmatprep.subr.mxu0 0.0
    %934 = vmatpush1.msra.mxu0 0.0
    %935 = vmatprep.subr.mxu0 0.0
    %936 = vmatpush1.msra.mxu0 0.0
    %937 = vmatprep.subr.mxu0 0.0
    %938 = vmatpush1.msra.mxu0 0.0
    %939 = vmatprep.subr.mxu0 0.0
    %940 = vmatpush1.msra.mxu0 0.0
    %941 = vmatprep.subr.mxu0 0.0
    %942 = vmatpush1.msra.mxu0 0.0
    %943 = vmatprep.subr.mxu0 0.0
    %944 = vmatpush1.msra.mxu0 0.0
    %945 = vmatprep.subr.mxu0 0.0
    %946 = vmatpush1.msra.mxu0 0.0
    %947 = vmatprep.subr.mxu0 0.0
    %948 = vmatpush1.msra.mxu0 0.0
    %949 = vmatprep.subr.mxu0 0.0
    %950 = vmatpush1.msra.mxu0 0.0
    %951 = vmatprep.subr.mxu0 0.0
    %952 = vmatpush1.msra.mxu0 0.0
    %953 = vmatprep.subr.mxu0 0.0
    %954 = vmatpush1.msra.mxu0 0.0
    %955 = vmatprep.subr.mxu0 0.0
    %956 = vmatpush1.msra.mxu0 0.0
    %957 = vmatprep.subr.mxu0 0.0
    %958 = vmatpush1.msra.mxu0 0.0
    %959 = vmatprep.subr.mxu0 0.0
    %960 = vmatpush1.msra.mxu0 0.0
    %961 = vmatprep.subr.mxu0 0.0
    %962 = vmatpush1.msra.mxu0 0.0
    %963 = vmatprep.subr.mxu0 0.0
    %964 = vmatpush1.msra.mxu0 0.0
    %965 = vmatprep.subr.mxu0 0.0
    %966 = vmatpush1.msra.mxu0 0.0
    %967 = vmatprep.subr.mxu0 0.0
    %968 = vmatpush1.msra.mxu0 0.0
    %969 = vmatprep.subr.mxu0 0.0
    %970 = vmatpush1.msra.mxu0 0.0
    %971 = vmatprep.subr.mxu0 0.0
    %972 = vmatpush1.msra.mxu0 0.0
    %973 = vmatprep.subr.mxu0 0.0
    %974 = vmatpush1.msra.mxu0 0.0
    %975 = vmatprep.subr.mxu0 0.0
    %976 = vmatpush1.msra.mxu0 0.0
    %977 = vmatprep.subr.mxu0 0.0
    %978 = vmatpush1.msra.mxu0 0.0
    %979 = vmatprep.subr.mxu0 0.0
    %980 = vmatpush1.msra.mxu0 0.0
    %981 = vmatprep.subr.mxu0 0.0
    %982 = vmatpush1.msra.mxu0 0.0
    %983 = vmatprep.mubr.f32.mxu0 0.0
    %984 = vmatmul.mubr.f32.gmra.mrb[0].mxu0 %v914
    %v985 = vpop.f32.mrb[0].mxu0
    %v986 = vadd.f32 0.0, %v985
    %v987 = vpop.f32.mrb[0].mxu0
    %988 = vmatprep.mubr.f32.mxu0 0.0
    %989 = vmatmul.mubr.f32.gmra.mrb[0].mxu0 %v917
    %v990 = vpop.f32.mrb[0].mxu0
    %v991 = vadd.f32 0.0, %v990
    %v992 = vpop.f32.mrb[0].mxu0
    %993 = vdwg.mxu0
    %996 = vrot.lane.b32.xlu0 %v986, 24
    %v997 = vpop.permute.xlu0 %996
    %998 = vrot.lane.b32.xlu0 %v991, 24
    %v999 = vpop.permute.xlu0 %998
    %vm1002 = vcmask 261312
    %1003 = vst.msk [vmem:[#allocation2] sm:$0xff] %vm1002, %v997
    %1004 = vst.msk [vmem:[#allocation2 + $0x8] sm:$0xff] %vm1002, %v999
    %v1005 = vld [vmem:[#allocation2] sm:$0xff]
    %v1006 = vld [vmem:[#allocation2 + $0x8] sm:$0xff]
    %v1007 = vpack.c.bf16 %v1006, %v1005
    %v1008 = vld [vmem:[%s5] sm:$0xf]
    %v1009 = vld [vmem:[%s5 + $0x4] sm:$0xf]
    %v1010 = vld [vmem:[%s5 + $0x8] sm:$0xf]
    %v1011 = vld [vmem:[%s5 + $0xc] sm:$0xf]
    %v1016 = vunpack.c.l.b16 %v1008
    %v1017 = vunpack.c.l.b16 %v1009
    %v1018 = vunpack.c.l.b16 %v1010
    %v1019 = vunpack.c.l.b16 %v1011
    %v1020 = vpack.c.b16 %v1017, %v1016
    %v1021 = vpack.c.b16 %v1019, %v1018
    %v1025 = vsel %vm49, %v1007, 0
    %1027 = vmatprep.subr.bf16.mxu0 0
    %1028 = vmatpush1.bf16.msra.mxu0 %v1020
    %1029 = vmatprep.subr.bf16.mxu0 0
    %1030 = vmatpush1.bf16.msra.mxu0 %v1021
    %1031 = vmatprep.subr.bf16.mxu0 0
    %1032 = vmatpush1.bf16.msra.mxu0 0
    %1033 = vmatprep.subr.bf16.mxu0 0
    %1034 = vmatpush1.bf16.msra.mxu0 0
    %1035 = vmatprep.subr.bf16.mxu0 0
    %1036 = vmatpush1.bf16.msra.mxu0 0
    %1037 = vmatprep.subr.bf16.mxu0 0
    %1038 = vmatpush1.bf16.msra.mxu0 0
    %1039 = vmatprep.subr.bf16.mxu0 0
    %1040 = vmatpush1.bf16.msra.mxu0 0
    %1041 = vmatprep.subr.bf16.mxu0 0
    %1042 = vmatpush1.bf16.msra.mxu0 0
    %1043 = vmatprep.subr.bf16.mxu0 0
    %1044 = vmatpush1.bf16.msra.mxu0 0
    %1045 = vmatprep.subr.bf16.mxu0 0
    %1046 = vmatpush1.bf16.msra.mxu0 0
    %1047 = vmatprep.subr.bf16.mxu0 0
    %1048 = vmatpush1.bf16.msra.mxu0 0
    %1049 = vmatprep.subr.bf16.mxu0 0
    %1050 = vmatpush1.bf16.msra.mxu0 0
    %1051 = vmatprep.subr.bf16.mxu0 0
    %1052 = vmatpush1.bf16.msra.mxu0 0
    %1053 = vmatprep.subr.bf16.mxu0 0
    %1054 = vmatpush1.bf16.msra.mxu0 0
    %1055 = vmatprep.subr.bf16.mxu0 0
    %1056 = vmatpush1.bf16.msra.mxu0 0
    %1057 = vmatprep.subr.bf16.mxu0 0
    %1058 = vmatpush1.bf16.msra.mxu0 0
    %1059 = vmatprep.mubr.bf16.mxu0 0
    %1060 = vmatmul.mubr.bf16.gmra.mrb[0].mxu0 %v1025
    %v1061 = vpop.f32.mrb[0].mxu0
    %v1062 = vadd.f32 0.0, %v1061
    %v1063 = vpop.f32.mrb[0].mxu0
    %v1064 = vpop.f32.mrb[0].mxu0
    %v1065 = vadd.f32 0.0, %v1064
    %v1066 = vpop.f32.mrb[0].mxu0
    %1067 = vdwg.mxu0
    %v1068 = vadd.f32 %v43, %v1062
    %v1069 = vadd.f32 %v44, %v1065
    %v1070 = vld [vmem:[%s6] sm:$0x1]
    %v1071 = vld [vmem:[%s7] sm:$0x1]
    %v1072 = vsel %vm49, %v1068, 0.0
    %1073 = vadd.xlane.f32.xlu0 %v1072
    %v1074 = vpop.xlane.xlu0 %1073
    %v1075 = vsel %vm49, %v1069, 0.0
    %1076 = vadd.xlane.f32.xlu0 %v1075
    %v1077 = vpop.xlane.xlu0 %1076
    %v1078 = vmul.f32 %v1074, %v56
    %v1079 = vmul.f32 %v1077, %v56
    %v1080 = vsub.f32 %v1068, %v1078
    %v1081 = vsub.f32 %v1069, %v1079
    %v1082 = vmul.f32 %v1080, %v1080
    %v1083 = vmul.f32 %v1081, %v1081
    %v1084 = vsel %vm49, %v1082, 0.0
    %1085 = vadd.xlane.f32.xlu0 %v1084
    %v1086 = vpop.xlane.xlu0 %1085
    %v1087 = vsel %vm49, %v1083, 0.0
    %1088 = vadd.xlane.f32.xlu0 %v1087
    %v1089 = vpop.xlane.xlu0 %1088
    %v1090 = vmul.f32 %v1086, %v56
    %v1091 = vmul.f32 %v1089, %v56
    %v1092 = vadd.f32 %v1090, 1e-06
    %v1093 = vadd.f32 %v1091, 1e-06
    %v1094 = vrsqrt.pop %v1092
    %v1095 = vrsqrt.pop %v1093
    %v1096 = vmul.f32 %v1080, %v1094
    %v1097 = vmul.f32 %v1081, %v1095
    %v1099 = vlaneseq
    %v1100 = vshrl.u32 %v1099, 7
    %v1101 = vsub.s32 0, %v1100
    %v1102 = vrot.slane %v1070, %v1101
    %v1104 = vmul.f32 %v1096, %v1102
    %v1105 = vmul.f32 %v1097, %v1102
    %v1107 = vlaneseq
    %v1108 = vshrl.u32 %v1107, 7
    %v1109 = vsub.s32 0, %v1108
    %v1110 = vrot.slane %v1071, %v1109
    %v1112 = vadd.f32 %v1104, %v1110
    %v1113 = vadd.f32 %v1105, %v1110
    %v1114 = vpack.c.bf16 %v1113, %v1112
    %v1115 = vld [vmem:[%s8] sm:$0xf]
    %v1116 = vld [vmem:[%s8 + $0x4] sm:$0xf]
    %v1117 = vld [vmem:[%s8 + $0x8] sm:$0xf]
    %v1118 = vld [vmem:[%s8 + $0xc] sm:$0xf]
    %v1119 = vld [vmem:[%s9] sm:$0x1]
    %v1121 = vlaneseq
    %v1122 = vshrl.u32 %v1121, 7
    %v1123 = vsub.s32 0, %v1122
    %v1124 = vrot.slane %v1119, %v1123
    %v1130 = vunpack.c.l.b16 %v1115
    %v1131 = vunpack.c.l.b16 %v1116
    %v1132 = vunpack.c.l.b16 %v1117
    %v1133 = vunpack.c.l.b16 %v1118
    %v1134 = vpack.c.b16 %v1131, %v1130
    %v1135 = vpack.c.b16 %v1133, %v1132
    %v1139 = vsel %vm49, %v1114, 0
    %1141 = vmatprep.subr.bf16.mxu0 0
    %1142 = vmatpush1.bf16.msra.mxu0 %v1134
    %1143 = vmatprep.subr.bf16.mxu0 0
    %1144 = vmatpush1.bf16.msra.mxu0 %v1135
    %1145 = vmatprep.subr.bf16.mxu0 0
    %1146 = vmatpush1.bf16.msra.mxu0 0
    %1147 = vmatprep.subr.bf16.mxu0 0
    %1148 = vmatpush1.bf16.msra.mxu0 0
    %1149 = vmatprep.subr.bf16.mxu0 0
    %1150 = vmatpush1.bf16.msra.mxu0 0
    %1151 = vmatprep.subr.bf16.mxu0 0
    %1152 = vmatpush1.bf16.msra.mxu0 0
    %1153 = vmatprep.subr.bf16.mxu0 0
    %1154 = vmatpush1.bf16.msra.mxu0 0
    %1155 = vmatprep.subr.bf16.mxu0 0
    %1156 = vmatpush1.bf16.msra.mxu0 0
    %1157 = vmatprep.subr.bf16.mxu0 0
    %1158 = vmatpush1.bf16.msra.mxu0 0
    %1159 = vmatprep.subr.bf16.mxu0 0
    %1160 = vmatpush1.bf16.msra.mxu0 0
    %1161 = vmatprep.subr.bf16.mxu0 0
    %1162 = vmatpush1.bf16.msra.mxu0 0
    %1163 = vmatprep.subr.bf16.mxu0 0
    %1164 = vmatpush1.bf16.msra.mxu0 0
    %1165 = vmatprep.subr.bf16.mxu0 0
    %1166 = vmatpush1.bf16.msra.mxu0 0
    %1167 = vmatprep.subr.bf16.mxu0 0
    %1168 = vmatpush1.bf16.msra.mxu0 0
    %1169 = vmatprep.subr.bf16.mxu0 0
    %1170 = vmatpush1.bf16.msra.mxu0 0
    %1171 = vmatprep.subr.bf16.mxu0 0
    %1172 = vmatpush1.bf16.msra.mxu0 0
    %1173 = vmatprep.mubr.bf16.mxu0 0
    %1174 = vmatmul.mubr.bf16.gmra.mrb[0].mxu0 %v1139
    %v1175 = vpop.f32.mrb[0].mxu0
    %v1176 = vadd.f32 %v1124, %v1175
    %v1177 = vpop.f32.mrb[0].mxu0
    %v1178 = vpop.f32.mrb[0].mxu0
    %v1179 = vadd.f32 %v1124, %v1178
    %v1180 = vpop.f32.mrb[0].mxu0
    %1181 = vdwg.mxu0
    %v1182 = vmul.f32 %v1176, %v1176
    %v1183 = vmul.f32 %v1179, %v1179
    %v1184 = vmul.f32 %v1176, %v1182
    %v1185 = vmul.f32 %v1179, %v1183
    %v1186 = vmul.f32 %v1184, 0.044715
    %v1187 = vmul.f32 %v1185, 0.044715
    %v1188 = vadd.f32 %v1176, %v1186
    %v1189 = vadd.f32 %v1179, %v1187
    %v1190 = vmul.f32 %v1188, 0.7978846
    %v1191 = vmul.f32 %v1189, 0.7978846
    %v1192 = vtanh.pop %v1190
    %v1193 = vtanh.pop %v1191
    %v1194 = vadd.f32 %v1192, 1.0
    %v1195 = vadd.f32 %v1193, 1.0
    %v1196 = vmul.f32 %v1194, 0.5
    %v1197 = vmul.f32 %v1195, 0.5
    %v1198 = vmul.f32 %v1176, %v1196
    %v1199 = vmul.f32 %v1179, %v1197
    %v1200 = vpack.c.bf16 %v1199, %v1198
    %v1201 = vld [vmem:[%s10] sm:$0xf]
    %v1202 = vld [vmem:[%s10 + $0x4] sm:$0xf]
    %v1203 = vld [vmem:[%s10 + $0x8] sm:$0xf]
    %v1204 = vld [vmem:[%s10 + $0xc] sm:$0xf]
    %v1205 = vld [vmem:[%s10 + $0x10] sm:$0xf]
    %v1206 = vld [vmem:[%s10 + $0x14] sm:$0xf]
    %v1207 = vld [vmem:[%s10 + $0x18] sm:$0xf]
    %v1208 = vld [vmem:[%s10 + $0x1c] sm:$0xf]
    %v1209 = vld [vmem:[%s11] sm:$0x1]
    %v1211 = vlaneseq
    %v1212 = vshrl.u32 %v1211, 7
    %v1213 = vsub.s32 0, %v1212
    %v1214 = vrot.slane %v1209, %v1213
    %v1224 = vunpack.c.l.b16 %v1201
    %v1225 = vunpack.c.l.b16 %v1202
    %v1226 = vunpack.c.l.b16 %v1203
    %v1227 = vunpack.c.l.b16 %v1204
    %v1228 = vunpack.c.l.b16 %v1205
    %v1229 = vunpack.c.l.b16 %v1206
    %v1230 = vunpack.c.l.b16 %v1207
    %v1231 = vunpack.c.l.b16 %v1208
    %v1232 = vpack.c.b16 %v1225, %v1224
    %v1233 = vpack.c.b16 %v1227, %v1226
    %v1234 = vpack.c.b16 %v1229, %v1228
    %v1235 = vpack.c.b16 %v1231, %v1230
    %vm1240 = vcmask 523264
    %v1242 = vsel %vm1240, %v1200, 0
    %1244 = vmatprep.subr.bf16.mxu0 0
    %1245 = vmatpush1.bf16.msra.mxu0 %v1232
    %1246 = vmatprep.subr.bf16.mxu0 0
    %1247 = vmatpush1.bf16.msra.mxu0 %v1233
    %1248 = vmatprep.subr.bf16.mxu0 0
    %1249 = vmatpush1.bf16.msra.mxu0 %v1234
    %1250 = vmatprep.subr.bf16.mxu0 0
    %1251 = vmatpush1.bf16.msra.mxu0 %v1235
    %1252 = vmatprep.subr.bf16.mxu0 0
    %1253 = vmatpush1.bf16.msra.mxu0 0
    %1254 = vmatprep.subr.bf16.mxu0 0
    %1255 = vmatpush1.bf16.msra.mxu0 0
    %1256 = vmatprep.subr.bf16.mxu0 0
    %1257 = vmatpush1.bf16.msra.mxu0 0
    %1258 = vmatprep.subr.bf16.mxu0 0
    %1259 = vmatpush1.bf16.msra.mxu0 0
    %1260 = vmatprep.subr.bf16.mxu0 0
    %1261 = vmatpush1.bf16.msra.mxu0 0
    %1262 = vmatprep.subr.bf16.mxu0 0
    %1263 = vmatpush1.bf16.msra.mxu0 0
    %1264 = vmatprep.subr.bf16.mxu0 0
    %1265 = vmatpush1.bf16.msra.mxu0 0
    %1266 = vmatprep.subr.bf16.mxu0 0
    %1267 = vmatpush1.bf16.msra.mxu0 0
    %1268 = vmatprep.subr.bf16.mxu0 0
    %1269 = vmatpush1.bf16.msra.mxu0 0
    %1270 = vmatprep.subr.bf16.mxu0 0
    %1271 = vmatpush1.bf16.msra.mxu0 0
    %1272 = vmatprep.subr.bf16.mxu0 0
    %1273 = vmatpush1.bf16.msra.mxu0 0
    %1274 = vmatprep.subr.bf16.mxu0 0
    %1275 = vmatpush1.bf16.msra.mxu0 0
    %1276 = vmatprep.mubr.bf16.mxu0 0
    %1277 = vmatmul.mubr.bf16.gmra.mrb[0].mxu0 %v1242
    %v1278 = vpop.f32.mrb[0].mxu0
    %v1279 = vadd.f32 %v1214, %v1278
    %v1280 = vpop.f32.mrb[0].mxu0
    %v1281 = vpop.f32.mrb[0].mxu0
    %v1282 = vadd.f32 %v1214, %v1281
    %v1283 = vpop.f32.mrb[0].mxu0
    %1284 = vdwg.mxu0
    %v1285 = vadd.f32 %v1068, %v1279
    %v1286 = vadd.f32 %v1069, %v1282
    %s1287 = scalar_lea.vmem %s2, 1
    %v1288 = vld [vmem:[%s1287] sm:$0x1]
    %s1289 = scalar_lea.vmem %s3, 1
    %v1290 = vld [vmem:[%s1289] sm:$0x1]
    %v1291 = vsel %vm49, %v1285, 0.0
    %1292 = vadd.xlane.f32.xlu0 %v1291
    %v1293 = vpop.xlane.xlu0 %1292
    %v1294 = vsel %vm49, %v1286, 0.0
    %1295 = vadd.xlane.f32.xlu0 %v1294
    %v1296 = vpop.xlane.xlu0 %1295
    %v1297 = vmul.f32 %v1293, %v56
    %v1298 = vmul.f32 %v1296, %v56
    %v1299 = vsub.f32 %v1285, %v1297
    %v1300 = vsub.f32 %v1286, %v1298
    %v1301 = vmul.f32 %v1299, %v1299
    %v1302 = vmul.f32 %v1300, %v1300
    %v1303 = vsel %vm49, %v1301, 0.0
    %1304 = vadd.xlane.f32.xlu0 %v1303
    %v1305 = vpop.xlane.xlu0 %1304
    %v1306 = vsel %vm49, %v1302, 0.0
    %1307 = vadd.xlane.f32.xlu0 %v1306
    %v1308 = vpop.xlane.xlu0 %1307
    %v1309 = vmul.f32 %v1305, %v56
    %v1310 = vmul.f32 %v1308, %v56
    %v1311 = vadd.f32 %v1309, 1e-06
    %v1312 = vadd.f32 %v1310, 1e-06
    %v1313 = vrsqrt.pop %v1311
    %v1314 = vrsqrt.pop %v1312
    %v1315 = vmul.f32 %v1299, %v1313
    %v1316 = vmul.f32 %v1300, %v1314
    %v1318 = vlaneseq
    %v1319 = vshrl.u32 %v1318, 7
    %v1320 = vsub.s32 0, %v1319
    %v1321 = vrot.slane %v1288, %v1320
    %v1323 = vmul.f32 %v1315, %v1321
    %v1324 = vmul.f32 %v1316, %v1321
    %v1326 = vlaneseq
    %v1327 = vshrl.u32 %v1326, 7
    %v1328 = vsub.s32 0, %v1327
    %v1329 = vrot.slane %v1290, %v1328
    %v1331 = vadd.f32 %v1323, %v1329
    %v1332 = vadd.f32 %v1324, %v1329
    %v1333 = vpack.c.bf16 %v1332, %v1331
    %s1334 = scalar_lea.vmem %s4, 16
    %v1335 = vld [vmem:[%s1334] sm:$0xf]
    %v1336 = vld [vmem:[%s1334 + $0x4] sm:$0xf]
    %v1337 = vld [vmem:[%s1334 + $0x8] sm:$0xf]
    %v1338 = vld [vmem:[%s1334 + $0xc] sm:$0xf]
    %v1343 = vunpack.c.l.b16 %v1335
    %v1344 = vunpack.c.l.b16 %v1336
    %v1345 = vunpack.c.l.b16 %v1337
    %v1346 = vunpack.c.l.b16 %v1338
    %v1347 = vpack.c.b16 %v1344, %v1343
    %v1348 = vpack.c.b16 %v1346, %v1345
    %v1352 = vsel %vm49, %v1333, 0
    %1354 = vmatprep.subr.bf16.mxu0 0
    %1355 = vmatpush1.bf16.msra.mxu0 %v1347
    %1356 = vmatprep.subr.bf16.mxu0 0
    %1357 = vmatpush1.bf16.msra.mxu0 %v1348
    %1358 = vmatprep.subr.bf16.mxu0 0
    %1359 = vmatpush1.bf16.msra.mxu0 0
    %1360 = vmatprep.subr.bf16.mxu0 0
    %1361 = vmatpush1.bf16.msra.mxu0 0
    %1362 = vmatprep.subr.bf16.mxu0 0
    %1363 = vmatpush1.bf16.msra.mxu0 0
    %1364 = vmatprep.subr.bf16.mxu0 0
    %1365 = vmatpush1.bf16.msra.mxu0 0
    %1366 = vmatprep.subr.bf16.mxu0 0
    %1367 = vmatpush1.bf16.msra.mxu0 0
    %1368 = vmatprep.subr.bf16.mxu0 0
    %1369 = vmatpush1.bf16.msra.mxu0 0
    %1370 = vmatprep.subr.bf16.mxu0 0
    %1371 = vmatpush1.bf16.msra.mxu0 0
    %1372 = vmatprep.subr.bf16.mxu0 0
    %1373 = vmatpush1.bf16.msra.mxu0 0
    %1374 = vmatprep.subr.bf16.mxu0 0
    %1375 = vmatpush1.bf16.msra.mxu0 0
    %1376 = vmatprep.subr.bf16.mxu0 0
    %1377 = vmatpush1.bf16.msra.mxu0 0
    %1378 = vmatprep.subr.bf16.mxu0 0
    %1379 = vmatpush1.bf16.msra.mxu0 0
    %1380 = vmatprep.subr.bf16.mxu0 0
    %1381 = vmatpush1.bf16.msra.mxu0 0
    %1382 = vmatprep.subr.bf16.mxu0 0
    %1383 = vmatpush1.bf16.msra.mxu0 0
    %1384 = vmatprep.subr.bf16.mxu0 0
    %1385 = vmatpush1.bf16.msra.mxu0 0
    %1386 = vmatprep.mubr.bf16.mxu0 0
    %1387 = vmatmul.mubr.bf16.gmra.mrb[0].mxu0 %v1352
    %v1388 = vpop.f32.mrb[0].mxu0
    %v1389 = vadd.f32 0.0, %v1388
    %v1390 = vpop.f32.mrb[0].mxu0
    %v1391 = vpop.f32.mrb[0].mxu0
    %v1392 = vadd.f32 0.0, %v1391
    %v1393 = vpop.f32.mrb[0].mxu0
    %1394 = vdwg.mxu0
    %1397 = vrot.lane.b32.xlu0 %v1389, 96
    %v1398 = vpop.permute.xlu0 %1397
    %1399 = vrot.lane.b32.xlu0 %v1392, 96
    %v1400 = vpop.permute.xlu0 %1399
    %v1401 = vsel %vm160, %v1389, 0
    %v1403 = vsel %vm160, %v1392, 0
    %v1405 = vsel %vm160, %v1398, 0
    %v1407 = vsel %vm160, %v1400, 0
    %1409 = vmatprep.subr.mxu0 0.0
    %1410 = vmatpush1.xpose.msra.mxu0 %v1405
    %1411 = vmatprep.subr.mxu0 0.0
    %1412 = vmatpush1.xpose.msra.mxu0 %v1407
    %1413 = vmatprep.subr.mxu0 0.0
    %1414 = vmatpush1.xpose.msra.mxu0 0.0
    %1415 = vmatprep.subr.mxu0 0.0
    %1416 = vmatpush1.xpose.msra.mxu0 0.0
    %1417 = vmatprep.subr.mxu0 0.0
    %1418 = vmatpush1.xpose.msra.mxu0 0.0
    %1419 = vmatprep.subr.mxu0 0.0
    %1420 = vmatpush1.xpose.msra.mxu0 0.0
    %1421 = vmatprep.subr.mxu0 0.0
    %1422 = vmatpush1.xpose.msra.mxu0 0.0
    %1423 = vmatprep.subr.mxu0 0.0
    %1424 = vmatpush1.xpose.msra.mxu0 0.0
    %1425 = vmatprep.subr.mxu0 0.0
    %1426 = vmatpush1.xpose.msra.mxu0 0.0
    %1427 = vmatprep.subr.mxu0 0.0
    %1428 = vmatpush1.xpose.msra.mxu0 0.0
    %1429 = vmatprep.subr.mxu0 0.0
    %1430 = vmatpush1.xpose.msra.mxu0 0.0
    %1431 = vmatprep.subr.mxu0 0.0
    %1432 = vmatpush1.xpose.msra.mxu0 0.0
    %1433 = vmatprep.subr.mxu0 0.0
    %1434 = vmatpush1.xpose.msra.mxu0 0.0
    %1435 = vmatprep.subr.mxu0 0.0
    %1436 = vmatpush1.xpose.msra.mxu0 0.0
    %1437 = vmatprep.subr.mxu0 0.0
    %1438 = vmatpush1.xpose.msra.mxu0 0.0
    %1439 = vmatprep.subr.mxu0 0.0
    %1440 = vmatpush1.xpose.msra.mxu0 0.0
    %1441 = vmatprep.subr.mxu0 0.0
    %1442 = vmatpush1.xpose.msra.mxu0 0.0
    %1443 = vmatprep.subr.mxu0 0.0
    %1444 = vmatpush1.xpose.msra.mxu0 0.0
    %1445 = vmatprep.subr.mxu0 0.0
    %1446 = vmatpush1.xpose.msra.mxu0 0.0
    %1447 = vmatprep.subr.mxu0 0.0
    %1448 = vmatpush1.xpose.msra.mxu0 0.0
    %1449 = vmatprep.subr.mxu0 0.0
    %1450 = vmatpush1.xpose.msra.mxu0 0.0
    %1451 = vmatprep.subr.mxu0 0.0
    %1452 = vmatpush1.xpose.msra.mxu0 0.0
    %1453 = vmatprep.subr.mxu0 0.0
    %1454 = vmatpush1.xpose.msra.mxu0 0.0
    %1455 = vmatprep.subr.mxu0 0.0
    %1456 = vmatpush1.xpose.msra.mxu0 0.0
    %1457 = vmatprep.subr.mxu0 0.0
    %1458 = vmatpush1.xpose.msra.mxu0 0.0
    %1459 = vmatprep.subr.mxu0 0.0
    %1460 = vmatpush1.xpose.msra.mxu0 0.0
    %1461 = vmatprep.subr.mxu0 0.0
    %1462 = vmatpush1.xpose.msra.mxu0 0.0
    %1463 = vmatprep.subr.mxu0 0.0
    %1464 = vmatpush1.xpose.msra.mxu0 0.0
    %1465 = vmatprep.subr.mxu0 0.0
    %1466 = vmatpush1.xpose.msra.mxu0 0.0
    %1467 = vmatprep.subr.mxu0 0.0
    %1468 = vmatpush1.xpose.msra.mxu0 0.0
    %1469 = vmatprep.subr.mxu0 0.0
    %1470 = vmatpush1.xpose.msra.mxu0 0.0
    %1471 = vmatprep.subr.mxu0 0.0
    %1472 = vmatpush1.xpose.msra.mxu0 0.0
    %1473 = vmatprep.mubr.f32.mxu0 0.0
    %1474 = vmatmul.mubr.f32.gmra.mrb[0].mxu0 %v1401
    %v1475 = vpop.f32.mrb[0].mxu0
    %v1476 = vadd.f32 0.0, %v1475
    %v1477 = vpop.f32.mrb[0].mxu0
    %1478 = vmatprep.mubr.f32.mxu0 0.0
    %1479 = vmatmul.mubr.f32.gmra.mrb[0].mxu0 %v1403
    %v1480 = vpop.f32.mrb[0].mxu0
    %v1481 = vadd.f32 0.0, %v1480
    %v1482 = vpop.f32.mrb[0].mxu0
    %1483 = vdwg.mxu0
    %v1484 = vmul.f32 %v1476, 0.35355338
    %v1485 = vmul.f32 %v1481, 0.35355338
    %v1486 = vadd.f32 %v1484, %v45
    %v1487 = vadd.f32 %v1485, %v46
    %v1488 = vsel %vm248, %v1486, -inf
    %1489 = vmax.xlane.f32.xlu0 %v1488
    %v1490 = vpop.xlane.xlu0 %1489
    %v1491 = vsel %vm248, %v1487, -inf
    %1492 = vmax.xlane.f32.xlu0 %v1491
    %v1493 = vpop.xlane.xlu0 %1492
    %v1494 = vsub.f32 %v1486, %v1490
    %v1495 = vsub.f32 %v1487, %v1493
    %v1496 = vmul.f32 %v1494, 1.442695
    %v1497 = vpow.pop %v1496
    %v1498 = vmul.f32 %v1495, 1.442695
    %v1499 = vpow.pop %v1498
    %v1500 = vsel %vm248, %v1497, 0.0
    %1501 = vadd.xlane.f32.xlu0 %v1500
    %v1502 = vpop.xlane.xlu0 %1501
    %v1503 = vsel %vm248, %v1499, 0.0
    %1504 = vadd.xlane.f32.xlu0 %v1503
    %v1505 = vpop.xlane.xlu0 %1504
    %v1506 = vrcp.pop %v1502
    %v1507 = vrcp.pop %v1505
    %v1508 = vmul.f32 %v1497, %v1506
    %v1509 = vmul.f32 %v1499, %v1507
    %1510 = vrot.lane.b32.xlu0 %v1389, 64
    %v1511 = vpop.permute.xlu0 %1510
    %1512 = vrot.lane.b32.xlu0 %v1392, 64
    %v1513 = vpop.permute.xlu0 %1512
    %v1517 = vsel %vm248, %v1508, 0
    %v1520 = vsel %vm248, %v1509, 0
    %1522 = vmatprep.subr.mxu0 0.0
    %1523 = vmatpush1.msra.mxu0 %v1511
    %1524 = vmatprep.subr.mxu0 0.0
    %1525 = vmatpush1.msra.mxu0 %v1513
    %1526 = vmatprep.subr.mxu0 0.0
    %1527 = vmatpush1.msra.mxu0 0.0
    %1528 = vmatprep.subr.mxu0 0.0
    %1529 = vmatpush1.msra.mxu0 0.0
    %1530 = vmatprep.subr.mxu0 0.0
    %1531 = vmatpush1.msra.mxu0 0.0
    %1532 = vmatprep.subr.mxu0 0.0
    %1533 = vmatpush1.msra.mxu0 0.0
    %1534 = vmatprep.subr.mxu0 0.0
    %1535 = vmatpush1.msra.mxu0 0.0
    %1536 = vmatprep.subr.mxu0 0.0
    %1537 = vmatpush1.msra.mxu0 0.0
    %1538 = vmatprep.subr.mxu0 0.0
    %1539 = vmatpush1.msra.mxu0 0.0
    %1540 = vmatprep.subr.mxu0 0.0
    %1541 = vmatpush1.msra.mxu0 0.0
    %1542 = vmatprep.subr.mxu0 0.0
    %1543 = vmatpush1.msra.mxu0 0.0
    %1544 = vmatprep.subr.mxu0 0.0
    %1545 = vmatpush1.msra.mxu0 0.0
    %1546 = vmatprep.subr.mxu0 0.0
    %1547 = vmatpush1.msra.mxu0 0.0
    %1548 = vmatprep.subr.mxu0 0.0
    %1549 = vmatpush1.msra.mxu0 0.0
    %1550 = vmatprep.subr.mxu0 0.0
    %1551 = vmatpush1.msra.mxu0 0.0
    %1552 = vmatprep.subr.mxu0 0.0
    %1553 = vmatpush1.msra.mxu0 0.0
    %1554 = vmatprep.subr.mxu0 0.0
    %1555 = vmatpush1.msra.mxu0 0.0
    %1556 = vmatprep.subr.mxu0 0.0
    %1557 = vmatpush1.msra.mxu0 0.0
    %1558 = vmatprep.subr.mxu0 0.0
    %1559 = vmatpush1.msra.mxu0 0.0
    %1560 = vmatprep.subr.mxu0 0.0
    %1561 = vmatpush1.msra.mxu0 0.0
    %1562 = vmatprep.subr.mxu0 0.0
    %1563 = vmatpush1.msra.mxu0 0.0
    %1564 = vmatprep.subr.mxu0 0.0
    %1565 = vmatpush1.msra.mxu0 0.0
    %1566 = vmatprep.subr.mxu0 0.0
    %1567 = vmatpush1.msra.mxu0 0.0
    %1568 = vmatprep.subr.mxu0 0.0
    %1569 = vmatpush1.msra.mxu0 0.0
    %1570 = vmatprep.subr.mxu0 0.0
    %1571 = vmatpush1.msra.mxu0 0.0
    %1572 = vmatprep.subr.mxu0 0.0
    %1573 = vmatpush1.msra.mxu0 0.0
    %1574 = vmatprep.subr.mxu0 0.0
    %1575 = vmatpush1.msra.mxu0 0.0
    %1576 = vmatprep.subr.mxu0 0.0
    %1577 = vmatpush1.msra.mxu0 0.0
    %1578 = vmatprep.subr.mxu0 0.0
    %1579 = vmatpush1.msra.mxu0 0.0
    %1580 = vmatprep.subr.mxu0 0.0
    %1581 = vmatpush1.msra.mxu0 0.0
    %1582 = vmatprep.subr.mxu0 0.0
    %1583 = vmatpush1.msra.mxu0 0.0
    %1584 = vmatprep.subr.mxu0 0.0
    %1585 = vmatpush1.msra.mxu0 0.0
    %1586 = vmatprep.mubr.f32.mxu0 0.0
    %1587 = vmatmul.mubr.f32.gmra.mrb[0].mxu0 %v1517
    %v1588 = vpop.f32.mrb[0].mxu0
    %v1589 = vadd.f32 0.0, %v1588
    %v1590 = vpop.f32.mrb[0].mxu0
    %1591 = vmatprep.mubr.f32.mxu0 0.0
    %1592 = vmatmul.mubr.f32.gmra.mrb[0].mxu0 %v1520
    %v1593 = vpop.f32.mrb[0].mxu0
    %v1594 = vadd.f32 0.0, %v1593
    %v1595 = vpop.f32.mrb[0].mxu0
    %1596 = vdwg.mxu0
    %1597 = vst.msk [vmem:[#allocation2] sm:$0xff] %vm160, %v1589
    %1598 = vst.msk [vmem:[#allocation2 + $0x8] sm:$0xff] %vm160, %v1594
    %1599 = vrot.lane.b32.xlu0 %v1389, 120
    %v1600 = vpop.permute.xlu0 %1599
    %1601 = vrot.lane.b32.xlu0 %v1392, 120
    %v1602 = vpop.permute.xlu0 %1601
    %1603 = vrot.lane.b32.xlu0 %v1389, 88
    %v1604 = vpop.permute.xlu0 %1603
    %1605 = vrot.lane.b32.xlu0 %v1392, 88
    %v1606 = vpop.permute.xlu0 %1605
    %v1607 = vsel %vm160, %v1600, 0
    %v1609 = vsel %vm160, %v1602, 0
    %v1611 = vsel %vm160, %v1604, 0
    %v1613 = vsel %vm160, %v1606, 0
    %1615 = vmatprep.subr.mxu0 0.0
    %1616 = vmatpush1.xpose.msra.mxu0 %v1611
    %1617 = vmatprep.subr.mxu0 0.0
    %1618 = vmatpush1.xpose.msra.mxu0 %v1613
    %1619 = vmatprep.subr.mxu0 0.0
    %1620 = vmatpush1.xpose.msra.mxu0 0.0
    %1621 = vmatprep.subr.mxu0 0.0
    %1622 = vmatpush1.xpose.msra.mxu0 0.0
    %1623 = vmatprep.subr.mxu0 0.0
    %1624 = vmatpush1.xpose.msra.mxu0 0.0
    %1625 = vmatprep.subr.mxu0 0.0
    %1626 = vmatpush1.xpose.msra.mxu0 0.0
    %1627 = vmatprep.subr.mxu0 0.0
    %1628 = vmatpush1.xpose.msra.mxu0 0.0
    %1629 = vmatprep.subr.mxu0 0.0
    %1630 = vmatpush1.xpose.msra.mxu0 0.0
    %1631 = vmatprep.subr.mxu0 0.0
    %1632 = vmatpush1.xpose.msra.mxu0 0.0
    %1633 = vmatprep.subr.mxu0 0.0
    %1634 = vmatpush1.xpose.msra.mxu0 0.0
    %1635 = vmatprep.subr.mxu0 0.0
    %1636 = vmatpush1.xpose.msra.mxu0 0.0
    %1637 = vmatprep.subr.mxu0 0.0
    %1638 = vmatpush1.xpose.msra.mxu0 0.0
    %1639 = vmatprep.subr.mxu0 0.0
    %1640 = vmatpush1.xpose.msra.mxu0 0.0
    %1641 = vmatprep.subr.mxu0 0.0
    %1642 = vmatpush1.xpose.msra.mxu0 0.0
    %1643 = vmatprep.subr.mxu0 0.0
    %1644 = vmatpush1.xpose.msra.mxu0 0.0
    %1645 = vmatprep.subr.mxu0 0.0
    %1646 = vmatpush1.xpose.msra.mxu0 0.0
    %1647 = vmatprep.subr.mxu0 0.0
    %1648 = vmatpush1.xpose.msra.mxu0 0.0
    %1649 = vmatprep.subr.mxu0 0.0
    %1650 = vmatpush1.xpose.msra.mxu0 0.0
    %1651 = vmatprep.subr.mxu0 0.0
    %1652 = vmatpush1.xpose.msra.mxu0 0.0
    %1653 = vmatprep.subr.mxu0 0.0
    %1654 = vmatpush1.xpose.msra.mxu0 0.0
    %1655 = vmatprep.subr.mxu0 0.0
    %1656 = vmatpush1.xpose.msra.mxu0 0.0
    %1657 = vmatprep.subr.mxu0 0.0
    %1658 = vmatpush1.xpose.msra.mxu0 0.0
    %1659 = vmatprep.subr.mxu0 0.0
    %1660 = vmatpush1.xpose.msra.mxu0 0.0
    %1661 = vmatprep.subr.mxu0 0.0
    %1662 = vmatpush1.xpose.msra.mxu0 0.0
    %1663 = vmatprep.subr.mxu0 0.0
    %1664 = vmatpush1.xpose.msra.mxu0 0.0
    %1665 = vmatprep.subr.mxu0 0.0
    %1666 = vmatpush1.xpose.msra.mxu0 0.0
    %1667 = vmatprep.subr.mxu0 0.0
    %1668 = vmatpush1.xpose.msra.mxu0 0.0
    %1669 = vmatprep.subr.mxu0 0.0
    %1670 = vmatpush1.xpose.msra.mxu0 0.0
    %1671 = vmatprep.subr.mxu0 0.0
    %1672 = vmatpush1.xpose.msra.mxu0 0.0
    %1673 = vmatprep.subr.mxu0 0.0
    %1674 = vmatpush1.xpose.msra.mxu0 0.0
    %1675 = vmatprep.subr.mxu0 0.0
    %1676 = vmatpush1.xpose.msra.mxu0 0.0
    %1677 = vmatprep.subr.mxu0 0.0
    %1678 = vmatpush1.xpose.msra.mxu0 0.0
    %1679 = vmatprep.mubr.f32.mxu0 0.0
    %1680 = vmatmul.mubr.f32.gmra.mrb[0].mxu0 %v1607
    %v1681 = vpop.f32.mrb[0].mxu0
    %v1682 = vadd.f32 0.0, %v1681
    %v1683 = vpop.f32.mrb[0].mxu0
    %1684 = vmatprep.mubr.f32.mxu0 0.0
    %1685 = vmatmul.mubr.f32.gmra.mrb[0].mxu0 %v1609
    %v1686 = vpop.f32.mrb[0].mxu0
    %v1687 = vadd.f32 0.0, %v1686
    %v1688 = vpop.f32.mrb[0].mxu0
    %1689 = vdwg.mxu0
    %v1690 = vmul.f32 %v1682, 0.35355338
    %v1691 = vmul.f32 %v1687, 0.35355338
    %v1692 = vadd.f32 %v1690, %v45
    %v1693 = vadd.f32 %v1691, %v46
    %v1694 = vsel %vm248, %v1692, -inf
    %1695 = vmax.xlane.f32.xlu0 %v1694
    %v1696 = vpop.xlane.xlu0 %1695
    %v1697 = vsel %vm248, %v1693, -inf
    %1698 = vmax.xlane.f32.xlu0 %v1697
    %v1699 = vpop.xlane.xlu0 %1698
    %v1700 = vsub.f32 %v1692, %v1696
    %v1701 = vsub.f32 %v1693, %v1699
    %v1702 = vmul.f32 %v1700, 1.442695
    %v1703 = vpow.pop %v1702
    %v1704 = vmul.f32 %v1701, 1.442695
    %v1705 = vpow.pop %v1704
    %v1706 = vsel %vm248, %v1703, 0.0
    %1707 = vadd.xlane.f32.xlu0 %v1706
    %v1708 = vpop.xlane.xlu0 %1707
    %v1709 = vsel %vm248, %v1705, 0.0
    %1710 = vadd.xlane.f32.xlu0 %v1709
    %v1711 = vpop.xlane.xlu0 %1710
    %v1712 = vrcp.pop %v1708
    %v1713 = vrcp.pop %v1711
    %v1714 = vmul.f32 %v1703, %v1712
    %v1715 = vmul.f32 %v1705, %v1713
    %1716 = vrot.lane.b32.xlu0 %v1389, 56
    %v1717 = vpop.permute.xlu0 %1716
    %1718 = vrot.lane.b32.xlu0 %v1392, 56
    %v1719 = vpop.permute.xlu0 %1718
    %v1723 = vsel %vm248, %v1714, 0
    %v1726 = vsel %vm248, %v1715, 0
    %1728 = vmatprep.subr.mxu0 0.0
    %1729 = vmatpush1.msra.mxu0 %v1717
    %1730 = vmatprep.subr.mxu0 0.0
    %1731 = vmatpush1.msra.mxu0 %v1719
    %1732 = vmatprep.subr.mxu0 0.0
    %1733 = vmatpush1.msra.mxu0 0.0
    %1734 = vmatprep.subr.mxu0 0.0
    %1735 = vmatpush1.msra.mxu0 0.0
    %1736 = vmatprep.subr.mxu0 0.0
    %1737 = vmatpush1.msra.mxu0 0.0
    %1738 = vmatprep.subr.mxu0 0.0
    %1739 = vmatpush1.msra.mxu0 0.0
    %1740 = vmatprep.subr.mxu0 0.0
    %1741 = vmatpush1.msra.mxu0 0.0
    %1742 = vmatprep.subr.mxu0 0.0
    %1743 = vmatpush1.msra.mxu0 0.0
    %1744 = vmatprep.subr.mxu0 0.0
    %1745 = vmatpush1.msra.mxu0 0.0
    %1746 = vmatprep.subr.mxu0 0.0
    %1747 = vmatpush1.msra.mxu0 0.0
    %1748 = vmatprep.subr.mxu0 0.0
    %1749 = vmatpush1.msra.mxu0 0.0
    %1750 = vmatprep.subr.mxu0 0.0
    %1751 = vmatpush1.msra.mxu0 0.0
    %1752 = vmatprep.subr.mxu0 0.0
    %1753 = vmatpush1.msra.mxu0 0.0
    %1754 = vmatprep.subr.mxu0 0.0
    %1755 = vmatpush1.msra.mxu0 0.0
    %1756 = vmatprep.subr.mxu0 0.0
    %1757 = vmatpush1.msra.mxu0 0.0
    %1758 = vmatprep.subr.mxu0 0.0
    %1759 = vmatpush1.msra.mxu0 0.0
    %1760 = vmatprep.subr.mxu0 0.0
    %1761 = vmatpush1.msra.mxu0 0.0
    %1762 = vmatprep.subr.mxu0 0.0
    %1763 = vmatpush1.msra.mxu0 0.0
    %1764 = vmatprep.subr.mxu0 0.0
    %1765 = vmatpush1.msra.mxu0 0.0
    %1766 = vmatprep.subr.mxu0 0.0
    %1767 = vmatpush1.msra.mxu0 0.0
    %1768 = vmatprep.subr.mxu0 0.0
    %1769 = vmatpush1.msra.mxu0 0.0
    %1770 = vmatprep.subr.mxu0 0.0
    %1771 = vmatpush1.msra.mxu0 0.0
    %1772 = vmatprep.subr.mxu0 0.0
    %1773 = vmatpush1.msra.mxu0 0.0
    %1774 = vmatprep.subr.mxu0 0.0
    %1775 = vmatpush1.msra.mxu0 0.0
    %1776 = vmatprep.subr.mxu0 0.0
    %1777 = vmatpush1.msra.mxu0 0.0
    %1778 = vmatprep.subr.mxu0 0.0
    %1779 = vmatpush1.msra.mxu0 0.0
    %1780 = vmatprep.subr.mxu0 0.0
    %1781 = vmatpush1.msra.mxu0 0.0
    %1782 = vmatprep.subr.mxu0 0.0
    %1783 = vmatpush1.msra.mxu0 0.0
    %1784 = vmatprep.subr.mxu0 0.0
    %1785 = vmatpush1.msra.mxu0 0.0
    %1786 = vmatprep.subr.mxu0 0.0
    %1787 = vmatpush1.msra.mxu0 0.0
    %1788 = vmatprep.subr.mxu0 0.0
    %1789 = vmatpush1.msra.mxu0 0.0
    %1790 = vmatprep.subr.mxu0 0.0
    %1791 = vmatpush1.msra.mxu0 0.0
    %1792 = vmatprep.mubr.f32.mxu0 0.0
    %1793 = vmatmul.mubr.f32.gmra.mrb[0].mxu0 %v1723
    %v1794 = vpop.f32.mrb[0].mxu0
    %v1795 = vadd.f32 0.0, %v1794
    %v1796 = vpop.f32.mrb[0].mxu0
    %1797 = vmatprep.mubr.f32.mxu0 0.0
    %1798 = vmatmul.mubr.f32.gmra.mrb[0].mxu0 %v1726
    %v1799 = vpop.f32.mrb[0].mxu0
    %v1800 = vadd.f32 0.0, %v1799
    %v1801 = vpop.f32.mrb[0].mxu0
    %1802 = vdwg.mxu0
    %1805 = vrot.lane.b32.xlu0 %v1795, 8
    %v1806 = vpop.permute.xlu0 %1805
    %1807 = vrot.lane.b32.xlu0 %v1800, 8
    %v1808 = vpop.permute.xlu0 %1807
    %1811 = vst.msk [vmem:[#allocation2] sm:$0xff] %vm572, %v1806
    %1812 = vst.msk [vmem:[#allocation2 + $0x8] sm:$0xff] %vm572, %v1808
    %1813 = vrot.lane.b32.xlu0 %v1389, 112
    %v1814 = vpop.permute.xlu0 %1813
    %1815 = vrot.lane.b32.xlu0 %v1392, 112
    %v1816 = vpop.permute.xlu0 %1815
    %1817 = vrot.lane.b32.xlu0 %v1389, 80
    %v1818 = vpop.permute.xlu0 %1817
    %1819 = vrot.lane.b32.xlu0 %v1392, 80
    %v1820 = vpop.permute.xlu0 %1819
    %v1821 = vsel %vm160, %v1814, 0
    %v1823 = vsel %vm160, %v1816, 0
    %v1825 = vsel %vm160, %v1818, 0
    %v1827 = vsel %vm160, %v1820, 0
    %1829 = vmatprep.subr.mxu0 0.0
    %1830 = vmatpush1.xpose.msra.mxu0 %v1825
    %1831 = vmatprep.subr.mxu0 0.0
    %1832 = vmatpush1.xpose.msra.mxu0 %v1827
    %1833 = vmatprep.subr.mxu0 0.0
    %1834 = vmatpush1.xpose.msra.mxu0 0.0
    %1835 = vmatprep.subr.mxu0 0.0
    %1836 = vmatpush1.xpose.msra.mxu0 0.0
    %1837 = vmatprep.subr.mxu0 0.0
    %1838 = vmatpush1.xpose.msra.mxu0 0.0
    %1839 = vmatprep.subr.mxu0 0.0
    %1840 = vmatpush1.xpose.msra.mxu0 0.0
    %1841 = vmatprep.subr.mxu0 0.0
    %1842 = vmatpush1.xpose.msra.mxu0 0.0
    %1843 = vmatprep.subr.mxu0 0.0
    %1844 = vmatpush1.xpose.msra.mxu0 0.0
    %1845 = vmatprep.subr.mxu0 0.0
    %1846 = vmatpush1.xpose.msra.mxu0 0.0
    %1847 = vmatprep.subr.mxu0 0.0
    %1848 = vmatpush1.xpose.msra.mxu0 0.0
    %1849 = vmatprep.subr.mxu0 0.0
    %1850 = vmatpush1.xpose.msra.mxu0 0.0
    %1851 = vmatprep.subr.mxu0 0.0
    %1852 = vmatpush1.xpose.msra.mxu0 0.0
    %1853 = vmatprep.subr.mxu0 0.0
    %1854 = vmatpush1.xpose.msra.mxu0 0.0
    %1855 = vmatprep.subr.mxu0 0.0
    %1856 = vmatpush1.xpose.msra.mxu0 0.0
    %1857 = vmatprep.subr.mxu0 0.0
    %1858 = vmatpush1.xpose.msra.mxu0 0.0
    %1859 = vmatprep.subr.mxu0 0.0
    %1860 = vmatpush1.xpose.msra.mxu0 0.0
    %1861 = vmatprep.subr.mxu0 0.0
    %1862 = vmatpush1.xpose.msra.mxu0 0.0
    %1863 = vmatprep.subr.mxu0 0.0
    %1864 = vmatpush1.xpose.msra.mxu0 0.0
    %1865 = vmatprep.subr.mxu0 0.0
    %1866 = vmatpush1.xpose.msra.mxu0 0.0
    %1867 = vmatprep.subr.mxu0 0.0
    %1868 = vmatpush1.xpose.msra.mxu0 0.0
    %1869 = vmatprep.subr.mxu0 0.0
    %1870 = vmatpush1.xpose.msra.mxu0 0.0
    %1871 = vmatprep.subr.mxu0 0.0
    %1872 = vmatpush1.xpose.msra.mxu0 0.0
    %1873 = vmatprep.subr.mxu0 0.0
    %1874 = vmatpush1.xpose.msra.mxu0 0.0
    %1875 = vmatprep.subr.mxu0 0.0
    %1876 = vmatpush1.xpose.msra.mxu0 0.0
    %1877 = vmatprep.subr.mxu0 0.0
    %1878 = vmatpush1.xpose.msra.mxu0 0.0
    %1879 = vmatprep.subr.mxu0 0.0
    %1880 = vmatpush1.xpose.msra.mxu0 0.0
    %1881 = vmatprep.subr.mxu0 0.0
    %1882 = vmatpush1.xpose.msra.mxu0 0.0
    %1883 = vmatprep.subr.mxu0 0.0
    %1884 = vmatpush1.xpose.msra.mxu0 0.0
    %1885 = vmatprep.subr.mxu0 0.0
    %1886 = vmatpush1.xpose.msra.mxu0 0.0
    %1887 = vmatprep.subr.mxu0 0.0
    %1888 = vmatpush1.xpose.msra.mxu0 0.0
    %1889 = vmatprep.subr.mxu0 0.0
    %1890 = vmatpush1.xpose.msra.mxu0 0.0
    %1891 = vmatprep.subr.mxu0 0.0
    %1892 = vmatpush1.xpose.msra.mxu0 0.0
    %1893 = vmatprep.mubr.f32.mxu0 0.0
    %1894 = vmatmul.mubr.f32.gmra.mrb[0].mxu0 %v1821
    %v1895 = vpop.f32.mrb[0].mxu0
    %v1896 = vadd.f32 0.0, %v1895
    %v1897 = vpop.f32.mrb[0].mxu0
    %1898 = vmatprep.mubr.f32.mxu0 0.0
    %1899 = vmatmul.mubr.f32.gmra.mrb[0].mxu0 %v1823
    %v1900 = vpop.f32.mrb[0].mxu0
    %v1901 = vadd.f32 0.0, %v1900
    %v1902 = vpop.f32.mrb[0].mxu0
    %1903 = vdwg.mxu0
    %v1904 = vmul.f32 %v1896, 0.35355338
    %v1905 = vmul.f32 %v1901, 0.35355338
    %v1906 = vadd.f32 %v1904, %v45
    %v1907 = vadd.f32 %v1905, %v46
    %v1908 = vsel %vm248, %v1906, -inf
    %1909 = vmax.xlane.f32.xlu0 %v1908
    %v1910 = vpop.xlane.xlu0 %1909
    %v1911 = vsel %vm248, %v1907, -inf
    %1912 = vmax.xlane.f32.xlu0 %v1911
    %v1913 = vpop.xlane.xlu0 %1912
    %v1914 = vsub.f32 %v1906, %v1910
    %v1915 = vsub.f32 %v1907, %v1913
    %v1916 = vmul.f32 %v1914, 1.442695
    %v1917 = vpow.pop %v1916
    %v1918 = vmul.f32 %v1915, 1.442695
    %v1919 = vpow.pop %v1918
    %v1920 = vsel %vm248, %v1917, 0.0
    %1921 = vadd.xlane.f32.xlu0 %v1920
    %v1922 = vpop.xlane.xlu0 %1921
    %v1923 = vsel %vm248, %v1919, 0.0
    %1924 = vadd.xlane.f32.xlu0 %v1923
    %v1925 = vpop.xlane.xlu0 %1924
    %v1926 = vrcp.pop %v1922
    %v1927 = vrcp.pop %v1925
    %v1928 = vmul.f32 %v1917, %v1926
    %v1929 = vmul.f32 %v1919, %v1927
    %1930 = vrot.lane.b32.xlu0 %v1389, 48
    %v1931 = vpop.permute.xlu0 %1930
    %1932 = vrot.lane.b32.xlu0 %v1392, 48
    %v1933 = vpop.permute.xlu0 %1932
    %v1937 = vsel %vm248, %v1928, 0
    %v1940 = vsel %vm248, %v1929, 0
    %1942 = vmatprep.subr.mxu0 0.0
    %1943 = vmatpush1.msra.mxu0 %v1931
    %1944 = vmatprep.subr.mxu0 0.0
    %1945 = vmatpush1.msra.mxu0 %v1933
    %1946 = vmatprep.subr.mxu0 0.0
    %1947 = vmatpush1.msra.mxu0 0.0
    %1948 = vmatprep.subr.mxu0 0.0
    %1949 = vmatpush1.msra.mxu0 0.0
    %1950 = vmatprep.subr.mxu0 0.0
    %1951 = vmatpush1.msra.mxu0 0.0
    %1952 = vmatprep.subr.mxu0 0.0
    %1953 = vmatpush1.msra.mxu0 0.0
    %1954 = vmatprep.subr.mxu0 0.0
    %1955 = vmatpush1.msra.mxu0 0.0
    %1956 = vmatprep.subr.mxu0 0.0
    %1957 = vmatpush1.msra.mxu0 0.0
    %1958 = vmatprep.subr.mxu0 0.0
    %1959 = vmatpush1.msra.mxu0 0.0
    %1960 = vmatprep.subr.mxu0 0.0
    %1961 = vmatpush1.msra.mxu0 0.0
    %1962 = vmatprep.subr.mxu0 0.0
    %1963 = vmatpush1.msra.mxu0 0.0
    %1964 = vmatprep.subr.mxu0 0.0
    %1965 = vmatpush1.msra.mxu0 0.0
    %1966 = vmatprep.subr.mxu0 0.0
    %1967 = vmatpush1.msra.mxu0 0.0
    %1968 = vmatprep.subr.mxu0 0.0
    %1969 = vmatpush1.msra.mxu0 0.0
    %1970 = vmatprep.subr.mxu0 0.0
    %1971 = vmatpush1.msra.mxu0 0.0
    %1972 = vmatprep.subr.mxu0 0.0
    %1973 = vmatpush1.msra.mxu0 0.0
    %1974 = vmatprep.subr.mxu0 0.0
    %1975 = vmatpush1.msra.mxu0 0.0
    %1976 = vmatprep.subr.mxu0 0.0
    %1977 = vmatpush1.msra.mxu0 0.0
    %1978 = vmatprep.subr.mxu0 0.0
    %1979 = vmatpush1.msra.mxu0 0.0
    %1980 = vmatprep.subr.mxu0 0.0
    %1981 = vmatpush1.msra.mxu0 0.0
    %1982 = vmatprep.subr.mxu0 0.0
    %1983 = vmatpush1.msra.mxu0 0.0
    %1984 = vmatprep.subr.mxu0 0.0
    %1985 = vmatpush1.msra.mxu0 0.0
    %1986 = vmatprep.subr.mxu0 0.0
    %1987 = vmatpush1.msra.mxu0 0.0
    %1988 = vmatprep.subr.mxu0 0.0
    %1989 = vmatpush1.msra.mxu0 0.0
    %1990 = vmatprep.subr.mxu0 0.0
    %1991 = vmatpush1.msra.mxu0 0.0
    %1992 = vmatprep.subr.mxu0 0.0
    %1993 = vmatpush1.msra.mxu0 0.0
    %1994 = vmatprep.subr.mxu0 0.0
    %1995 = vmatpush1.msra.mxu0 0.0
    %1996 = vmatprep.subr.mxu0 0.0
    %1997 = vmatpush1.msra.mxu0 0.0
    %1998 = vmatprep.subr.mxu0 0.0
    %1999 = vmatpush1.msra.mxu0 0.0
    %2000 = vmatprep.subr.mxu0 0.0
    %2001 = vmatpush1.msra.mxu0 0.0
    %2002 = vmatprep.subr.mxu0 0.0
    %2003 = vmatpush1.msra.mxu0 0.0
    %2004 = vmatprep.subr.mxu0 0.0
    %2005 = vmatpush1.msra.mxu0 0.0
    %2006 = vmatprep.mubr.f32.mxu0 0.0
    %2007 = vmatmul.mubr.f32.gmra.mrb[0].mxu0 %v1937
    %v2008 = vpop.f32.mrb[0].mxu0
    %v2009 = vadd.f32 0.0, %v2008
    %v2010 = vpop.f32.mrb[0].mxu0
    %2011 = vmatprep.mubr.f32.mxu0 0.0
    %2012 = vmatmul.mubr.f32.gmra.mrb[0].mxu0 %v1940
    %v2013 = vpop.f32.mrb[0].mxu0
    %v2014 = vadd.f32 0.0, %v2013
    %v2015 = vpop.f32.mrb[0].mxu0
    %2016 = vdwg.mxu0
    %2019 = vrot.lane.b32.xlu0 %v2009, 16
    %v2020 = vpop.permute.xlu0 %2019
    %2021 = vrot.lane.b32.xlu0 %v2014, 16
    %v2022 = vpop.permute.xlu0 %2021
    %2025 = vst.msk [vmem:[#allocation2] sm:$0xff] %vm787, %v2020
    %2026 = vst.msk [vmem:[#allocation2 + $0x8] sm:$0xff] %vm787, %v2022
    %2027 = vrot.lane.b32.xlu0 %v1389, 104
    %v2028 = vpop.permute.xlu0 %2027
    %2029 = vrot.lane.b32.xlu0 %v1392, 104
    %v2030 = vpop.permute.xlu0 %2029
    %2031 = vrot.lane.b32.xlu0 %v1389, 72
    %v2032 = vpop.permute.xlu0 %2031
    %2033 = vrot.lane.b32.xlu0 %v1392, 72
    %v2034 = vpop.permute.xlu0 %2033
    %v2035 = vsel %vm160, %v2028, 0
    %v2037 = vsel %vm160, %v2030, 0
    %v2039 = vsel %vm160, %v2032, 0
    %v2041 = vsel %vm160, %v2034, 0
    %2043 = vmatprep.subr.mxu0 0.0
    %2044 = vmatpush1.xpose.msra.mxu0 %v2039
    %2045 = vmatprep.subr.mxu0 0.0
    %2046 = vmatpush1.xpose.msra.mxu0 %v2041
    %2047 = vmatprep.subr.mxu0 0.0
    %2048 = vmatpush1.xpose.msra.mxu0 0.0
    %2049 = vmatprep.subr.mxu0 0.0
    %2050 = vmatpush1.xpose.msra.mxu0 0.0
    %2051 = vmatprep.subr.mxu0 0.0
    %2052 = vmatpush1.xpose.msra.mxu0 0.0
    %2053 = vmatprep.subr.mxu0 0.0
    %2054 = vmatpush1.xpose.msra.mxu0 0.0
    %2055 = vmatprep.subr.mxu0 0.0
    %2056 = vmatpush1.xpose.msra.mxu0 0.0
    %2057 = vmatprep.subr.mxu0 0.0
    %2058 = vmatpush1.xpose.msra.mxu0 0.0
    %2059 = vmatprep.subr.mxu0 0.0
    %2060 = vmatpush1.xpose.msra.mxu0 0.0
    %2061 = vmatprep.subr.mxu0 0.0
    %2062 = vmatpush1.xpose.msra.mxu0 0.0
    %2063 = vmatprep.subr.mxu0 0.0
    %2064 = vmatpush1.xpose.msra.mxu0 0.0
    %2065 = vmatprep.subr.mxu0 0.0
    %2066 = vmatpush1.xpose.msra.mxu0 0.0
    %2067 = vmatprep.subr.mxu0 0.0
    %2068 = vmatpush1.xpose.msra.mxu0 0.0
    %2069 = vmatprep.subr.mxu0 0.0
    %2070 = vmatpush1.xpose.msra.mxu0 0.0
    %2071 = vmatprep.subr.mxu0 0.0
    %2072 = vmatpush1.xpose.msra.mxu0 0.0
    %2073 = vmatprep.subr.mxu0 0.0
    %2074 = vmatpush1.xpose.msra.mxu0 0.0
    %2075 = vmatprep.subr.mxu0 0.0
    %2076 = vmatpush1.xpose.msra.mxu0 0.0
    %2077 = vmatprep.subr.mxu0 0.0
    %2078 = vmatpush1.xpose.msra.mxu0 0.0
    %2079 = vmatprep.subr.mxu0 0.0
    %2080 = vmatpush1.xpose.msra.mxu0 0.0
    %2081 = vmatprep.subr.mxu0 0.0
    %2082 = vmatpush1.xpose.msra.mxu0 0.0
    %2083 = vmatprep.subr.mxu0 0.0
    %2084 = vmatpush1.xpose.msra.mxu0 0.0
    %2085 = vmatprep.subr.mxu0 0.0
    %2086 = vmatpush1.xpose.msra.mxu0 0.0
    %2087 = vmatprep.subr.mxu0 0.0
    %2088 = vmatpush1.xpose.msra.mxu0 0.0
    %2089 = vmatprep.subr.mxu0 0.0
    %2090 = vmatpush1.xpose.msra.mxu0 0.0
    %2091 = vmatprep.subr.mxu0 0.0
    %2092 = vmatpush1.xpose.msra.mxu0 0.0
    %2093 = vmatprep.subr.mxu0 0.0
    %2094 = vmatpush1.xpose.msra.mxu0 0.0
    %2095 = vmatprep.subr.mxu0 0.0
    %2096 = vmatpush1.xpose.msra.mxu0 0.0
    %2097 = vmatprep.subr.mxu0 0.0
    %2098 = vmatpush1.xpose.msra.mxu0 0.0
    %2099 = vmatprep.subr.mxu0 0.0
    %2100 = vmatpush1.xpose.msra.mxu0 0.0
    %2101 = vmatprep.subr.mxu0 0.0
    %2102 = vmatpush1.xpose.msra.mxu0 0.0
    %2103 = vmatprep.subr.mxu0 0.0
    %2104 = vmatpush1.xpose.msra.mxu0 0.0
    %2105 = vmatprep.subr.mxu0 0.0
    %2106 = vmatpush1.xpose.msra.mxu0 0.0
    %2107 = vmatprep.mubr.f32.mxu0 0.0
    %2108 = vmatmul.mubr.f32.gmra.mrb[0].mxu0 %v2035
    %v2109 = vpop.f32.mrb[0].mxu0
    %v2110 = vadd.f32 0.0, %v2109
    %v2111 = vpop.f32.mrb[0].mxu0
    %2112 = vmatprep.mubr.f32.mxu0 0.0
    %2113 = vmatmul.mubr.f32.gmra.mrb[0].mxu0 %v2037
    %v2114 = vpop.f32.mrb[0].mxu0
    %v2115 = vadd.f32 0.0, %v2114
    %v2116 = vpop.f32.mrb[0].mxu0
    %2117 = vdwg.mxu0
    %v2118 = vmul.f32 %v2110, 0.35355338
    %v2119 = vmul.f32 %v2115, 0.35355338
    %v2120 = vadd.f32 %v2118, %v45
    %v2121 = vadd.f32 %v2119, %v46
    %v2122 = vsel %vm248, %v2120, -inf
    %2123 = vmax.xlane.f32.xlu0 %v2122
    %v2124 = vpop.xlane.xlu0 %2123
    %v2125 = vsel %vm248, %v2121, -inf
    %2126 = vmax.xlane.f32.xlu0 %v2125
    %v2127 = vpop.xlane.xlu0 %2126
    %v2128 = vsub.f32 %v2120, %v2124
    %v2129 = vsub.f32 %v2121, %v2127
    %v2130 = vmul.f32 %v2128, 1.442695
    %v2131 = vpow.pop %v2130
    %v2132 = vmul.f32 %v2129, 1.442695
    %v2133 = vpow.pop %v2132
    %v2134 = vsel %vm248, %v2131, 0.0
    %2135 = vadd.xlane.f32.xlu0 %v2134
    %v2136 = vpop.xlane.xlu0 %2135
    %v2137 = vsel %vm248, %v2133, 0.0
    %2138 = vadd.xlane.f32.xlu0 %v2137
    %v2139 = vpop.xlane.xlu0 %2138
    %v2140 = vrcp.pop %v2136
    %v2141 = vrcp.pop %v2139
    %v2142 = vmul.f32 %v2131, %v2140
    %v2143 = vmul.f32 %v2133, %v2141
    %2144 = vrot.lane.b32.xlu0 %v1389, 40
    %v2145 = vpop.permute.xlu0 %2144
    %2146 = vrot.lane.b32.xlu0 %v1392, 40
    %v2147 = vpop.permute.xlu0 %2146
    %v2151 = vsel %vm248, %v2142, 0
    %v2154 = vsel %vm248, %v2143, 0
    %2156 = vmatprep.subr.mxu0 0.0
    %2157 = vmatpush1.msra.mxu0 %v2145
    %2158 = vmatprep.subr.mxu0 0.0
    %2159 = vmatpush1.msra.mxu0 %v2147
    %2160 = vmatprep.subr.mxu0 0.0
    %2161 = vmatpush1.msra.mxu0 0.0
    %2162 = vmatprep.subr.mxu0 0.0
    %2163 = vmatpush1.msra.mxu0 0.0
    %2164 = vmatprep.subr.mxu0 0.0
    %2165 = vmatpush1.msra.mxu0 0.0
    %2166 = vmatprep.subr.mxu0 0.0
    %2167 = vmatpush1.msra.mxu0 0.0
    %2168 = vmatprep.subr.mxu0 0.0
    %2169 = vmatpush1.msra.mxu0 0.0
    %2170 = vmatprep.subr.mxu0 0.0
    %2171 = vmatpush1.msra.mxu0 0.0
    %2172 = vmatprep.subr.mxu0 0.0
    %2173 = vmatpush1.msra.mxu0 0.0
    %2174 = vmatprep.subr.mxu0 0.0
    %2175 = vmatpush1.msra.mxu0 0.0
    %2176 = vmatprep.subr.mxu0 0.0
    %2177 = vmatpush1.msra.mxu0 0.0
    %2178 = vmatprep.subr.mxu0 0.0
    %2179 = vmatpush1.msra.mxu0 0.0
    %2180 = vmatprep.subr.mxu0 0.0
    %2181 = vmatpush1.msra.mxu0 0.0
    %2182 = vmatprep.subr.mxu0 0.0
    %2183 = vmatpush1.msra.mxu0 0.0
    %2184 = vmatprep.subr.mxu0 0.0
    %2185 = vmatpush1.msra.mxu0 0.0
    %2186 = vmatprep.subr.mxu0 0.0
    %2187 = vmatpush1.msra.mxu0 0.0
    %2188 = vmatprep.subr.mxu0 0.0
    %2189 = vmatpush1.msra.mxu0 0.0
    %2190 = vmatprep.subr.mxu0 0.0
    %2191 = vmatpush1.msra.mxu0 0.0
    %2192 = vmatprep.subr.mxu0 0.0
    %2193 = vmatpush1.msra.mxu0 0.0
    %2194 = vmatprep.subr.mxu0 0.0
    %2195 = vmatpush1.msra.mxu0 0.0
    %2196 = vmatprep.subr.mxu0 0.0
    %2197 = vmatpush1.msra.mxu0 0.0
    %2198 = vmatprep.subr.mxu0 0.0
    %2199 = vmatpush1.msra.mxu0 0.0
    %2200 = vmatprep.subr.mxu0 0.0
    %2201 = vmatpush1.msra.mxu0 0.0
    %2202 = vmatprep.subr.mxu0 0.0
    %2203 = vmatpush1.msra.mxu0 0.0
    %2204 = vmatprep.subr.mxu0 0.0
    %2205 = vmatpush1.msra.mxu0 0.0
    %2206 = vmatprep.subr.mxu0 0.0
    %2207 = vmatpush1.msra.mxu0 0.0
    %2208 = vmatprep.subr.mxu0 0.0
    %2209 = vmatpush1.msra.mxu0 0.0
    %2210 = vmatprep.subr.mxu0 0.0
    %2211 = vmatpush1.msra.mxu0 0.0
    %2212 = vmatprep.subr.mxu0 0.0
    %2213 = vmatpush1.msra.mxu0 0.0
    %2214 = vmatprep.subr.mxu0 0.0
    %2215 = vmatpush1.msra.mxu0 0.0
    %2216 = vmatprep.subr.mxu0 0.0
    %2217 = vmatpush1.msra.mxu0 0.0
    %2218 = vmatprep.subr.mxu0 0.0
    %2219 = vmatpush1.msra.mxu0 0.0
    %2220 = vmatprep.mubr.f32.mxu0 0.0
    %2221 = vmatmul.mubr.f32.gmra.mrb[0].mxu0 %v2151
    %v2222 = vpop.f32.mrb[0].mxu0
    %v2223 = vadd.f32 0.0, %v2222
    %v2224 = vpop.f32.mrb[0].mxu0
    %2225 = vmatprep.mubr.f32.mxu0 0.0
    %2226 = vmatmul.mubr.f32.gmra.mrb[0].mxu0 %v2154
    %v2227 = vpop.f32.mrb[0].mxu0
    %v2228 = vadd.f32 0.0, %v2227
    %v2229 = vpop.f32.mrb[0].mxu0
    %2230 = vdwg.mxu0
    %2233 = vrot.lane.b32.xlu0 %v2223, 24
    %v2234 = vpop.permute.xlu0 %2233
    %2235 = vrot.lane.b32.xlu0 %v2228, 24
    %v2236 = vpop.permute.xlu0 %2235
    %2239 = vst.msk [vmem:[#allocation2] sm:$0xff] %vm1002, %v2234
    %2240 = vst.msk [vmem:[#allocation2 + $0x8] sm:$0xff] %vm1002, %v2236
    %v2241 = vld [vmem:[#allocation2] sm:$0xff]
    %v2242 = vld [vmem:[#allocation2 + $0x8] sm:$0xff]
    %v2243 = vpack.c.bf16 %v2242, %v2241
    %s2244 = scalar_lea.vmem %s5, 16
    %v2245 = vld [vmem:[%s2244] sm:$0xf]
    %v2246 = vld [vmem:[%s2244 + $0x4] sm:$0xf]
    %v2247 = vld [vmem:[%s2244 + $0x8] sm:$0xf]
    %v2248 = vld [vmem:[%s2244 + $0xc] sm:$0xf]
    %v2253 = vunpack.c.l.b16 %v2245
    %v2254 = vunpack.c.l.b16 %v2246
    %v2255 = vunpack.c.l.b16 %v2247
    %v2256 = vunpack.c.l.b16 %v2248
    %v2257 = vpack.c.b16 %v2254, %v2253
    %v2258 = vpack.c.b16 %v2256, %v2255
    %v2262 = vsel %vm49, %v2243, 0
    %2264 = vmatprep.subr.bf16.mxu0 0
    %2265 = vmatpush1.bf16.msra.mxu0 %v2257
    %2266 = vmatprep.subr.bf16.mxu0 0
    %2267 = vmatpush1.bf16.msra.mxu0 %v2258
    %2268 = vmatprep.subr.bf16.mxu0 0
    %2269 = vmatpush1.bf16.msra.mxu0 0
    %2270 = vmatprep.subr.bf16.mxu0 0
    %2271 = vmatpush1.bf16.msra.mxu0 0
    %2272 = vmatprep.subr.bf16.mxu0 0
    %2273 = vmatpush1.bf16.msra.mxu0 0
    %2274 = vmatprep.subr.bf16.mxu0 0
    %2275 = vmatpush1.bf16.msra.mxu0 0
    %2276 = vmatprep.subr.bf16.mxu0 0
    %2277 = vmatpush1.bf16.msra.mxu0 0
    %2278 = vmatprep.subr.bf16.mxu0 0
    %2279 = vmatpush1.bf16.msra.mxu0 0
    %2280 = vmatprep.subr.bf16.mxu0 0
    %2281 = vmatpush1.bf16.msra.mxu0 0
    %2282 = vmatprep.subr.bf16.mxu0 0
    %2283 = vmatpush1.bf16.msra.mxu0 0
    %2284 = vmatprep.subr.bf16.mxu0 0
    %2285 = vmatpush1.bf16.msra.mxu0 0
    %2286 = vmatprep.subr.bf16.mxu0 0
    %2287 = vmatpush1.bf16.msra.mxu0 0
    %2288 = vmatprep.subr.bf16.mxu0 0
    %2289 = vmatpush1.bf16.msra.mxu0 0
    %2290 = vmatprep.subr.bf16.mxu0 0
    %2291 = vmatpush1.bf16.msra.mxu0 0
    %2292 = vmatprep.subr.bf16.mxu0 0
    %2293 = vmatpush1.bf16.msra.mxu0 0
    %2294 = vmatprep.subr.bf16.mxu0 0
    %2295 = vmatpush1.bf16.msra.mxu0 0
    %2296 = vmatprep.mubr.bf16.mxu0 0
    %2297 = vmatmul.mubr.bf16.gmra.mrb[0].mxu0 %v2262
    %v2298 = vpop.f32.mrb[0].mxu0
    %v2299 = vadd.f32 0.0, %v2298
    %v2300 = vpop.f32.mrb[0].mxu0
    %v2301 = vpop.f32.mrb[0].mxu0
    %v2302 = vadd.f32 0.0, %v2301
    %v2303 = vpop.f32.mrb[0].mxu0
    %2304 = vdwg.mxu0
    %v2305 = vadd.f32 %v1285, %v2299
    %v2306 = vadd.f32 %v1286, %v2302
    %s2307 = scalar_lea.vmem %s6, 1
    %v2308 = vld [vmem:[%s2307] sm:$0x1]
    %s2309 = scalar_lea.vmem %s7, 1
    %v2310 = vld [vmem:[%s2309] sm:$0x1]
    %v2311 = vsel %vm49, %v2305, 0.0
    %2312 = vadd.xlane.f32.xlu0 %v2311
    %v2313 = vpop.xlane.xlu0 %2312
    %v2314 = vsel %vm49, %v2306, 0.0
    %2315 = vadd.xlane.f32.xlu0 %v2314
    %v2316 = vpop.xlane.xlu0 %2315
    %v2317 = vmul.f32 %v2313, %v56
    %v2318 = vmul.f32 %v2316, %v56
    %v2319 = vsub.f32 %v2305, %v2317
    %v2320 = vsub.f32 %v2306, %v2318
    %v2321 = vmul.f32 %v2319, %v2319
    %v2322 = vmul.f32 %v2320, %v2320
    %v2323 = vsel %vm49, %v2321, 0.0
    %2324 = vadd.xlane.f32.xlu0 %v2323
    %v2325 = vpop.xlane.xlu0 %2324
    %v2326 = vsel %vm49, %v2322, 0.0
    %2327 = vadd.xlane.f32.xlu0 %v2326
    %v2328 = vpop.xlane.xlu0 %2327
    %v2329 = vmul.f32 %v2325, %v56
    %v2330 = vmul.f32 %v2328, %v56
    %v2331 = vadd.f32 %v2329, 1e-06
    %v2332 = vadd.f32 %v2330, 1e-06
    %v2333 = vrsqrt.pop %v2331
    %v2334 = vrsqrt.pop %v2332
    %v2335 = vmul.f32 %v2319, %v2333
    %v2336 = vmul.f32 %v2320, %v2334
    %v2338 = vlaneseq
    %v2339 = vshrl.u32 %v2338, 7
    %v2340 = vsub.s32 0, %v2339
    %v2341 = vrot.slane %v2308, %v2340
    %v2343 = vmul.f32 %v2335, %v2341
    %v2344 = vmul.f32 %v2336, %v2341
    %v2346 = vlaneseq
    %v2347 = vshrl.u32 %v2346, 7
    %v2348 = vsub.s32 0, %v2347
    %v2349 = vrot.slane %v2310, %v2348
    %v2351 = vadd.f32 %v2343, %v2349
    %v2352 = vadd.f32 %v2344, %v2349
    %v2353 = vpack.c.bf16 %v2352, %v2351
    %s2354 = scalar_lea.vmem %s8, 16
    %v2355 = vld [vmem:[%s2354] sm:$0xf]
    %v2356 = vld [vmem:[%s2354 + $0x4] sm:$0xf]
    %v2357 = vld [vmem:[%s2354 + $0x8] sm:$0xf]
    %v2358 = vld [vmem:[%s2354 + $0xc] sm:$0xf]
    %s2359 = scalar_lea.vmem %s9, 1
    %v2360 = vld [vmem:[%s2359] sm:$0x1]
    %v2362 = vlaneseq
    %v2363 = vshrl.u32 %v2362, 7
    %v2364 = vsub.s32 0, %v2363
    %v2365 = vrot.slane %v2360, %v2364
    %v2371 = vunpack.c.l.b16 %v2355
    %v2372 = vunpack.c.l.b16 %v2356
    %v2373 = vunpack.c.l.b16 %v2357
    %v2374 = vunpack.c.l.b16 %v2358
    %v2375 = vpack.c.b16 %v2372, %v2371
    %v2376 = vpack.c.b16 %v2374, %v2373
    %v2380 = vsel %vm49, %v2353, 0
    %2382 = vmatprep.subr.bf16.mxu0 0
    %2383 = vmatpush1.bf16.msra.mxu0 %v2375
    %2384 = vmatprep.subr.bf16.mxu0 0
    %2385 = vmatpush1.bf16.msra.mxu0 %v2376
    %2386 = vmatprep.subr.bf16.mxu0 0
    %2387 = vmatpush1.bf16.msra.mxu0 0
    %2388 = vmatprep.subr.bf16.mxu0 0
    %2389 = vmatpush1.bf16.msra.mxu0 0
    %2390 = vmatprep.subr.bf16.mxu0 0
    %2391 = vmatpush1.bf16.msra.mxu0 0
    %2392 = vmatprep.subr.bf16.mxu0 0
    %2393 = vmatpush1.bf16.msra.mxu0 0
    %2394 = vmatprep.subr.bf16.mxu0 0
    %2395 = vmatpush1.bf16.msra.mxu0 0
    %2396 = vmatprep.subr.bf16.mxu0 0
    %2397 = vmatpush1.bf16.msra.mxu0 0
    %2398 = vmatprep.subr.bf16.mxu0 0
    %2399 = vmatpush1.bf16.msra.mxu0 0
    %2400 = vmatprep.subr.bf16.mxu0 0
    %2401 = vmatpush1.bf16.msra.mxu0 0
    %2402 = vmatprep.subr.bf16.mxu0 0
    %2403 = vmatpush1.bf16.msra.mxu0 0
    %2404 = vmatprep.subr.bf16.mxu0 0
    %2405 = vmatpush1.bf16.msra.mxu0 0
    %2406 = vmatprep.subr.bf16.mxu0 0
    %2407 = vmatpush1.bf16.msra.mxu0 0
    %2408 = vmatprep.subr.bf16.mxu0 0
    %2409 = vmatpush1.bf16.msra.mxu0 0
    %2410 = vmatprep.subr.bf16.mxu0 0
    %2411 = vmatpush1.bf16.msra.mxu0 0
    %2412 = vmatprep.subr.bf16.mxu0 0
    %2413 = vmatpush1.bf16.msra.mxu0 0
    %2414 = vmatprep.mubr.bf16.mxu0 0
    %2415 = vmatmul.mubr.bf16.gmra.mrb[0].mxu0 %v2380
    %v2416 = vpop.f32.mrb[0].mxu0
    %v2417 = vadd.f32 %v2365, %v2416
    %v2418 = vpop.f32.mrb[0].mxu0
    %v2419 = vpop.f32.mrb[0].mxu0
    %v2420 = vadd.f32 %v2365, %v2419
    %v2421 = vpop.f32.mrb[0].mxu0
    %2422 = vdwg.mxu0
    %v2423 = vmul.f32 %v2417, %v2417
    %v2424 = vmul.f32 %v2420, %v2420
    %v2425 = vmul.f32 %v2417, %v2423
    %v2426 = vmul.f32 %v2420, %v2424
    %v2427 = vmul.f32 %v2425, 0.044715
    %v2428 = vmul.f32 %v2426, 0.044715
    %v2429 = vadd.f32 %v2417, %v2427
    %v2430 = vadd.f32 %v2420, %v2428
    %v2431 = vmul.f32 %v2429, 0.7978846
    %v2432 = vmul.f32 %v2430, 0.7978846
    %v2433 = vtanh.pop %v2431
    %v2434 = vtanh.pop %v2432
    %v2435 = vadd.f32 %v2433, 1.0
    %v2436 = vadd.f32 %v2434, 1.0
    %v2437 = vmul.f32 %v2435, 0.5
    %v2438 = vmul.f32 %v2436, 0.5
    %v2439 = vmul.f32 %v2417, %v2437
    %v2440 = vmul.f32 %v2420, %v2438
    %v2441 = vpack.c.bf16 %v2440, %v2439
    %s2442 = scalar_lea.vmem %s10, 32
    %v2443 = vld [vmem:[%s2442] sm:$0xf]
    %v2444 = vld [vmem:[%s2442 + $0x4] sm:$0xf]
    %v2445 = vld [vmem:[%s2442 + $0x8] sm:$0xf]
    %v2446 = vld [vmem:[%s2442 + $0xc] sm:$0xf]
    %v2447 = vld [vmem:[%s2442 + $0x10] sm:$0xf]
    %v2448 = vld [vmem:[%s2442 + $0x14] sm:$0xf]
    %v2449 = vld [vmem:[%s2442 + $0x18] sm:$0xf]
    %v2450 = vld [vmem:[%s2442 + $0x1c] sm:$0xf]
    %s2451 = scalar_lea.vmem %s11, 1
    %v2452 = vld [vmem:[%s2451] sm:$0x1]
    %v2454 = vlaneseq
    %v2455 = vshrl.u32 %v2454, 7
    %v2456 = vsub.s32 0, %v2455
    %v2457 = vrot.slane %v2452, %v2456
    %v2467 = vunpack.c.l.b16 %v2443
    %v2468 = vunpack.c.l.b16 %v2444
    %v2469 = vunpack.c.l.b16 %v2445
    %v2470 = vunpack.c.l.b16 %v2446
    %v2471 = vunpack.c.l.b16 %v2447
    %v2472 = vunpack.c.l.b16 %v2448
    %v2473 = vunpack.c.l.b16 %v2449
    %v2474 = vunpack.c.l.b16 %v2450
    %v2475 = vpack.c.b16 %v2468, %v2467
    %v2476 = vpack.c.b16 %v2470, %v2469
    %v2477 = vpack.c.b16 %v2472, %v2471
    %v2478 = vpack.c.b16 %v2474, %v2473
    %v2484 = vsel %vm1240, %v2441, 0
    %2486 = vmatprep.subr.bf16.mxu0 0
    %2487 = vmatpush1.bf16.msra.mxu0 %v2475
    %2488 = vmatprep.subr.bf16.mxu0 0
    %2489 = vmatpush1.bf16.msra.mxu0 %v2476
    %2490 = vmatprep.subr.bf16.mxu0 0
    %2491 = vmatpush1.bf16.msra.mxu0 %v2477
    %2492 = vmatprep.subr.bf16.mxu0 0
    %2493 = vmatpush1.bf16.msra.mxu0 %v2478
    %2494 = vmatprep.subr.bf16.mxu0 0
    %2495 = vmatpush1.bf16.msra.mxu0 0
    %2496 = vmatprep.subr.bf16.mxu0 0
    %2497 = vmatpush1.bf16.msra.mxu0 0
    %2498 = vmatprep.subr.bf16.mxu0 0
    %2499 = vmatpush1.bf16.msra.mxu0 0
    %2500 = vmatprep.subr.bf16.mxu0 0
    %2501 = vmatpush1.bf16.msra.mxu0 0
    %2502 = vmatprep.subr.bf16.mxu0 0
    %2503 = vmatpush1.bf16.msra.mxu0 0
    %2504 = vmatprep.subr.bf16.mxu0 0
    %2505 = vmatpush1.bf16.msra.mxu0 0
    %2506 = vmatprep.subr.bf16.mxu0 0
    %2507 = vmatpush1.bf16.msra.mxu0 0
    %2508 = vmatprep.subr.bf16.mxu0 0
    %2509 = vmatpush1.bf16.msra.mxu0 0
    %2510 = vmatprep.subr.bf16.mxu0 0
    %2511 = vmatpush1.bf16.msra.mxu0 0
    %2512 = vmatprep.subr.bf16.mxu0 0
    %2513 = vmatpush1.bf16.msra.mxu0 0
    %2514 = vmatprep.subr.bf16.mxu0 0
    %2515 = vmatpush1.bf16.msra.mxu0 0
    %2516 = vmatprep.subr.bf16.mxu0 0
    %2517 = vmatpush1.bf16.msra.mxu0 0
    %2518 = vmatprep.mubr.bf16.mxu0 0
    %2519 = vmatmul.mubr.bf16.gmra.mrb[0].mxu0 %v2484
    %v2520 = vpop.f32.mrb[0].mxu0
    %v2521 = vadd.f32 %v2457, %v2520
    %v2522 = vpop.f32.mrb[0].mxu0
    %v2523 = vpop.f32.mrb[0].mxu0
    %v2524 = vadd.f32 %v2457, %v2523
    %v2525 = vpop.f32.mrb[0].mxu0
    %2526 = vdwg.mxu0
    %v2527 = vadd.f32 %v2305, %v2521
    %v2528 = vadd.f32 %v2306, %v2524
    %2529 = vst.msk [vmem:[#allocation3] sm:$0xff] %vm49, %v2527
    %2530 = vst.msk [vmem:[#allocation3 + $0x8] sm:$0xff] %vm49, %v2528
    // Predicated region
    $region50: #{custom_paligemma_forward.1} parent=1 // pred_check
      _
    $region51: #{custom_paligemma_forward.1} parent=1 // pred_check_branch
      %2532 = sbr.rel (0) target = $region53
    $region52: #{custom_paligemma_forward.1} parent=1 // pred_region
      %s2534 = ssub.s32 256, 256
      %2535 = vsyncadd [#allocation4], %s2534
      %s2536 = sshll.u32 [#allocation3], 4
      %s2537 = int_to_ptr.vmem [resolvable:$true] %s2536
      %2542 = dma.vmem_to_hbm [thread:$0]  %s2537, 256, %s12, [#allocation4], 128, 128, 8
    $region53: #{custom_paligemma_forward.1} parent=1 // pred_fallthru
      _
    // Predicated region
    $region54: #{custom_paligemma_forward.1} parent=1 // pred_check
      _
    $region55: #{custom_paligemma_forward.1} parent=1 // pred_check_branch
      %2544 = sbr.rel (0) target = $region57
    $region56: #{custom_paligemma_forward.1} parent=1 // pred_region
      %2545 = dma.done [#allocation4], 256
    $region57: #{custom_paligemma_forward.1} parent=1 // pred_fallthru
      _
    %2546 = vsyncpa [#allocation4], 1

</llo_original>
